<compile_context>
chip_gen: v7x
topology: tpu7x:2x2x1
jax: 0.10.0
libtpu: 0.0.40
codegen_flags: <defaults>
</compile_context>

<pallas_src>
import functools

import jax
import jax.numpy as jnp
import numpy as np
from jax import lax
from jax.experimental import pallas as pl
from jax.experimental.pallas import tpu as pltpu


# ---------------------------------------------------------------------------
# Helpers used inside the kernel.
# ---------------------------------------------------------------------------
def _pad_hw(p):
    """Zero-pad a (H, W, C) plane to (H+2, W+2, C) in-register."""
    H, W, C = p.shape
    zc = jnp.zeros((H, 1, C), p.dtype)
    p = jnp.concatenate([zc, p, zc], axis=1)           # (H,   W+2, C)
    zr = jnp.zeros((1, W + 2, C), p.dtype)
    return jnp.concatenate([zr, p, zr], axis=0)        # (H+2, W+2, C)


# ---------------------------------------------------------------------------
# Pallas kernel: one (batch, depth-slab) per grid step.
# ---------------------------------------------------------------------------
def basic_layers_kernel(x_ref, w1a_ref, sA_ref, bA_ref, w2f_ref, s2_ref, b2_ref,
                        o_ref, mid_ref, skip_ref, *, d_total, n_slabs):
    # x_ref   : (1, TD+4, H+2, W+2, Cin)  depth(2)+spatial(1) padded x slab
    # w1a_ref : (27*Cin, Cmid+Cout)       conv1 taps, skip 1x1x1 folded into last Cout cols
    # sA/bA   : (1, Cmid+Cout)            folded BN1 / BN_skip scale & bias (incl. conv bias)
    # w2f_ref : (27*Cmid, Cout)           conv2 taps flattened
    # s2/b2   : (1, Cout)                 folded BN2 scale & bias
    # o_ref   : (1, TD, H*W, Cout)
    # mid_ref : (TD+2, H+2, W+2, Cmid)    scratch: zero-padded ReLU(BN(conv1)) planes
    # skip_ref: (TD+2, H*W, Cout)         scratch: BN(skip conv) planes
    TD = o_ref.shape[1]
    Hp2, Wp2, Cmid = mid_ref.shape[1], mid_ref.shape[2], mid_ref.shape[3]
    H, W = Hp2 - 2, Wp2 - 2
    HW = H * W

    slab = pl.program_id(0) % n_slabs          # which depth slab of the volume
    d0 = slab * TD                             # first output depth of this slab

    # Load the (small) folded weights once per grid step.
    w1a = w1a_ref[...]
    sA = sA_ref[...]
    bA = bA_ref[...]
    w2f = w2f_ref[...]
    s2 = s2_ref[...]
    b2 = b2_ref[...]

    def im2col(planes):
        # planes: 3 (H+2, W+2, C) arrays (kd = 0, 1, 2)  ->  (H*W, 27*C)
        pieces = []
        for pp in planes:
            for kh in range(3):
                for kw in range(3):
                    pieces.append(pp[kh:kh + H, kw:kw + W, :].reshape(HW, -1))
        return jnp.concatenate(pieces, axis=1)

    # ---- stage 1: conv1 + BN1 + ReLU  (+ fused 1x1x1 skip conv + BN_skip) ----
    # Produces TD+2 mid planes (depth halo plane on each side of the slab).
    def conv1_body(j, carry):
        cols = im2col([x_ref[0, j], x_ref[0, j + 1], x_ref[0, j + 2]])
        yA = jnp.dot(cols, w1a, preferred_element_type=jnp.float32)
        yA = yA * sA + bA                                  # (H*W, Cmid+Cout)
        mid = jnp.maximum(yA[:, :Cmid], 0.0)
        # Depth halo of the mid tensor: planes outside [0, D) must be zero
        # (they correspond to conv2's zero padding, not to conv1 of padded x).
        m = d0 - 1 + j
        mid = jnp.where(jnp.logical_and(m >= 0, m < d_total), mid, 0.0)
        # Aligned full-plane store of the H/W-padded plane (halo zeros built
        # in-register) -> no masked RMW interior writes, no scratch init.
        mid_ref[j] = _pad_hw(mid.astype(mid_ref.dtype).reshape(H, W, Cmid))
        skip_ref[j] = yA[:, Cmid:]                         # BN'd 1x1x1 skip conv
        return carry

    lax.fori_loop(0, TD + 2, conv1_body, 0)

    # ---- stage 2: conv2 + BN2 + ReLU  +  residual add -------------------------
    def conv2_body(t, carry):
        cols = im2col([mid_ref[t], mid_ref[t + 1], mid_ref[t + 2]])
        acc = jnp.dot(cols, w2f, preferred_element_type=jnp.float32)
        y2 = jnp.maximum(acc * s2 + b2, 0.0)
        o_ref[0, t] = (y2 + skip_ref[t + 1]).astype(o_ref.dtype)
        return carry

    lax.fori_loop(0, TD, conv2_body, 0)


# ---------------------------------------------------------------------------
# Wrapper: NCDHW in / NCDHW out (PyTorch convention).
# ---------------------------------------------------------------------------
@functools.partial(jax.jit, static_argnames=("slab_depth", "compute_dtype"))
def basic_layers_forward(x_ncdhw, params, *, slab_depth=None,
                         compute_dtype=jnp.float32):
    (w1, s1, b1, w2, s2, b2, ws, ss, bs) = params
    N, Cin, D, H, W = x_ncdhw.shape
    Cmid = w1.shape[-1]
    Cout = w2.shape[-1]

    TD = slab_depth if slab_depth is not None else min(D, 8)
    assert D % TD == 0, "depth must be divisible by slab_depth"
    assert W % 8 == 0, "W should be a multiple of 8 (free (H,W,C)->(H*W,C) reshape)"
    n_slabs = D // TD
    HW = H * W

    # ---- fold weights for the fused im2col matmuls (tiny, done at trace time) ----
    w1_flat = w1.reshape(27 * Cin, Cmid)
    # skip 1x1x1 conv lives in the extra Cout columns, nonzero only at centre tap 13.
    skip_cols = jnp.zeros((27 * Cin, Cout), w1.dtype).at[13 * Cin:14 * Cin].set(ws)
    w1a = jnp.concatenate([w1_flat, skip_cols], axis=1).astype(compute_dtype)
    w2f = w2.reshape(27 * Cmid, Cout).astype(compute_dtype)
    sA = jnp.concatenate([s1, ss], axis=1)     # (1, Cmid+Cout), f32
    bA = jnp.concatenate([b1, bs], axis=1)

    # ---- NCDHW -> NDHWC, pad depth by 2 / H,W by 1, gather overlapping slabs ----
    x = jnp.transpose(x_ncdhw, (0, 2, 3, 4, 1)).astype(compute_dtype)
    x_pad = jnp.pad(x, ((0, 0), (2, 2), (1, 1), (1, 1), (0, 0)))
    win = (jnp.arange(n_slabs) * TD)[:, None] + jnp.arange(TD + 4)[None, :]
    x_slabs = x_pad[:, win]                                      # (N, S, TD+4, H+2, W+2, Cin)
    x_slabs = x_slabs.reshape(N * n_slabs, TD + 4, H + 2, W + 2, Cin)
    # TODO(synk): replace this HBM slab duplication with memory_space=pl.ANY +
    # manual double-buffered make_async_copy of halo slabs.

    kernel = functools.partial(basic_layers_kernel, d_total=D, n_slabs=n_slabs)
    full = lambda shape: pl.BlockSpec(shape, lambda g: (0,) * len(shape))

    out = pl.pallas_call(
        kernel,
        out_shape=jax.ShapeDtypeStruct((N * n_slabs, TD, HW, Cout), jnp.float32),
        grid_spec=pltpu.PrefetchScalarGridSpec(
            num_scalar_prefetch=0,
            grid=(N * n_slabs,),
            in_specs=[
                pl.BlockSpec((1, TD + 4, H + 2, W + 2, Cin),
                             lambda g: (g, 0, 0, 0, 0)),
                full((27 * Cin, Cmid + Cout)),
                full((1, Cmid + Cout)), full((1, Cmid + Cout)),
                full((27 * Cmid, Cout)),
                full((1, Cout)), full((1, Cout)),
            ],
            out_specs=pl.BlockSpec((1, TD, HW, Cout), lambda g: (g, 0, 0, 0)),
            scratch_shapes=[
                pltpu.VMEM((TD + 2, H + 2, W + 2, Cmid), compute_dtype),
                pltpu.VMEM((TD + 2, HW, Cout), jnp.float32),
            ],
        ),
        compiler_params=pltpu.CompilerParams(
            dimension_semantics=("parallel",),
            vmem_limit_bytes=32 * 1024 * 1024,
        ),
    )(x_slabs, w1a, sA, bA, w2f, s2, b2)

    out = out.reshape(N, n_slabs * TD, H, W, Cout)       # (N, D, H, W, Cout)
    return jnp.transpose(out, (0, 4, 1, 2, 3))           # NCDHW


# ---------------------------------------------------------------------------
# Deterministic parameter construction (BN folded, eval mode).
# ---------------------------------------------------------------------------
def make_params(key, cin, cmid, cout, eps=1e-5):
    ks = jax.random.split(key, 12)

    def bn_fold(gamma, beta, mean, var, conv_bias):
        s = gamma / jnp.sqrt(var + eps)
        b = beta - mean * s + s * conv_bias
        return s.reshape(1, -1).astype(jnp.float32), b.reshape(1, -1).astype(jnp.float32)

    w1 = 0.1 * jax.random.normal(ks[0], (3, 3, 3, cin, cmid), jnp.float32)
    cb1 = 0.1 * jax.random.normal(ks[1], (cmid,), jnp.float32)
    g1 = 1.0 + 0.1 * jax.random.normal(ks[2], (cmid,), jnp.float32)
    be1 = 0.1 * jax.random.normal(ks[3], (cmid,), jnp.float32)
    m1 = jnp.zeros((cmid,), jnp.float32)
    v1 = jnp.ones((cmid,), jnp.float32)
    s1, b1 = bn_fold(g1, be1, m1, v1, cb1)

    w2 = 0.1 * jax.random.normal(ks[4], (3, 3, 3, cmid, cout), jnp.float32)
    cb2 = 0.1 * jax.random.normal(ks[5], (cout,), jnp.float32)
    g2 = 1.0 + 0.1 * jax.random.normal(ks[6], (cout,), jnp.float32)
    be2 = 0.1 * jax.random.normal(ks[7], (cout,), jnp.float32)
    m2 = jnp.zeros((cout,), jnp.float32)
    v2 = jnp.ones((cout,), jnp.float32)
    s2, b2 = bn_fold(g2, be2, m2, v2, cb2)

    ws = 0.1 * jax.random.normal(ks[8], (cin, cout), jnp.float32)
    cbs = 0.1 * jax.random.normal(ks[9], (cout,), jnp.float32)
    gs = 1.0 + 0.1 * jax.random.normal(ks[10], (cout,), jnp.float32)
    bes = 0.1 * jax.random.normal(ks[11], (cout,), jnp.float32)
    ms = jnp.zeros((cout,), jnp.float32)
    vs = jnp.ones((cout,), jnp.float32)
    ss, bs = bn_fold(gs, bes, ms, vs, cbs)

    raw = dict(w1=w1, cb1=cb1, g1=g1, be1=be1, m1=m1, v1=v1,
               w2=w2, cb2=cb2, g2=g2, be2=be2, m2=m2, v2=v2,
               ws=ws, cbs=cbs, gs=gs, bes=bes, ms=ms, vs=vs, eps=eps)
    return (w1, s1, b1, w2, s2, b2, ws, ss, bs), raw


# ---------------------------------------------------------------------------
# Pure-JAX reference (same math as the PyTorch module in eval mode).
# ---------------------------------------------------------------------------
def reference_forward(x_ncdhw, raw):
    eps = raw["eps"]
    x = jnp.transpose(x_ncdhw, (0, 2, 3, 4, 1))  # NDHWC

    def conv3d(x, w, b, pad):
        y = lax.conv_general_dilated(
            x, w, window_strides=(1, 1, 1),
            padding=[(pad, pad)] * 3,
            dimension_numbers=("NDHWC", "DHWIO", "NDHWC"))
        return y + b

    def bn(y, gamma, beta, mean, var):
        return (y - mean) / jnp.sqrt(var + eps) * gamma + beta

    y = conv3d(x, raw["w1"], raw["cb1"], 1)
    y = jnp.maximum(bn(y, raw["g1"], raw["be1"], raw["m1"], raw["v1"]), 0.0)
    y = conv3d(y, raw["w2"], raw["cb2"], 1)
    y = jnp.maximum(bn(y, raw["g2"], raw["be2"], raw["m2"], raw["v2"]), 0.0)

    ws = raw["ws"].reshape(1, 1, 1, *raw["ws"].shape)
    sk = conv3d(x, ws, raw["cbs"], 0)
    sk = bn(sk, raw["gs"], raw["bes"], raw["ms"], raw["vs"])

    return jnp.transpose(y + sk, (0, 4, 1, 2, 3))  # NCDHW


if __name__ == "__main__":
    N, Cin, Cmid, Cout = 2, 4, 8, 4
    D, H, W = 4, 8, 8

    key = jax.random.PRNGKey(0)
    kx, kp = jax.random.split(key)
    x = jax.random.normal(kx, (N, Cin, D, H, W), jnp.float32)   # NCDHW like PyTorch

    params, raw = make_params(kp, Cin, Cmid, Cout)

    # slab_depth=2 -> 2 depth slabs per batch element, exercising the slab tiling
    # and halo logic (grid = N * n_slabs = 4 parallel steps).
    out = basic_layers_forward(x, params, slab_depth=2)
    out = jax.block_until_ready(out)

    ref = jax.block_until_ready(reference_forward(x, raw))
    np.testing.assert_allclose(np.asarray(out), np.asarray(ref), rtol=2e-4, atol=2e-4)

    print("KERNEL_OK")
</pallas_src>

<mosaic_0001>
module attributes {stable_mosaic.version = 11 : i64} {
  func.func @basic_layers_kernel(%arg0: i32, %arg1: memref<1x6x10x10x4xf32, #tpu.memory_space<vmem>>, %arg2: memref<108x12xf32, #tpu.memory_space<vmem>>, %arg3: memref<1x12xf32, #tpu.memory_space<vmem>>, %arg4: memref<1x12xf32, #tpu.memory_space<vmem>>, %arg5: memref<216x4xf32, #tpu.memory_space<vmem>>, %arg6: memref<1x4xf32, #tpu.memory_space<vmem>>, %arg7: memref<1x4xf32, #tpu.memory_space<vmem>>, %arg8: memref<1x2x64x4xf32, #tpu.memory_space<vmem>>, %arg9: memref<4x10x10x8xf32, #tpu.memory_space<vmem>>, %arg10: memref<4x64x4xf32, #tpu.memory_space<vmem>>) attributes {dimension_semantics = [#tpu.dimension_semantics<parallel>], iteration_bounds = array<i64: 4>, scalar_prefetch = 0 : i64, scratch_operands = 2 : i64, tpu.core_type = #tpu.core_type<tc>, window_params = [{transform_indices = @transform_0, window_bounds = array<i64: 1, 6, 10, 10, 4>}, {pipeline_mode = #tpu.pipeline_mode<synchronous>, transform_indices = @transform_1, window_bounds = array<i64: 108, 12>}, {pipeline_mode = #tpu.pipeline_mode<synchronous>, transform_indices = @transform_2, window_bounds = array<i64: 1, 12>}, {pipeline_mode = #tpu.pipeline_mode<synchronous>, transform_indices = @transform_3, window_bounds = array<i64: 1, 12>}, {pipeline_mode = #tpu.pipeline_mode<synchronous>, transform_indices = @transform_4, window_bounds = array<i64: 216, 4>}, {pipeline_mode = #tpu.pipeline_mode<synchronous>, transform_indices = @transform_5, window_bounds = array<i64: 1, 4>}, {pipeline_mode = #tpu.pipeline_mode<synchronous>, transform_indices = @transform_6, window_bounds = array<i64: 1, 4>}, {transform_indices = @transform_7, window_bounds = array<i64: 1, 2, 64, 4>}]} {
    %c2_i32 = arith.constant 2 : i32
    %c0_i32 = arith.constant 0 : i32
    %0 = arith.cmpi eq, %c2_i32, %c0_i32 : i32
    %c1_i32 = arith.constant 1 : i32
    %1 = arith.select %0, %c1_i32, %c2_i32 : i32
    %2 = arith.remsi %arg0, %1 : i32
    %c0_i32_0 = arith.constant 0 : i32
    %3 = arith.cmpi ne, %2, %c0_i32_0 : i32
    %c0_i32_1 = arith.constant 0 : i32
    %4 = arith.cmpi slt, %2, %c0_i32_1 : i32
    %c0_i32_2 = arith.constant 0 : i32
    %5 = arith.cmpi slt, %1, %c0_i32_2 : i32
    %6 = arith.xori %4, %5 : i1
    %7 = arith.andi %6, %3 : i1
    %8 = arith.addi %2, %1 : i32
    %9 = arith.select %7, %8, %2 : i32
    %c2_i32_3 = arith.constant 2 : i32
    %10 = arith.muli %9, %c2_i32_3 : i32
    %c0 = arith.constant 0 : index
    %c0_4 = arith.constant 0 : index
    %11 = vector.load %arg2[%c0, %c0_4] : memref<108x12xf32, #tpu.memory_space<vmem>>, vector<108x12xf32>
    %c0_5 = arith.constant 0 : index
    %c0_6 = arith.constant 0 : index
    %12 = vector.load %arg3[%c0_5, %c0_6] : memref<1x12xf32, #tpu.memory_space<vmem>>, vector<1x12xf32>
    %c0_7 = arith.constant 0 : index
    %c0_8 = arith.constant 0 : index
    %13 = vector.load %arg4[%c0_7, %c0_8] : memref<1x12xf32, #tpu.memory_space<vmem>>, vector<1x12xf32>
    %c0_9 = arith.constant 0 : index
    %c0_10 = arith.constant 0 : index
    %14 = vector.load %arg5[%c0_9, %c0_10] : memref<216x4xf32, #tpu.memory_space<vmem>>, vector<216x4xf32>
    %c0_11 = arith.constant 0 : index
    %c0_12 = arith.constant 0 : index
    %15 = vector.load %arg6[%c0_11, %c0_12] : memref<1x4xf32, #tpu.memory_space<vmem>>, vector<1x4xf32>
    %c0_13 = arith.constant 0 : index
    %c0_14 = arith.constant 0 : index
    %16 = vector.load %arg7[%c0_13, %c0_14] : memref<1x4xf32, #tpu.memory_space<vmem>>, vector<1x4xf32>
    %c0_i32_15 = arith.constant 0 : i32
    %c4_i32 = arith.constant 4 : i32
    %17 = arith.addi %c0_i32_15, %c4_i32 : i32
    %c1_i32_16 = arith.constant 1 : i32
    scf.for %arg11 = %c0_i32_15 to %17 step %c1_i32_16  : i32 {
      %c0_22 = arith.constant 0 : index
      %19 = arith.index_cast %arg11 : i32 to index
      %c0_23 = arith.constant 0 : index
      %c0_24 = arith.constant 0 : index
      %c0_25 = arith.constant 0 : index
      %20 = vector.load %arg1[%c0_22, %19, %c0_23, %c0_24, %c0_25] : memref<1x6x10x10x4xf32, #tpu.memory_space<vmem>>, vector<1x1x10x10x4xf32>
      %21 = vector.shape_cast %20 : vector<1x1x10x10x4xf32> to vector<10x10x4xf32>
      %c1_i32_26 = arith.constant 1 : i32
      %22 = arith.addi %arg11, %c1_i32_26 : i32
      %c0_27 = arith.constant 0 : index
      %23 = arith.index_cast %22 : i32 to index
      %c0_28 = arith.constant 0 : index
      %c0_29 = arith.constant 0 : index
      %c0_30 = arith.constant 0 : index
      %24 = vector.load %arg1[%c0_27, %23, %c0_28, %c0_29, %c0_30] : memref<1x6x10x10x4xf32, #tpu.memory_space<vmem>>, vector<1x1x10x10x4xf32>
      %25 = vector.shape_cast %24 : vector<1x1x10x10x4xf32> to vector<10x10x4xf32>
      %c2_i32_31 = arith.constant 2 : i32
      %26 = arith.addi %arg11, %c2_i32_31 : i32
      %c0_32 = arith.constant 0 : index
      %27 = arith.index_cast %26 : i32 to index
      %c0_33 = arith.constant 0 : index
      %c0_34 = arith.constant 0 : index
      %c0_35 = arith.constant 0 : index
      %28 = vector.load %arg1[%c0_32, %27, %c0_33, %c0_34, %c0_35] : memref<1x6x10x10x4xf32, #tpu.memory_space<vmem>>, vector<1x1x10x10x4xf32>
      %29 = vector.shape_cast %28 : vector<1x1x10x10x4xf32> to vector<10x10x4xf32>
      %30 = vector.extract_strided_slice %21 {offsets = [0, 0, 0], sizes = [8, 8, 4], strides = [1, 1, 1]} : vector<10x10x4xf32> to vector<8x8x4xf32>
      %31 = vector.shape_cast %30 : vector<8x8x4xf32> to vector<64x4xf32>
      %32 = vector.extract_strided_slice %21 {offsets = [0, 1, 0], sizes = [8, 8, 4], strides = [1, 1, 1]} : vector<10x10x4xf32> to vector<8x8x4xf32>
      %33 = vector.shape_cast %32 : vector<8x8x4xf32> to vector<64x4xf32>
      %34 = vector.extract_strided_slice %21 {offsets = [0, 2, 0], sizes = [8, 8, 4], strides = [1, 1, 1]} : vector<10x10x4xf32> to vector<8x8x4xf32>
      %35 = vector.shape_cast %34 : vector<8x8x4xf32> to vector<64x4xf32>
      %36 = vector.extract_strided_slice %21 {offsets = [1, 0, 0], sizes = [8, 8, 4], strides = [1, 1, 1]} : vector<10x10x4xf32> to vector<8x8x4xf32>
      %37 = vector.shape_cast %36 : vector<8x8x4xf32> to vector<64x4xf32>
      %38 = vector.extract_strided_slice %21 {offsets = [1, 1, 0], sizes = [8, 8, 4], strides = [1, 1, 1]} : vector<10x10x4xf32> to vector<8x8x4xf32>
      %39 = vector.shape_cast %38 : vector<8x8x4xf32> to vector<64x4xf32>
      %40 = vector.extract_strided_slice %21 {offsets = [1, 2, 0], sizes = [8, 8, 4], strides = [1, 1, 1]} : vector<10x10x4xf32> to vector<8x8x4xf32>
      %41 = vector.shape_cast %40 : vector<8x8x4xf32> to vector<64x4xf32>
      %42 = vector.extract_strided_slice %21 {offsets = [2, 0, 0], sizes = [8, 8, 4], strides = [1, 1, 1]} : vector<10x10x4xf32> to vector<8x8x4xf32>
      %43 = vector.shape_cast %42 : vector<8x8x4xf32> to vector<64x4xf32>
      %44 = vector.extract_strided_slice %21 {offsets = [2, 1, 0], sizes = [8, 8, 4], strides = [1, 1, 1]} : vector<10x10x4xf32> to vector<8x8x4xf32>
      %45 = vector.shape_cast %44 : vector<8x8x4xf32> to vector<64x4xf32>
      %46 = vector.extract_strided_slice %21 {offsets = [2, 2, 0], sizes = [8, 8, 4], strides = [1, 1, 1]} : vector<10x10x4xf32> to vector<8x8x4xf32>
      %47 = vector.shape_cast %46 : vector<8x8x4xf32> to vector<64x4xf32>
      %48 = vector.extract_strided_slice %25 {offsets = [0, 0, 0], sizes = [8, 8, 4], strides = [1, 1, 1]} : vector<10x10x4xf32> to vector<8x8x4xf32>
      %49 = vector.shape_cast %48 : vector<8x8x4xf32> to vector<64x4xf32>
      %50 = vector.extract_strided_slice %25 {offsets = [0, 1, 0], sizes = [8, 8, 4], strides = [1, 1, 1]} : vector<10x10x4xf32> to vector<8x8x4xf32>
      %51 = vector.shape_cast %50 : vector<8x8x4xf32> to vector<64x4xf32>
      %52 = vector.extract_strided_slice %25 {offsets = [0, 2, 0], sizes = [8, 8, 4], strides = [1, 1, 1]} : vector<10x10x4xf32> to vector<8x8x4xf32>
      %53 = vector.shape_cast %52 : vector<8x8x4xf32> to vector<64x4xf32>
      %54 = vector.extract_strided_slice %25 {offsets = [1, 0, 0], sizes = [8, 8, 4], strides = [1, 1, 1]} : vector<10x10x4xf32> to vector<8x8x4xf32>
      %55 = vector.shape_cast %54 : vector<8x8x4xf32> to vector<64x4xf32>
      %56 = vector.extract_strided_slice %25 {offsets = [1, 1, 0], sizes = [8, 8, 4], strides = [1, 1, 1]} : vector<10x10x4xf32> to vector<8x8x4xf32>
      %57 = vector.shape_cast %56 : vector<8x8x4xf32> to vector<64x4xf32>
      %58 = vector.extract_strided_slice %25 {offsets = [1, 2, 0], sizes = [8, 8, 4], strides = [1, 1, 1]} : vector<10x10x4xf32> to vector<8x8x4xf32>
      %59 = vector.shape_cast %58 : vector<8x8x4xf32> to vector<64x4xf32>
      %60 = vector.extract_strided_slice %25 {offsets = [2, 0, 0], sizes = [8, 8, 4], strides = [1, 1, 1]} : vector<10x10x4xf32> to vector<8x8x4xf32>
      %61 = vector.shape_cast %60 : vector<8x8x4xf32> to vector<64x4xf32>
      %62 = vector.extract_strided_slice %25 {offsets = [2, 1, 0], sizes = [8, 8, 4], strides = [1, 1, 1]} : vector<10x10x4xf32> to vector<8x8x4xf32>
      %63 = vector.shape_cast %62 : vector<8x8x4xf32> to vector<64x4xf32>
      %64 = vector.extract_strided_slice %25 {offsets = [2, 2, 0], sizes = [8, 8, 4], strides = [1, 1, 1]} : vector<10x10x4xf32> to vector<8x8x4xf32>
      %65 = vector.shape_cast %64 : vector<8x8x4xf32> to vector<64x4xf32>
      %66 = vector.extract_strided_slice %29 {offsets = [0, 0, 0], sizes = [8, 8, 4], strides = [1, 1, 1]} : vector<10x10x4xf32> to vector<8x8x4xf32>
      %67 = vector.shape_cast %66 : vector<8x8x4xf32> to vector<64x4xf32>
      %68 = vector.extract_strided_slice %29 {offsets = [0, 1, 0], sizes = [8, 8, 4], strides = [1, 1, 1]} : vector<10x10x4xf32> to vector<8x8x4xf32>
      %69 = vector.shape_cast %68 : vector<8x8x4xf32> to vector<64x4xf32>
      %70 = vector.extract_strided_slice %29 {offsets = [0, 2, 0], sizes = [8, 8, 4], strides = [1, 1, 1]} : vector<10x10x4xf32> to vector<8x8x4xf32>
      %71 = vector.shape_cast %70 : vector<8x8x4xf32> to vector<64x4xf32>
      %72 = vector.extract_strided_slice %29 {offsets = [1, 0, 0], sizes = [8, 8, 4], strides = [1, 1, 1]} : vector<10x10x4xf32> to vector<8x8x4xf32>
      %73 = vector.shape_cast %72 : vector<8x8x4xf32> to vector<64x4xf32>
      %74 = vector.extract_strided_slice %29 {offsets = [1, 1, 0], sizes = [8, 8, 4], strides = [1, 1, 1]} : vector<10x10x4xf32> to vector<8x8x4xf32>
      %75 = vector.shape_cast %74 : vector<8x8x4xf32> to vector<64x4xf32>
      %76 = vector.extract_strided_slice %29 {offsets = [1, 2, 0], sizes = [8, 8, 4], strides = [1, 1, 1]} : vector<10x10x4xf32> to vector<8x8x4xf32>
      %77 = vector.shape_cast %76 : vector<8x8x4xf32> to vector<64x4xf32>
      %78 = vector.extract_strided_slice %29 {offsets = [2, 0, 0], sizes = [8, 8, 4], strides = [1, 1, 1]} : vector<10x10x4xf32> to vector<8x8x4xf32>
      %79 = vector.shape_cast %78 : vector<8x8x4xf32> to vector<64x4xf32>
      %80 = vector.extract_strided_slice %29 {offsets = [2, 1, 0], sizes = [8, 8, 4], strides = [1, 1, 1]} : vector<10x10x4xf32> to vector<8x8x4xf32>
      %81 = vector.shape_cast %80 : vector<8x8x4xf32> to vector<64x4xf32>
      %82 = vector.extract_strided_slice %29 {offsets = [2, 2, 0], sizes = [8, 8, 4], strides = [1, 1, 1]} : vector<10x10x4xf32> to vector<8x8x4xf32>
      %83 = vector.shape_cast %82 : vector<8x8x4xf32> to vector<64x4xf32>
      %84 = tpu.concatenate %31, %33, %35, %37, %39, %41, %43, %45, %47, %49, %51, %53, %55, %57, %59, %61 in 1 : vector<64x4xf32>, vector<64x4xf32>, vector<64x4xf32>, vector<64x4xf32>, vector<64x4xf32>, vector<64x4xf32>, vector<64x4xf32>, vector<64x4xf32>, vector<64x4xf32>, vector<64x4xf32>, vector<64x4xf32>, vector<64x4xf32>, vector<64x4xf32>, vector<64x4xf32>, vector<64x4xf32>, vector<64x4xf32> -> vector<64x64xf32>
      %85 = tpu.concatenate %63, %65, %67, %69, %71, %73, %75, %77, %79, %81, %83 in 1 : vector<64x4xf32>, vector<64x4xf32>, vector<64x4xf32>, vector<64x4xf32>, vector<64x4xf32>, vector<64x4xf32>, vector<64x4xf32>, vector<64x4xf32>, vector<64x4xf32>, vector<64x4xf32>, vector<64x4xf32> -> vector<64x44xf32>
      %86 = tpu.concatenate %84, %85 in 1 : vector<64x64xf32>, vector<64x44xf32> -> vector<64x108xf32>
      %cst = arith.constant dense<0.000000e+00> : vector<64x12xf32>
      %87 = tpu.matmul %86, %11, %cst {dimension_numbers = #tpu.dot_dimension_numbers<[1], [0], [0], [1], [0, 0, 1, 1], [], []>} : vector<64x108xf32>, vector<108x12xf32>, vector<64x12xf32> -> vector<64x12xf32>
      %88 = vector.broadcast %12 : vector<1x12xf32> to vector<64x12xf32>
      %89 = arith.mulf %87, %88 : vector<64x12xf32>
      %90 = vector.broadcast %13 : vector<1x12xf32> to vector<64x12xf32>
      %91 = arith.addf %89, %90 : vector<64x12xf32>
      %92 = vector.extract_strided_slice %91 {offsets = [0, 0], sizes = [64, 8], strides = [1, 1]} : vector<64x12xf32> to vector<64x8xf32>
      %cst_36 = arith.constant 0.000000e+00 : f32
      %93 = vector.broadcast %cst_36 : f32 to vector<64x8xf32>
      %94 = arith.maximumf %92, %93 : vector<64x8xf32>
      %c1_i32_37 = arith.constant 1 : i32
      %95 = arith.subi %10, %c1_i32_37 : i32
      %96 = arith.addi %95, %arg11 : i32
      %c0_i32_38 = arith.constant 0 : i32
      %97 = arith.cmpi sge, %96, %c0_i32_38 : i32
      %c4_i32_39 = arith.constant 4 : i32
      %98 = arith.cmpi slt, %96, %c4_i32_39 : i32
      %99 = arith.andi %97, %98 : i1
      %cst_40 = arith.constant 0.000000e+00 : f32
      %100 = vector.broadcast %cst_40 : f32 to vector<64x8xf32>
      %101 = arith.select %99, %94, %100 : vector<64x8xf32>
      %102 = vector.shape_cast %101 : vector<64x8xf32> to vector<8x8x8xf32>
      %cst_41 = arith.constant 0.000000e+00 : f32
      %103 = vector.broadcast %cst_41 : f32 to vector<8x1x8xf32>
      %104 = tpu.concatenate %103, %102, %103 in 1 : vector<8x1x8xf32>, vector<8x8x8xf32>, vector<8x1x8xf32> -> vector<8x10x8xf32>
      %cst_42 = arith.constant 0.000000e+00 : f32
      %105 = vector.broadcast %cst_42 : f32 to vector<1x10x8xf32>
      %106 = tpu.concatenate %105, %104, %105 in 0 : vector<1x10x8xf32>, vector<8x10x8xf32>, vector<1x10x8xf32> -> vector<10x10x8xf32>
      %107 = arith.index_cast %arg11 : i32 to index
      %c0_43 = arith.constant 0 : index
      %c0_44 = arith.constant 0 : index
      %c0_45 = arith.constant 0 : index
      %108 = vector.load %arg9[%107, %c0_43, %c0_44, %c0_45] : memref<4x10x10x8xf32, #tpu.memory_space<vmem>>, vector<1x10x10x8xf32>
      %109 = vector.shape_cast %108 : vector<1x10x10x8xf32> to vector<10x10x8xf32>
      %110 = vector.shape_cast %106 : vector<10x10x8xf32> to vector<1x10x10x8xf32>
      tpu.vector_store %arg9[%107, %c0_43, %c0_44, %c0_45], %110 {strides = array<i32>} : memref<4x10x10x8xf32, #tpu.memory_space<vmem>>, vector<1x10x10x8xf32>,
      %111 = vector.extract_strided_slice %91 {offsets = [0, 8], sizes = [64, 4], strides = [1, 1]} : vector<64x12xf32> to vector<64x4xf32>
      %112 = arith.index_cast %arg11 : i32 to index
      %c0_46 = arith.constant 0 : index
      %c0_47 = arith.constant 0 : index
      %113 = vector.load %arg10[%112, %c0_46, %c0_47] : memref<4x64x4xf32, #tpu.memory_space<vmem>>, vector<1x64x4xf32>
      %114 = vector.shape_cast %113 : vector<1x64x4xf32> to vector<64x4xf32>
      %115 = vector.shape_cast %111 : vector<64x4xf32> to vector<1x64x4xf32>
      tpu.vector_store %arg10[%112, %c0_46, %c0_47], %115 {strides = array<i32>} : memref<4x64x4xf32, #tpu.memory_space<vmem>>, vector<1x64x4xf32>,
    }
    %c4_i32_17 = arith.constant 4 : i32
    %c0_i32_18 = arith.constant 0 : i32
    %c2_i32_19 = arith.constant 2 : i32
    %18 = arith.addi %c0_i32_18, %c2_i32_19 : i32
    %c1_i32_20 = arith.constant 1 : i32
    scf.for %arg11 = %c0_i32_18 to %18 step %c1_i32_20  : i32 {
      %19 = arith.index_cast %arg11 : i32 to index
      %c0_22 = arith.constant 0 : index
      %c0_23 = arith.constant 0 : index
      %c0_24 = arith.constant 0 : index
      %20 = vector.load %arg9[%19, %c0_22, %c0_23, %c0_24] : memref<4x10x10x8xf32, #tpu.memory_space<vmem>>, vector<1x10x10x8xf32>
      %21 = vector.shape_cast %20 : vector<1x10x10x8xf32> to vector<10x10x8xf32>
      %c1_i32_25 = arith.constant 1 : i32
      %22 = arith.addi %arg11, %c1_i32_25 : i32
      %23 = arith.index_cast %22 : i32 to index
      %c0_26 = arith.constant 0 : index
      %c0_27 = arith.constant 0 : index
      %c0_28 = arith.constant 0 : index
      %24 = vector.load %arg9[%23, %c0_26, %c0_27, %c0_28] : memref<4x10x10x8xf32, #tpu.memory_space<vmem>>, vector<1x10x10x8xf32>
      %25 = vector.shape_cast %24 : vector<1x10x10x8xf32> to vector<10x10x8xf32>
      %c2_i32_29 = arith.constant 2 : i32
      %26 = arith.addi %arg11, %c2_i32_29 : i32
      %27 = arith.index_cast %26 : i32 to index
      %c0_30 = arith.constant 0 : index
      %c0_31 = arith.constant 0 : index
      %c0_32 = arith.constant 0 : index
      %28 = vector.load %arg9[%27, %c0_30, %c0_31, %c0_32] : memref<4x10x10x8xf32, #tpu.memory_space<vmem>>, vector<1x10x10x8xf32>
      %29 = vector.shape_cast %28 : vector<1x10x10x8xf32> to vector<10x10x8xf32>
      %30 = vector.extract_strided_slice %21 {offsets = [0, 0, 0], sizes = [8, 8, 8], strides = [1, 1, 1]} : vector<10x10x8xf32> to vector<8x8x8xf32>
      %31 = vector.shape_cast %30 : vector<8x8x8xf32> to vector<64x8xf32>
      %32 = vector.extract_strided_slice %21 {offsets = [0, 1, 0], sizes = [8, 8, 8], strides = [1, 1, 1]} : vector<10x10x8xf32> to vector<8x8x8xf32>
      %33 = vector.shape_cast %32 : vector<8x8x8xf32> to vector<64x8xf32>
      %34 = vector.extract_strided_slice %21 {offsets = [0, 2, 0], sizes = [8, 8, 8], strides = [1, 1, 1]} : vector<10x10x8xf32> to vector<8x8x8xf32>
      %35 = vector.shape_cast %34 : vector<8x8x8xf32> to vector<64x8xf32>
      %36 = vector.extract_strided_slice %21 {offsets = [1, 0, 0], sizes = [8, 8, 8], strides = [1, 1, 1]} : vector<10x10x8xf32> to vector<8x8x8xf32>
      %37 = vector.shape_cast %36 : vector<8x8x8xf32> to vector<64x8xf32>
      %38 = vector.extract_strided_slice %21 {offsets = [1, 1, 0], sizes = [8, 8, 8], strides = [1, 1, 1]} : vector<10x10x8xf32> to vector<8x8x8xf32>
      %39 = vector.shape_cast %38 : vector<8x8x8xf32> to vector<64x8xf32>
      %40 = vector.extract_strided_slice %21 {offsets = [1, 2, 0], sizes = [8, 8, 8], strides = [1, 1, 1]} : vector<10x10x8xf32> to vector<8x8x8xf32>
      %41 = vector.shape_cast %40 : vector<8x8x8xf32> to vector<64x8xf32>
      %42 = vector.extract_strided_slice %21 {offsets = [2, 0, 0], sizes = [8, 8, 8], strides = [1, 1, 1]} : vector<10x10x8xf32> to vector<8x8x8xf32>
      %43 = vector.shape_cast %42 : vector<8x8x8xf32> to vector<64x8xf32>
      %44 = vector.extract_strided_slice %21 {offsets = [2, 1, 0], sizes = [8, 8, 8], strides = [1, 1, 1]} : vector<10x10x8xf32> to vector<8x8x8xf32>
      %45 = vector.shape_cast %44 : vector<8x8x8xf32> to vector<64x8xf32>
      %46 = vector.extract_strided_slice %21 {offsets = [2, 2, 0], sizes = [8, 8, 8], strides = [1, 1, 1]} : vector<10x10x8xf32> to vector<8x8x8xf32>
      %47 = vector.shape_cast %46 : vector<8x8x8xf32> to vector<64x8xf32>
      %48 = vector.extract_strided_slice %25 {offsets = [0, 0, 0], sizes = [8, 8, 8], strides = [1, 1, 1]} : vector<10x10x8xf32> to vector<8x8x8xf32>
      %49 = vector.shape_cast %48 : vector<8x8x8xf32> to vector<64x8xf32>
      %50 = vector.extract_strided_slice %25 {offsets = [0, 1, 0], sizes = [8, 8, 8], strides = [1, 1, 1]} : vector<10x10x8xf32> to vector<8x8x8xf32>
      %51 = vector.shape_cast %50 : vector<8x8x8xf32> to vector<64x8xf32>
      %52 = vector.extract_strided_slice %25 {offsets = [0, 2, 0], sizes = [8, 8, 8], strides = [1, 1, 1]} : vector<10x10x8xf32> to vector<8x8x8xf32>
      %53 = vector.shape_cast %52 : vector<8x8x8xf32> to vector<64x8xf32>
      %54 = vector.extract_strided_slice %25 {offsets = [1, 0, 0], sizes = [8, 8, 8], strides = [1, 1, 1]} : vector<10x10x8xf32> to vector<8x8x8xf32>
      %55 = vector.shape_cast %54 : vector<8x8x8xf32> to vector<64x8xf32>
      %56 = vector.extract_strided_slice %25 {offsets = [1, 1, 0], sizes = [8, 8, 8], strides = [1, 1, 1]} : vector<10x10x8xf32> to vector<8x8x8xf32>
      %57 = vector.shape_cast %56 : vector<8x8x8xf32> to vector<64x8xf32>
      %58 = vector.extract_strided_slice %25 {offsets = [1, 2, 0], sizes = [8, 8, 8], strides = [1, 1, 1]} : vector<10x10x8xf32> to vector<8x8x8xf32>
      %59 = vector.shape_cast %58 : vector<8x8x8xf32> to vector<64x8xf32>
      %60 = vector.extract_strided_slice %25 {offsets = [2, 0, 0], sizes = [8, 8, 8], strides = [1, 1, 1]} : vector<10x10x8xf32> to vector<8x8x8xf32>
      %61 = vector.shape_cast %60 : vector<8x8x8xf32> to vector<64x8xf32>
      %62 = vector.extract_strided_slice %25 {offsets = [2, 1, 0], sizes = [8, 8, 8], strides = [1, 1, 1]} : vector<10x10x8xf32> to vector<8x8x8xf32>
      %63 = vector.shape_cast %62 : vector<8x8x8xf32> to vector<64x8xf32>
      %64 = vector.extract_strided_slice %25 {offsets = [2, 2, 0], sizes = [8, 8, 8], strides = [1, 1, 1]} : vector<10x10x8xf32> to vector<8x8x8xf32>
      %65 = vector.shape_cast %64 : vector<8x8x8xf32> to vector<64x8xf32>
      %66 = vector.extract_strided_slice %29 {offsets = [0, 0, 0], sizes = [8, 8, 8], strides = [1, 1, 1]} : vector<10x10x8xf32> to vector<8x8x8xf32>
      %67 = vector.shape_cast %66 : vector<8x8x8xf32> to vector<64x8xf32>
      %68 = vector.extract_strided_slice %29 {offsets = [0, 1, 0], sizes = [8, 8, 8], strides = [1, 1, 1]} : vector<10x10x8xf32> to vector<8x8x8xf32>
      %69 = vector.shape_cast %68 : vector<8x8x8xf32> to vector<64x8xf32>
      %70 = vector.extract_strided_slice %29 {offsets = [0, 2, 0], sizes = [8, 8, 8], strides = [1, 1, 1]} : vector<10x10x8xf32> to vector<8x8x8xf32>
      %71 = vector.shape_cast %70 : vector<8x8x8xf32> to vector<64x8xf32>
      %72 = vector.extract_strided_slice %29 {offsets = [1, 0, 0], sizes = [8, 8, 8], strides = [1, 1, 1]} : vector<10x10x8xf32> to vector<8x8x8xf32>
      %73 = vector.shape_cast %72 : vector<8x8x8xf32> to vector<64x8xf32>
      %74 = vector.extract_strided_slice %29 {offsets = [1, 1, 0], sizes = [8, 8, 8], strides = [1, 1, 1]} : vector<10x10x8xf32> to vector<8x8x8xf32>
      %75 = vector.shape_cast %74 : vector<8x8x8xf32> to vector<64x8xf32>
      %76 = vector.extract_strided_slice %29 {offsets = [1, 2, 0], sizes = [8, 8, 8], strides = [1, 1, 1]} : vector<10x10x8xf32> to vector<8x8x8xf32>
      %77 = vector.shape_cast %76 : vector<8x8x8xf32> to vector<64x8xf32>
      %78 = vector.extract_strided_slice %29 {offsets = [2, 0, 0], sizes = [8, 8, 8], strides = [1, 1, 1]} : vector<10x10x8xf32> to vector<8x8x8xf32>
      %79 = vector.shape_cast %78 : vector<8x8x8xf32> to vector<64x8xf32>
      %80 = vector.extract_strided_slice %29 {offsets = [2, 1, 0], sizes = [8, 8, 8], strides = [1, 1, 1]} : vector<10x10x8xf32> to vector<8x8x8xf32>
      %81 = vector.shape_cast %80 : vector<8x8x8xf32> to vector<64x8xf32>
      %82 = vector.extract_strided_slice %29 {offsets = [2, 2, 0], sizes = [8, 8, 8], strides = [1, 1, 1]} : vector<10x10x8xf32> to vector<8x8x8xf32>
      %83 = vector.shape_cast %82 : vector<8x8x8xf32> to vector<64x8xf32>
      %84 = tpu.concatenate %31, %33, %35, %37, %39, %41, %43, %45, %47, %49, %51, %53, %55, %57, %59, %61 in 1 : vector<64x8xf32>, vector<64x8xf32>, vector<64x8xf32>, vector<64x8xf32>, vector<64x8xf32>, vector<64x8xf32>, vector<64x8xf32>, vector<64x8xf32>, vector<64x8xf32>, vector<64x8xf32>, vector<64x8xf32>, vector<64x8xf32>, vector<64x8xf32>, vector<64x8xf32>, vector<64x8xf32>, vector<64x8xf32> -> vector<64x128xf32>
      %85 = tpu.concatenate %63, %65, %67, %69, %71, %73, %75, %77, %79, %81, %83 in 1 : vector<64x8xf32>, vector<64x8xf32>, vector<64x8xf32>, vector<64x8xf32>, vector<64x8xf32>, vector<64x8xf32>, vector<64x8xf32>, vector<64x8xf32>, vector<64x8xf32>, vector<64x8xf32>, vector<64x8xf32> -> vector<64x88xf32>
      %86 = tpu.concatenate %84, %85 in 1 : vector<64x128xf32>, vector<64x88xf32> -> vector<64x216xf32>
      %cst = arith.constant dense<0.000000e+00> : vector<64x4xf32>
      %87 = tpu.matmul %86, %14, %cst {dimension_numbers = #tpu.dot_dimension_numbers<[1], [0], [0], [1], [0, 0, 1, 1], [], []>} : vector<64x216xf32>, vector<216x4xf32>, vector<64x4xf32> -> vector<64x4xf32>
      %88 = vector.broadcast %15 : vector<1x4xf32> to vector<64x4xf32>
      %89 = arith.mulf %87, %88 : vector<64x4xf32>
      %90 = vector.broadcast %16 : vector<1x4xf32> to vector<64x4xf32>
      %91 = arith.addf %89, %90 : vector<64x4xf32>
      %cst_33 = arith.constant 0.000000e+00 : f32
      %92 = vector.broadcast %cst_33 : f32 to vector<64x4xf32>
      %93 = arith.maximumf %91, %92 : vector<64x4xf32>
      %c1_i32_34 = arith.constant 1 : i32
      %94 = arith.addi %arg11, %c1_i32_34 : i32
      %95 = arith.index_cast %94 : i32 to index
      %c0_35 = arith.constant 0 : index
      %c0_36 = arith.constant 0 : index
      %96 = vector.load %arg10[%95, %c0_35, %c0_36] : memref<4x64x4xf32, #tpu.memory_space<vmem>>, vector<1x64x4xf32>
      %97 = vector.shape_cast %96 : vector<1x64x4xf32> to vector<64x4xf32>
      %98 = arith.addf %93, %97 : vector<64x4xf32>
      %c0_37 = arith.constant 0 : index
      %99 = arith.index_cast %arg11 : i32 to index
      %c0_38 = arith.constant 0 : index
      %c0_39 = arith.constant 0 : index
      %100 = vector.load %arg8[%c0_37, %99, %c0_38, %c0_39] : memref<1x2x64x4xf32, #tpu.memory_space<vmem>>, vector<1x1x64x4xf32>
      %101 = vector.shape_cast %100 : vector<1x1x64x4xf32> to vector<64x4xf32>
      %102 = vector.shape_cast %98 : vector<64x4xf32> to vector<1x1x64x4xf32>
      tpu.vector_store %arg8[%c0_37, %99, %c0_38, %c0_39], %102 {strides = array<i32>} : memref<1x2x64x4xf32, #tpu.memory_space<vmem>>, vector<1x1x64x4xf32>,
    }
    %c2_i32_21 = arith.constant 2 : i32
    return
  }
  func.func @transform_0(%arg0: i32) -> (i32, i32, i32, i32, i32) {
    %c0_i32 = arith.constant 0 : i32
    %c0_i32_0 = arith.constant 0 : i32
    %c0_i32_1 = arith.constant 0 : i32
    %c0_i32_2 = arith.constant 0 : i32
    %c0_i32_3 = arith.constant 0 : i32
    return %arg0, %c0_i32, %c0_i32_0, %c0_i32_1, %c0_i32_2 : i32, i32, i32, i32, i32
  }
  func.func @transform_1(%arg0: i32) -> (i32, i32) {
    %c0_i32 = arith.constant 0 : i32
    %c0_i32_0 = arith.constant 0 : i32
    %c0_i32_1 = arith.constant 0 : i32
    return %c0_i32, %c0_i32_0 : i32, i32
  }
  func.func @transform_2(%arg0: i32) -> (i32, i32) {
    %c0_i32 = arith.constant 0 : i32
    %c0_i32_0 = arith.constant 0 : i32
    %c0_i32_1 = arith.constant 0 : i32
    return %c0_i32, %c0_i32_0 : i32, i32
  }
  func.func @transform_3(%arg0: i32) -> (i32, i32) {
    %c0_i32 = arith.constant 0 : i32
    %c0_i32_0 = arith.constant 0 : i32
    %c0_i32_1 = arith.constant 0 : i32
    return %c0_i32, %c0_i32_0 : i32, i32
  }
  func.func @transform_4(%arg0: i32) -> (i32, i32) {
    %c0_i32 = arith.constant 0 : i32
    %c0_i32_0 = arith.constant 0 : i32
    %c0_i32_1 = arith.constant 0 : i32
    return %c0_i32, %c0_i32_0 : i32, i32
  }
  func.func @transform_5(%arg0: i32) -> (i32, i32) {
    %c0_i32 = arith.constant 0 : i32
    %c0_i32_0 = arith.constant 0 : i32
    %c0_i32_1 = arith.constant 0 : i32
    return %c0_i32, %c0_i32_0 : i32, i32
  }
  func.func @transform_6(%arg0: i32) -> (i32, i32) {
    %c0_i32 = arith.constant 0 : i32
    %c0_i32_0 = arith.constant 0 : i32
    %c0_i32_1 = arith.constant 0 : i32
    return %c0_i32, %c0_i32_0 : i32, i32
  }
  func.func @transform_7(%arg0: i32) -> (i32, i32, i32, i32) {
    %c0_i32 = arith.constant 0 : i32
    %c0_i32_0 = arith.constant 0 : i32
    %c0_i32_1 = arith.constant 0 : i32
    %c0_i32_2 = arith.constant 0 : i32
    return %arg0, %c0_i32, %c0_i32_0, %c0_i32_1 : i32, i32, i32, i32
  }
}

</mosaic_0001>

<llo_original>
// kernel: basic_layers_forward.1
$region0: #{basic_layers_forward.1}
  #allocation0 [shape = 'u32[]', space=smem, size = 0x4, offset = 0x4, fixed_abs, tag = 'smem constant byte address 0x4 - core index']
  #allocation1 [shape = 'u32[144,128]{1,0:T(1,128)}', space=vmem, size = 0x12000, scoped, tag = 'internal scratch']
  #allocation2 [shape = 'f32[4,10,10,8]{3,2,1,0:T(8,128)}', space=vmem, size = 0x50000, scoped, tag = 'scratch operand']
  #allocation3 [shape = 'f32[4,64,4]{2,1,0:T(8,128)}', space=vmem, size = 0x20000, scoped, tag = 'scratch operand']
  %s0 = inlined_call_operand.vmem [shape: f32[4,6,10,10,4], index: 0, kind: input, shape index: {}]
  %s1 = inlined_call_operand.vmem [shape: f32[108,12], index: 1, kind: input, shape index: {}]
  %s2 = inlined_call_operand.vmem [shape: f32[1,12], index: 2, kind: input, shape index: {}]
  %s3 = inlined_call_operand.vmem [shape: f32[1,12], index: 3, kind: input, shape index: {}]
  %s4 = inlined_call_operand.vmem [shape: f32[216,4], index: 4, kind: input, shape index: {}]
  %s5 = inlined_call_operand.vmem [shape: f32[1,4], index: 5, kind: input, shape index: {}]
  %s6 = inlined_call_operand.vmem [shape: f32[1,4], index: 6, kind: input, shape index: {}]
  %s7 = inlined_call_operand.vmem [shape: f32[4,2,64,4], index: 7, kind: output, shape index: {}]
  %s8 = sld [smem:[#allocation0]]
  $region75: #{basic_layers_forward.1} parent=0
    _
  %s10 = ssub.s32 1, %s8
  %s11 = scalar_select 0, %s10, %s8
  loop: start=0, step=1, limit=6
  $region2: #{basic_layers_forward.1} parent=0 // loop_pre_header
    _
  $region3: #{basic_layers_forward.1} parent=0 // loop_header
    %s13 = sphi 0, %s17
    %p14 = scmp.ge.s32.totalorder %s13, 6
    %s23 = sphi 0, %s25
    %s26 = sphi 0, %s23
    %s27 = sphi 0, %s26
    %s43 = sphi 0, %s27
    %s47 = sphi 0, %s47
    %s49 = sphi 0, %s47
    %s50 = sphi 0, %s49
    %s64 = sphi 0, %s50
    %s68 = sphi 0, %s68
    %s70 = sphi 0, %s68
    %s71 = sphi 0, %s70
    %s85 = sphi 0, %s71
    %s89 = sphi 0, %s89
    %s91 = sphi 0, %s89
    %s92 = sphi 0, %s91
    %s106 = sphi 0, %s92
    %s110 = sphi 0, %s110
    %s112 = sphi 0, %s110
    %s113 = sphi 0, %s112
    %s127 = sphi 0, %s113
    %s131 = sphi 0, %s131
    %s133 = sphi 0, %s131
    %s134 = sphi 0, %s133
    %s148 = sphi 0, %s134
    %s152 = sphi 0, %s152
    %s154 = sphi 0, %s152
    %s155 = sphi 0, %s154
    %s169 = sphi 0, %s155
    %s175 = sphi 0, %s177
    %s178 = sphi 0, %s175
    %s179 = sphi 0, %s178
    %s195 = sphi 0, %s179
  $region4: #{basic_layers_forward.1} parent=0 // loop_header_branch
    %16 = sbr.rel (%p14) target = $region8
  $region5: #{basic_layers_forward.1} parent=0 // loop_body
    %s18 = ssub.s32 %s13, 1
    %s19 = ssub.s32 %s13, 2
    %s20 = sadd.s32 %s13, 1
    %s21 = ssub.s32 %s13, %s20
    %p22 = scmp.eq.s32.totalorder %s21, 0
    %s24 = sadd.s32 %s23, 1
    %s25 = scalar_select %p22, %s23, %s24
    %p28 = pneg %p22
    %p29 = scmp.eq.s32.totalorder %s13, 3
    %p30 = por %p28, %p29
    %p31 = scmp.ne.s32.totalorder %s23, %s26
    %p32 = scmp.eq.s32.totalorder %s13, 0
    %p33 = por %p31, %p32
    %p34 = scmp.ne.s32.totalorder %s23, %s26
    %p35 = scmp.eq.s32.totalorder %s18, 3
    %p36 = por %p34, %p35
    %p37 = scmp.ne.s32.totalorder %s26, %s27
    %p38 = scmp.eq.s32.totalorder %s18, 0
    %p39 = por %p37, %p38
    %p40 = scmp.ne.s32.totalorder %s26, %s27
    %p41 = scmp.eq.s32.totalorder %s19, 3
    %p42 = por %p40, %p41
    %p44 = scmp.ne.s32.totalorder %s27, %s43
    %p45 = scmp.eq.s32.totalorder %s19, 0
    %p46 = por %p44, %p45
    %s48 = sadd.s32 %s47, 1
    %p51 = scmp.eq.s32.totalorder %s13, 3
    %p52 = scmp.ne.s32.totalorder %s47, %s49
    %p53 = scmp.eq.s32.totalorder %s13, 0
    %p54 = por %p52, %p53
    %p55 = scmp.ne.s32.totalorder %s47, %s49
    %p56 = scmp.eq.s32.totalorder %s18, 3
    %p57 = por %p55, %p56
    %p58 = scmp.ne.s32.totalorder %s49, %s50
    %p59 = scmp.eq.s32.totalorder %s18, 0
    %p60 = por %p58, %p59
    %p61 = scmp.ne.s32.totalorder %s49, %s50
    %p62 = scmp.eq.s32.totalorder %s19, 3
    %p63 = por %p61, %p62
    %p65 = scmp.ne.s32.totalorder %s50, %s64
    %p66 = scmp.eq.s32.totalorder %s19, 0
    %p67 = por %p65, %p66
    %s69 = sadd.s32 %s68, 1
    %p72 = scmp.eq.s32.totalorder %s13, 3
    %p73 = scmp.ne.s32.totalorder %s68, %s70
    %p74 = scmp.eq.s32.totalorder %s13, 0
    %p75 = por %p73, %p74
    %p76 = scmp.ne.s32.totalorder %s68, %s70
    %p77 = scmp.eq.s32.totalorder %s18, 3
    %p78 = por %p76, %p77
    %p79 = scmp.ne.s32.totalorder %s70, %s71
    %p80 = scmp.eq.s32.totalorder %s18, 0
    %p81 = por %p79, %p80
    %p82 = scmp.ne.s32.totalorder %s70, %s71
    %p83 = scmp.eq.s32.totalorder %s19, 3
    %p84 = por %p82, %p83
    %p86 = scmp.ne.s32.totalorder %s71, %s85
    %p87 = scmp.eq.s32.totalorder %s19, 0
    %p88 = por %p86, %p87
    %s90 = sadd.s32 %s89, 1
    %p93 = scmp.eq.s32.totalorder %s13, 3
    %p94 = scmp.ne.s32.totalorder %s89, %s91
    %p95 = scmp.eq.s32.totalorder %s13, 0
    %p96 = por %p94, %p95
    %p97 = scmp.ne.s32.totalorder %s89, %s91
    %p98 = scmp.eq.s32.totalorder %s18, 3
    %p99 = por %p97, %p98
    %p100 = scmp.ne.s32.totalorder %s91, %s92
    %p101 = scmp.eq.s32.totalorder %s18, 0
    %p102 = por %p100, %p101
    %p103 = scmp.ne.s32.totalorder %s91, %s92
    %p104 = scmp.eq.s32.totalorder %s19, 3
    %p105 = por %p103, %p104
    %p107 = scmp.ne.s32.totalorder %s92, %s106
    %p108 = scmp.eq.s32.totalorder %s19, 0
    %p109 = por %p107, %p108
    %s111 = sadd.s32 %s110, 1
    %p114 = scmp.eq.s32.totalorder %s13, 3
    %p115 = scmp.ne.s32.totalorder %s110, %s112
    %p116 = scmp.eq.s32.totalorder %s13, 0
    %p117 = por %p115, %p116
    %p118 = scmp.ne.s32.totalorder %s110, %s112
    %p119 = scmp.eq.s32.totalorder %s18, 3
    %p120 = por %p118, %p119
    %p121 = scmp.ne.s32.totalorder %s112, %s113
    %p122 = scmp.eq.s32.totalorder %s18, 0
    %p123 = por %p121, %p122
    %p124 = scmp.ne.s32.totalorder %s112, %s113
    %p125 = scmp.eq.s32.totalorder %s19, 3
    %p126 = por %p124, %p125
    %p128 = scmp.ne.s32.totalorder %s113, %s127
    %p129 = scmp.eq.s32.totalorder %s19, 0
    %p130 = por %p128, %p129
    %s132 = sadd.s32 %s131, 1
    %p135 = scmp.eq.s32.totalorder %s13, 3
    %p136 = scmp.ne.s32.totalorder %s131, %s133
    %p137 = scmp.eq.s32.totalorder %s13, 0
    %p138 = por %p136, %p137
    %p139 = scmp.ne.s32.totalorder %s131, %s133
    %p140 = scmp.eq.s32.totalorder %s18, 3
    %p141 = por %p139, %p140
    %p142 = scmp.ne.s32.totalorder %s133, %s134
    %p143 = scmp.eq.s32.totalorder %s18, 0
    %p144 = por %p142, %p143
    %p145 = scmp.ne.s32.totalorder %s133, %s134
    %p146 = scmp.eq.s32.totalorder %s19, 3
    %p147 = por %p145, %p146
    %p149 = scmp.ne.s32.totalorder %s134, %s148
    %p150 = scmp.eq.s32.totalorder %s19, 0
    %p151 = por %p149, %p150
    %s153 = sadd.s32 %s152, 1
    %p156 = scmp.eq.s32.totalorder %s13, 3
    %p157 = scmp.ne.s32.totalorder %s152, %s154
    %p158 = scmp.eq.s32.totalorder %s13, 0
    %p159 = por %p157, %p158
    %p160 = scmp.ne.s32.totalorder %s152, %s154
    %p161 = scmp.eq.s32.totalorder %s18, 3
    %p162 = por %p160, %p161
    %p163 = scmp.ne.s32.totalorder %s154, %s155
    %p164 = scmp.eq.s32.totalorder %s18, 0
    %p165 = por %p163, %p164
    %p166 = scmp.ne.s32.totalorder %s154, %s155
    %p167 = scmp.eq.s32.totalorder %s19, 3
    %p168 = por %p166, %p167
    %p170 = scmp.ne.s32.totalorder %s155, %s169
    %p171 = scmp.eq.s32.totalorder %s19, 0
    %p172 = por %p170, %p171
    %s173 = ssub.s32 %s13, %s20
    %p174 = scmp.eq.s32.totalorder %s173, 0
    %s176 = sadd.s32 %s175, 1
    %s177 = scalar_select %p174, %s175, %s176
    %p180 = pneg %p174
    %p181 = scmp.eq.s32.totalorder %s13, 3
    %p182 = por %p180, %p181
    %p183 = scmp.ne.s32.totalorder %s175, %s178
    %p184 = scmp.eq.s32.totalorder %s13, 0
    %p185 = por %p183, %p184
    %p186 = scmp.ne.s32.totalorder %s175, %s178
    %p187 = scmp.eq.s32.totalorder %s18, 3
    %p188 = por %p186, %p187
    %p189 = scmp.ne.s32.totalorder %s178, %s179
    %p190 = scmp.eq.s32.totalorder %s18, 0
    %p191 = por %p189, %p190
    %p192 = scmp.ne.s32.totalorder %s178, %s179
    %p193 = scmp.eq.s32.totalorder %s19, 3
    %p194 = por %p192, %p193
    %p196 = scmp.ne.s32.totalorder %s179, %s195
    %p197 = scmp.eq.s32.totalorder %s19, 0
    %p198 = por %p196, %p197
    %p199 = scmp.le.s32.totalorder 1, %s13
    %p200 = scmp.lt.s32.totalorder %s13, 5
    %p201 = pnand %p199, %p200
    %p202 = pneg %p201
    // Predicated region
    $region9: #{basic_layers_forward.1} parent=5 // pred_check
      _
    $region10: #{basic_layers_forward.1} parent=5 // pred_check_branch
      %204 = sbr.rel (%p201) target = $region12
    $region11: #{basic_layers_forward.1} parent=5 // pred_region
      %s205 = ssub.s32 %s13, 1
      // Predicated region
      $region13: #{basic_layers_forward.1} parent=11 // pred_check
        %p206 = pneg %p60
      $region14: #{basic_layers_forward.1} parent=11 // pred_check_branch
        %208 = sbr.rel (%p206) target = $region16
      $region15: #{basic_layers_forward.1} parent=11 // pred_region
        _
      $region16: #{basic_layers_forward.1} parent=11 // pred_fallthru
        _
      // Predicated region
      $region17: #{basic_layers_forward.1} parent=11 // pred_check
        %p209 = pneg %p81
      $region18: #{basic_layers_forward.1} parent=11 // pred_check_branch
        %211 = sbr.rel (%p209) target = $region20
      $region19: #{basic_layers_forward.1} parent=11 // pred_region
        _
      $region20: #{basic_layers_forward.1} parent=11 // pred_fallthru
        _
      // Predicated region
      $region21: #{basic_layers_forward.1} parent=11 // pred_check
        %p212 = pneg %p102
      $region22: #{basic_layers_forward.1} parent=11 // pred_check_branch
        %214 = sbr.rel (%p212) target = $region24
      $region23: #{basic_layers_forward.1} parent=11 // pred_region
        _
      $region24: #{basic_layers_forward.1} parent=11 // pred_fallthru
        _
      // Predicated region
      $region25: #{basic_layers_forward.1} parent=11 // pred_check
        %p215 = pneg %p123
      $region26: #{basic_layers_forward.1} parent=11 // pred_check_branch
        %217 = sbr.rel (%p215) target = $region28
      $region27: #{basic_layers_forward.1} parent=11 // pred_region
        _
      $region28: #{basic_layers_forward.1} parent=11 // pred_fallthru
        _
      // Predicated region
      $region29: #{basic_layers_forward.1} parent=11 // pred_check
        %p218 = pneg %p144
      $region30: #{basic_layers_forward.1} parent=11 // pred_check_branch
        %220 = sbr.rel (%p218) target = $region32
      $region31: #{basic_layers_forward.1} parent=11 // pred_region
        _
      $region32: #{basic_layers_forward.1} parent=11 // pred_fallthru
        _
      // Predicated region
      $region33: #{basic_layers_forward.1} parent=11 // pred_check
        %p221 = pneg %p165
      $region34: #{basic_layers_forward.1} parent=11 // pred_check_branch
        %223 = sbr.rel (%p221) target = $region36
      $region35: #{basic_layers_forward.1} parent=11 // pred_region
        _
      $region36: #{basic_layers_forward.1} parent=11 // pred_fallthru
        _
    $region12: #{basic_layers_forward.1} parent=5 // pred_fallthru
      _
    %p224 = scmp.lt.s32.totalorder %s13, 4
    // Predicated region
    $region37: #{basic_layers_forward.1} parent=5 // pred_check
      %p225 = pneg %p224
    $region38: #{basic_layers_forward.1} parent=5 // pred_check_branch
      %227 = sbr.rel (%p225) target = $region40
    $region39: #{basic_layers_forward.1} parent=5 // pred_region
      // Predicated region
      $region41: #{basic_layers_forward.1} parent=39 // pred_check
        %p228 = pneg %p33
      $region42: #{basic_layers_forward.1} parent=39 // pred_check_branch
        %230 = sbr.rel (%p228) target = $region44
      $region43: #{basic_layers_forward.1} parent=39 // pred_region
        %p231 = scmp.lt.s32.totalorder %s13, 3
        %s232 = scalar_select %p231, %s13, 3
        %s233 = smul.addr %s232, 120
        %s234 = smul.addr %s233, 8
        %s235 = scalar_lea.vmem %s0, %s234
      $region44: #{basic_layers_forward.1} parent=39 // pred_fallthru
        _
    $region40: #{basic_layers_forward.1} parent=5 // pred_fallthru
      _
    %p236 = scmp.le.s32.totalorder 1, %s13
    %p237 = scmp.lt.s32.totalorder %s13, 5
    %p238 = pnand %p236, %p237
    %p239 = pneg %p238
    // Predicated region
    $region45: #{basic_layers_forward.1} parent=5 // pred_check
      _
    $region46: #{basic_layers_forward.1} parent=5 // pred_check_branch
      %241 = sbr.rel (%p238) target = $region48
    $region47: #{basic_layers_forward.1} parent=5 // pred_region
      %s242 = ssub.s32 %s13, 1
      %p243 = scmp.lt.s32.totalorder %s18, 3
      %s244 = scalar_select %p243, %s18, 3
      %s245 = smul.addr %s244, 120
      %s246 = smul.addr %s245, 8
      %s247 = scalar_lea.vmem %s0, %s246
      %p248 = pneg %p39
      %p249 = pneg %p36
      %p250 = pneg %p60
      %p251 = pneg %p57
      %p252 = pneg %p81
      %p253 = pneg %p78
      %p254 = pneg %p102
      %p255 = pneg %p99
      %p256 = pneg %p123
      %p257 = pneg %p120
      %p258 = pneg %p144
      %p259 = pneg %p141
      %p260 = pneg %p165
      %p261 = pneg %p162
      %p262 = pneg %p191
      %p263 = pneg %p188
      %p264 = scmp.lt.s32.totalorder %s18, 3
      %s265 = scalar_select %p264, %s18, 3
      %s266 = smul.addr %s265, 16
      %s267 = smul.addr %s266, 8
      %s268 = scalar_lea.vmem %s7, %s267
      %p269 = scmp.lt.s32.totalorder %s18, 3
      %s270 = scalar_select %p269, %s18, 3
      %s271 = smul.addr %s270, 120
      %s272 = smul.addr %s271, 8
      %s273 = scalar_lea.vmem %s0, %s272
      %p274 = scmp.lt.s32.totalorder %s18, 3
      %s275 = scalar_select %p274, %s18, 3
      %s276 = smul.addr %s275, 16
      %s277 = smul.addr %s276, 8
      %s278 = scalar_lea.vmem %s7, %s277
      %p279 = scmp.lt.s32.totalorder %s18, 0
      %s280 = ssub.s32 0, %s18
      %s281 = scalar_select %p279, %s280, %s18
      %s282 = sand.u32 %s281, 1
      %s283 = ssub.s32 0, %s282
      %s284 = scalar_select %p279, %s283, %s282
      %p285 = scmp.ne.s32.totalorder %s284, 0
      %p286 = scmp.lt.s32.totalorder %s284, 0
      %p287 = pnand %p286, %p285
      %p288 = pneg %p287
      %s289 = sadd.s32 %s284, 2
      %s290 = scalar_select %p288, %s289, %s284
      %s291 = smul.u32 %s290, 2
      %v292 = vld [vmem:[%s1] sm:$0xff]
      %v293 = vld [vmem:[%s1 + $0x8] sm:$0xff]
      %v294 = vld [vmem:[%s1 + $0x10] sm:$0xff]
      %v295 = vld [vmem:[%s1 + $0x18] sm:$0xff]
      %v296 = vld [vmem:[%s1 + $0x20] sm:$0xff]
      %v297 = vld [vmem:[%s1 + $0x28] sm:$0xff]
      %v298 = vld [vmem:[%s1 + $0x30] sm:$0xff]
      %v299 = vld [vmem:[%s1 + $0x38] sm:$0xff]
      %v300 = vld [vmem:[%s1 + $0x40] sm:$0xff]
      %v301 = vld [vmem:[%s1 + $0x48] sm:$0xff]
      %v302 = vld [vmem:[%s1 + $0x50] sm:$0xff]
      %v303 = vld [vmem:[%s1 + $0x58] sm:$0xff]
      %v304 = vld [vmem:[%s1 + $0x60] sm:$0xff]
      %v305 = vld [vmem:[%s1 + $0x68] sm:$0xf]
      %v306 = vld [vmem:[%s2] sm:$0x1]
      %v307 = vld [vmem:[%s3] sm:$0x1]
      %v308 = vld [vmem:[%s4] sm:$0xff]
      %v309 = vld [vmem:[%s4 + $0x8] sm:$0xff]
      %v310 = vld [vmem:[%s4 + $0x10] sm:$0xff]
      %v311 = vld [vmem:[%s4 + $0x18] sm:$0xff]
      %v312 = vld [vmem:[%s4 + $0x20] sm:$0xff]
      %v313 = vld [vmem:[%s4 + $0x28] sm:$0xff]
      %v314 = vld [vmem:[%s4 + $0x30] sm:$0xff]
      %v315 = vld [vmem:[%s4 + $0x38] sm:$0xff]
      %v316 = vld [vmem:[%s4 + $0x40] sm:$0xff]
      %v317 = vld [vmem:[%s4 + $0x48] sm:$0xff]
      %v318 = vld [vmem:[%s4 + $0x50] sm:$0xff]
      %v319 = vld [vmem:[%s4 + $0x58] sm:$0xff]
      %v320 = vld [vmem:[%s4 + $0x60] sm:$0xff]
      %v321 = vld [vmem:[%s4 + $0x68] sm:$0xff]
      %v322 = vld [vmem:[%s4 + $0x70] sm:$0xff]
      %v323 = vld [vmem:[%s4 + $0x78] sm:$0xff]
      %v324 = vld [vmem:[%s4 + $0x80] sm:$0xff]
      %v325 = vld [vmem:[%s4 + $0x88] sm:$0xff]
      %v326 = vld [vmem:[%s4 + $0x90] sm:$0xff]
      %v327 = vld [vmem:[%s4 + $0x98] sm:$0xff]
      %v328 = vld [vmem:[%s4 + $0xa0] sm:$0xff]
      %v329 = vld [vmem:[%s4 + $0xa8] sm:$0xff]
      %v330 = vld [vmem:[%s4 + $0xb0] sm:$0xff]
      %v331 = vld [vmem:[%s4 + $0xb8] sm:$0xff]
      %v332 = vld [vmem:[%s4 + $0xc0] sm:$0xff]
      %v333 = vld [vmem:[%s4 + $0xc8] sm:$0xff]
      %v334 = vld [vmem:[%s4 + $0xd0] sm:$0xff]
      %v335 = vld [vmem:[%s5] sm:$0x1]
      %v336 = vld [vmem:[%s6] sm:$0x1]
      loop: start=0, step=1, limit=4
      $region49: #{basic_layers_forward.1} parent=47 // loop_pre_header
        _
      $region50: #{basic_layers_forward.1} parent=47 // loop_header
        %s338 = sphi 0, %s342
        %p339 = scmp.ge.s32.totalorder %s338, 4
      $region51: #{basic_layers_forward.1} parent=47 // loop_header_branch
        %341 = sbr.rel (%p339) target = $region55
      $region52: #{basic_layers_forward.1} parent=47 // loop_body
        %s343 = smul.u32 %s338, 160
        %s344 = scalar_lea.vmem %s273, %s343
        %v345 = vld [vmem:[%s344] sm:$0xff]
        %v346 = vld [vmem:[%s344 + $0x8] sm:$0x3]
        %v347 = vld [vmem:[%s344 + $0x10] sm:$0xff]
        %v348 = vld [vmem:[%s344 + $0x18] sm:$0x3]
        %v349 = vld [vmem:[%s344 + $0x20] sm:$0xff]
        %v350 = vld [vmem:[%s344 + $0x28] sm:$0x3]
        %v351 = vld [vmem:[%s344 + $0x30] sm:$0xff]
        %v352 = vld [vmem:[%s344 + $0x38] sm:$0x3]
        %v353 = vld [vmem:[%s344 + $0x40] sm:$0xff]
        %v354 = vld [vmem:[%s344 + $0x48] sm:$0x3]
        %v355 = vld [vmem:[%s344 + $0x50] sm:$0xff]
        %v356 = vld [vmem:[%s344 + $0x58] sm:$0x3]
        %v357 = vld [vmem:[%s344 + $0x60] sm:$0xff]
        %v358 = vld [vmem:[%s344 + $0x68] sm:$0x3]
        %v359 = vld [vmem:[%s344 + $0x70] sm:$0xff]
        %v360 = vld [vmem:[%s344 + $0x78] sm:$0x3]
        %v361 = vld [vmem:[%s344 + $0x80] sm:$0xff]
        %v362 = vld [vmem:[%s344 + $0x88] sm:$0x3]
        %v363 = vld [vmem:[%s344 + $0x90] sm:$0xff]
        %v364 = vld [vmem:[%s344 + $0x98] sm:$0x3]
        %s365 = sadd.s32 %s338, 1
        %s366 = smul.u32 %s365, 160
        %s367 = scalar_lea.vmem %s273, %s366
        %v368 = vld [vmem:[%s367] sm:$0xff]
        %v369 = vld [vmem:[%s367 + $0x8] sm:$0x3]
        %v370 = vld [vmem:[%s367 + $0x10] sm:$0xff]
        %v371 = vld [vmem:[%s367 + $0x18] sm:$0x3]
        %v372 = vld [vmem:[%s367 + $0x20] sm:$0xff]
        %v373 = vld [vmem:[%s367 + $0x28] sm:$0x3]
        %v374 = vld [vmem:[%s367 + $0x30] sm:$0xff]
        %v375 = vld [vmem:[%s367 + $0x38] sm:$0x3]
        %v376 = vld [vmem:[%s367 + $0x40] sm:$0xff]
        %v377 = vld [vmem:[%s367 + $0x48] sm:$0x3]
        %v378 = vld [vmem:[%s367 + $0x50] sm:$0xff]
        %v379 = vld [vmem:[%s367 + $0x58] sm:$0x3]
        %v380 = vld [vmem:[%s367 + $0x60] sm:$0xff]
        %v381 = vld [vmem:[%s367 + $0x68] sm:$0x3]
        %v382 = vld [vmem:[%s367 + $0x70] sm:$0xff]
        %v383 = vld [vmem:[%s367 + $0x78] sm:$0x3]
        %v384 = vld [vmem:[%s367 + $0x80] sm:$0xff]
        %v385 = vld [vmem:[%s367 + $0x88] sm:$0x3]
        %v386 = vld [vmem:[%s367 + $0x90] sm:$0xff]
        %v387 = vld [vmem:[%s367 + $0x98] sm:$0x3]
        %s388 = sadd.s32 %s338, 2
        %s389 = smul.u32 %s388, 160
        %s390 = scalar_lea.vmem %s273, %s389
        %v391 = vld [vmem:[%s390] sm:$0xff]
        %v392 = vld [vmem:[%s390 + $0x8] sm:$0x3]
        %v393 = vld [vmem:[%s390 + $0x10] sm:$0xff]
        %v394 = vld [vmem:[%s390 + $0x18] sm:$0x3]
        %v395 = vld [vmem:[%s390 + $0x20] sm:$0xff]
        %v396 = vld [vmem:[%s390 + $0x28] sm:$0x3]
        %v397 = vld [vmem:[%s390 + $0x30] sm:$0xff]
        %v398 = vld [vmem:[%s390 + $0x38] sm:$0x3]
        %v399 = vld [vmem:[%s390 + $0x40] sm:$0xff]
        %v400 = vld [vmem:[%s390 + $0x48] sm:$0x3]
        %v401 = vld [vmem:[%s390 + $0x50] sm:$0xff]
        %v402 = vld [vmem:[%s390 + $0x58] sm:$0x3]
        %v403 = vld [vmem:[%s390 + $0x60] sm:$0xff]
        %v404 = vld [vmem:[%s390 + $0x68] sm:$0x3]
        %v405 = vld [vmem:[%s390 + $0x70] sm:$0xff]
        %v406 = vld [vmem:[%s390 + $0x78] sm:$0x3]
        %v407 = vld [vmem:[%s390 + $0x80] sm:$0xff]
        %v408 = vld [vmem:[%s390 + $0x88] sm:$0x3]
        %v409 = vld [vmem:[%s390 + $0x90] sm:$0xff]
        %v410 = vld [vmem:[%s390 + $0x98] sm:$0x3]
        %vm427 = vcmask 1046528
        %v428 = vrot.slane %v345, 1
        %v429 = vrot.slane %v346, 1
        %v430 = vsel %vm427, %v428, %v429
        %v431 = vrot.slane %v347, 1
        %v432 = vrot.slane %v348, 1
        %v433 = vsel %vm427, %v431, %v432
        %v434 = vrot.slane %v349, 1
        %v435 = vrot.slane %v350, 1
        %v436 = vsel %vm427, %v434, %v435
        %v437 = vrot.slane %v351, 1
        %v438 = vrot.slane %v352, 1
        %v439 = vsel %vm427, %v437, %v438
        %v440 = vrot.slane %v353, 1
        %v441 = vrot.slane %v354, 1
        %v442 = vsel %vm427, %v440, %v441
        %v443 = vrot.slane %v355, 1
        %v444 = vrot.slane %v356, 1
        %v445 = vsel %vm427, %v443, %v444
        %v446 = vrot.slane %v357, 1
        %v447 = vrot.slane %v358, 1
        %v448 = vsel %vm427, %v446, %v447
        %v449 = vrot.slane %v359, 1
        %v450 = vrot.slane %v360, 1
        %v451 = vsel %vm427, %v449, %v450
        %vm452 = vcmask 1045504
        %v453 = vrot.slane %v345, 2
        %v454 = vrot.slane %v346, 2
        %v455 = vsel %vm452, %v453, %v454
        %v456 = vrot.slane %v347, 2
        %v457 = vrot.slane %v348, 2
        %v458 = vsel %vm452, %v456, %v457
        %v459 = vrot.slane %v349, 2
        %v460 = vrot.slane %v350, 2
        %v461 = vsel %vm452, %v459, %v460
        %v462 = vrot.slane %v351, 2
        %v463 = vrot.slane %v352, 2
        %v464 = vsel %vm452, %v462, %v463
        %v465 = vrot.slane %v353, 2
        %v466 = vrot.slane %v354, 2
        %v467 = vsel %vm452, %v465, %v466
        %v468 = vrot.slane %v355, 2
        %v469 = vrot.slane %v356, 2
        %v470 = vsel %vm452, %v468, %v469
        %v471 = vrot.slane %v357, 2
        %v472 = vrot.slane %v358, 2
        %v473 = vsel %vm452, %v471, %v472
        %v474 = vrot.slane %v359, 2
        %v475 = vrot.slane %v360, 2
        %v476 = vsel %vm452, %v474, %v475
        %v479 = vrot.slane %v361, 1
        %v480 = vrot.slane %v362, 1
        %v481 = vsel %vm427, %v479, %v480
        %v482 = vrot.slane %v361, 2
        %v483 = vrot.slane %v362, 2
        %v484 = vsel %vm452, %v482, %v483
        %v487 = vrot.slane %v363, 1
        %v488 = vrot.slane %v364, 1
        %v489 = vsel %vm427, %v487, %v488
        %v490 = vrot.slane %v363, 2
        %v491 = vrot.slane %v364, 2
        %v492 = vsel %vm452, %v490, %v491
        %v509 = vrot.slane %v368, 1
        %v510 = vrot.slane %v369, 1
        %v511 = vsel %vm427, %v509, %v510
        %v512 = vrot.slane %v370, 1
        %v513 = vrot.slane %v371, 1
        %v514 = vsel %vm427, %v512, %v513
        %v515 = vrot.slane %v372, 1
        %v516 = vrot.slane %v373, 1
        %v517 = vsel %vm427, %v515, %v516
        %v518 = vrot.slane %v374, 1
        %v519 = vrot.slane %v375, 1
        %v520 = vsel %vm427, %v518, %v519
        %v521 = vrot.slane %v376, 1
        %v522 = vrot.slane %v377, 1
        %v523 = vsel %vm427, %v521, %v522
        %v524 = vrot.slane %v378, 1
        %v525 = vrot.slane %v379, 1
        %v526 = vsel %vm427, %v524, %v525
        %v527 = vrot.slane %v380, 1
        %v528 = vrot.slane %v381, 1
        %v529 = vsel %vm427, %v527, %v528
        %v530 = vrot.slane %v382, 1
        %v531 = vrot.slane %v383, 1
        %v532 = vsel %vm427, %v530, %v531
        %v533 = vrot.slane %v368, 2
        %v534 = vrot.slane %v369, 2
        %v535 = vsel %vm452, %v533, %v534
        %v536 = vrot.slane %v370, 2
        %v537 = vrot.slane %v371, 2
        %v538 = vsel %vm452, %v536, %v537
        %v539 = vrot.slane %v372, 2
        %v540 = vrot.slane %v373, 2
        %v541 = vsel %vm452, %v539, %v540
        %v542 = vrot.slane %v374, 2
        %v543 = vrot.slane %v375, 2
        %v544 = vsel %vm452, %v542, %v543
        %v545 = vrot.slane %v376, 2
        %v546 = vrot.slane %v377, 2
        %v547 = vsel %vm452, %v545, %v546
        %v548 = vrot.slane %v378, 2
        %v549 = vrot.slane %v379, 2
        %v550 = vsel %vm452, %v548, %v549
        %v551 = vrot.slane %v380, 2
        %v552 = vrot.slane %v381, 2
        %v553 = vsel %vm452, %v551, %v552
        %v554 = vrot.slane %v382, 2
        %v555 = vrot.slane %v383, 2
        %v556 = vsel %vm452, %v554, %v555
        %v559 = vrot.slane %v384, 1
        %v560 = vrot.slane %v385, 1
        %v561 = vsel %vm427, %v559, %v560
        %v562 = vrot.slane %v384, 2
        %v563 = vrot.slane %v385, 2
        %v564 = vsel %vm452, %v562, %v563
        %v567 = vrot.slane %v386, 1
        %v568 = vrot.slane %v387, 1
        %v569 = vsel %vm427, %v567, %v568
        %v578 = vrot.slane %v386, 2
        %v579 = vrot.slane %v387, 2
        %v580 = vsel %vm452, %v578, %v579
        %v597 = vrot.slane %v391, 1
        %v598 = vrot.slane %v392, 1
        %v599 = vsel %vm427, %v597, %v598
        %v600 = vrot.slane %v393, 1
        %v601 = vrot.slane %v394, 1
        %v602 = vsel %vm427, %v600, %v601
        %v603 = vrot.slane %v395, 1
        %v604 = vrot.slane %v396, 1
        %v605 = vsel %vm427, %v603, %v604
        %v606 = vrot.slane %v397, 1
        %v607 = vrot.slane %v398, 1
        %v608 = vsel %vm427, %v606, %v607
        %v609 = vrot.slane %v399, 1
        %v610 = vrot.slane %v400, 1
        %v611 = vsel %vm427, %v609, %v610
        %v612 = vrot.slane %v401, 1
        %v613 = vrot.slane %v402, 1
        %v614 = vsel %vm427, %v612, %v613
        %v615 = vrot.slane %v403, 1
        %v616 = vrot.slane %v404, 1
        %v617 = vsel %vm427, %v615, %v616
        %v618 = vrot.slane %v405, 1
        %v619 = vrot.slane %v406, 1
        %v620 = vsel %vm427, %v618, %v619
        %v621 = vrot.slane %v391, 2
        %v622 = vrot.slane %v392, 2
        %v623 = vsel %vm452, %v621, %v622
        %v624 = vrot.slane %v393, 2
        %v625 = vrot.slane %v394, 2
        %v626 = vsel %vm452, %v624, %v625
        %v627 = vrot.slane %v395, 2
        %v628 = vrot.slane %v396, 2
        %v629 = vsel %vm452, %v627, %v628
        %v630 = vrot.slane %v397, 2
        %v631 = vrot.slane %v398, 2
        %v632 = vsel %vm452, %v630, %v631
        %v633 = vrot.slane %v399, 2
        %v634 = vrot.slane %v400, 2
        %v635 = vsel %vm452, %v633, %v634
        %v636 = vrot.slane %v401, 2
        %v637 = vrot.slane %v402, 2
        %v638 = vsel %vm452, %v636, %v637
        %v639 = vrot.slane %v403, 2
        %v640 = vrot.slane %v404, 2
        %v641 = vsel %vm452, %v639, %v640
        %v642 = vrot.slane %v405, 2
        %v643 = vrot.slane %v406, 2
        %v644 = vsel %vm452, %v642, %v643
        %v647 = vrot.slane %v407, 1
        %v648 = vrot.slane %v408, 1
        %v649 = vsel %vm427, %v647, %v648
        %v650 = vrot.slane %v407, 2
        %v651 = vrot.slane %v408, 2
        %v652 = vsel %vm452, %v650, %v651
        %v655 = vrot.slane %v409, 1
        %v656 = vrot.slane %v410, 1
        %v657 = vsel %vm427, %v655, %v656
        %v658 = vrot.slane %v409, 2
        %v659 = vrot.slane %v410, 2
        %v660 = vsel %vm452, %v658, %v659
        %661 = vrot.lane.b32.xlu0 %v430, 4
        %v662 = vpop.permute.xlu0 %661
        %663 = vrot.lane.b32.xlu0 %v433, 4
        %v664 = vpop.permute.xlu0 %663
        %665 = vrot.lane.b32.xlu0 %v436, 4
        %v666 = vpop.permute.xlu0 %665
        %667 = vrot.lane.b32.xlu0 %v439, 4
        %v668 = vpop.permute.xlu0 %667
        %669 = vrot.lane.b32.xlu0 %v442, 4
        %v670 = vpop.permute.xlu0 %669
        %671 = vrot.lane.b32.xlu0 %v445, 4
        %v672 = vpop.permute.xlu0 %671
        %673 = vrot.lane.b32.xlu0 %v448, 4
        %v674 = vpop.permute.xlu0 %673
        %675 = vrot.lane.b32.xlu0 %v451, 4
        %v676 = vpop.permute.xlu0 %675
        %685 = vrot.lane.b32.xlu0 %v455, 8
        %v686 = vpop.permute.xlu0 %685
        %687 = vrot.lane.b32.xlu0 %v458, 8
        %v688 = vpop.permute.xlu0 %687
        %689 = vrot.lane.b32.xlu0 %v461, 8
        %v690 = vpop.permute.xlu0 %689
        %691 = vrot.lane.b32.xlu0 %v464, 8
        %v692 = vpop.permute.xlu0 %691
        %693 = vrot.lane.b32.xlu0 %v467, 8
        %v694 = vpop.permute.xlu0 %693
        %695 = vrot.lane.b32.xlu0 %v470, 8
        %v696 = vpop.permute.xlu0 %695
        %697 = vrot.lane.b32.xlu0 %v473, 8
        %v698 = vpop.permute.xlu0 %697
        %699 = vrot.lane.b32.xlu0 %v476, 8
        %v700 = vpop.permute.xlu0 %699
        %709 = vrot.lane.b32.xlu0 %v347, 12
        %v710 = vpop.permute.xlu0 %709
        %711 = vrot.lane.b32.xlu0 %v349, 12
        %v712 = vpop.permute.xlu0 %711
        %713 = vrot.lane.b32.xlu0 %v351, 12
        %v714 = vpop.permute.xlu0 %713
        %715 = vrot.lane.b32.xlu0 %v353, 12
        %v716 = vpop.permute.xlu0 %715
        %717 = vrot.lane.b32.xlu0 %v355, 12
        %v718 = vpop.permute.xlu0 %717
        %719 = vrot.lane.b32.xlu0 %v357, 12
        %v720 = vpop.permute.xlu0 %719
        %721 = vrot.lane.b32.xlu0 %v359, 12
        %v722 = vpop.permute.xlu0 %721
        %723 = vrot.lane.b32.xlu0 %v361, 12
        %v724 = vpop.permute.xlu0 %723
        %733 = vrot.lane.b32.xlu0 %v433, 16
        %v734 = vpop.permute.xlu0 %733
        %735 = vrot.lane.b32.xlu0 %v436, 16
        %v736 = vpop.permute.xlu0 %735
        %737 = vrot.lane.b32.xlu0 %v439, 16
        %v738 = vpop.permute.xlu0 %737
        %739 = vrot.lane.b32.xlu0 %v442, 16
        %v740 = vpop.permute.xlu0 %739
        %741 = vrot.lane.b32.xlu0 %v445, 16
        %v742 = vpop.permute.xlu0 %741
        %743 = vrot.lane.b32.xlu0 %v448, 16
        %v744 = vpop.permute.xlu0 %743
        %745 = vrot.lane.b32.xlu0 %v451, 16
        %v746 = vpop.permute.xlu0 %745
        %747 = vrot.lane.b32.xlu0 %v481, 16
        %v748 = vpop.permute.xlu0 %747
        %757 = vrot.lane.b32.xlu0 %v458, 20
        %v758 = vpop.permute.xlu0 %757
        %759 = vrot.lane.b32.xlu0 %v461, 20
        %v760 = vpop.permute.xlu0 %759
        %761 = vrot.lane.b32.xlu0 %v464, 20
        %v762 = vpop.permute.xlu0 %761
        %763 = vrot.lane.b32.xlu0 %v467, 20
        %v764 = vpop.permute.xlu0 %763
        %765 = vrot.lane.b32.xlu0 %v470, 20
        %v766 = vpop.permute.xlu0 %765
        %767 = vrot.lane.b32.xlu0 %v473, 20
        %v768 = vpop.permute.xlu0 %767
        %769 = vrot.lane.b32.xlu0 %v476, 20
        %v770 = vpop.permute.xlu0 %769
        %771 = vrot.lane.b32.xlu0 %v484, 20
        %v772 = vpop.permute.xlu0 %771
        %781 = vrot.lane.b32.xlu0 %v349, 24
        %v782 = vpop.permute.xlu0 %781
        %783 = vrot.lane.b32.xlu0 %v351, 24
        %v784 = vpop.permute.xlu0 %783
        %785 = vrot.lane.b32.xlu0 %v353, 24
        %v786 = vpop.permute.xlu0 %785
        %787 = vrot.lane.b32.xlu0 %v355, 24
        %v788 = vpop.permute.xlu0 %787
        %789 = vrot.lane.b32.xlu0 %v357, 24
        %v790 = vpop.permute.xlu0 %789
        %791 = vrot.lane.b32.xlu0 %v359, 24
        %v792 = vpop.permute.xlu0 %791
        %793 = vrot.lane.b32.xlu0 %v361, 24
        %v794 = vpop.permute.xlu0 %793
        %795 = vrot.lane.b32.xlu0 %v363, 24
        %v796 = vpop.permute.xlu0 %795
        %805 = vrot.lane.b32.xlu0 %v436, 28
        %v806 = vpop.permute.xlu0 %805
        %807 = vrot.lane.b32.xlu0 %v439, 28
        %v808 = vpop.permute.xlu0 %807
        %809 = vrot.lane.b32.xlu0 %v442, 28
        %v810 = vpop.permute.xlu0 %809
        %811 = vrot.lane.b32.xlu0 %v445, 28
        %v812 = vpop.permute.xlu0 %811
        %813 = vrot.lane.b32.xlu0 %v448, 28
        %v814 = vpop.permute.xlu0 %813
        %815 = vrot.lane.b32.xlu0 %v451, 28
        %v816 = vpop.permute.xlu0 %815
        %817 = vrot.lane.b32.xlu0 %v481, 28
        %v818 = vpop.permute.xlu0 %817
        %819 = vrot.lane.b32.xlu0 %v489, 28
        %v820 = vpop.permute.xlu0 %819
        %829 = vrot.lane.b32.xlu0 %v461, 32
        %v830 = vpop.permute.xlu0 %829
        %831 = vrot.lane.b32.xlu0 %v464, 32
        %v832 = vpop.permute.xlu0 %831
        %833 = vrot.lane.b32.xlu0 %v467, 32
        %v834 = vpop.permute.xlu0 %833
        %835 = vrot.lane.b32.xlu0 %v470, 32
        %v836 = vpop.permute.xlu0 %835
        %837 = vrot.lane.b32.xlu0 %v473, 32
        %v838 = vpop.permute.xlu0 %837
        %839 = vrot.lane.b32.xlu0 %v476, 32
        %v840 = vpop.permute.xlu0 %839
        %841 = vrot.lane.b32.xlu0 %v484, 32
        %v842 = vpop.permute.xlu0 %841
        %843 = vrot.lane.b32.xlu0 %v492, 32
        %v844 = vpop.permute.xlu0 %843
        %853 = vrot.lane.b32.xlu0 %v368, 36
        %v854 = vpop.permute.xlu0 %853
        %855 = vrot.lane.b32.xlu0 %v370, 36
        %v856 = vpop.permute.xlu0 %855
        %857 = vrot.lane.b32.xlu0 %v372, 36
        %v858 = vpop.permute.xlu0 %857
        %859 = vrot.lane.b32.xlu0 %v374, 36
        %v860 = vpop.permute.xlu0 %859
        %861 = vrot.lane.b32.xlu0 %v376, 36
        %v862 = vpop.permute.xlu0 %861
        %863 = vrot.lane.b32.xlu0 %v378, 36
        %v864 = vpop.permute.xlu0 %863
        %865 = vrot.lane.b32.xlu0 %v380, 36
        %v866 = vpop.permute.xlu0 %865
        %867 = vrot.lane.b32.xlu0 %v382, 36
        %v868 = vpop.permute.xlu0 %867
        %877 = vrot.lane.b32.xlu0 %v511, 40
        %v878 = vpop.permute.xlu0 %877
        %879 = vrot.lane.b32.xlu0 %v514, 40
        %v880 = vpop.permute.xlu0 %879
        %881 = vrot.lane.b32.xlu0 %v517, 40
        %v882 = vpop.permute.xlu0 %881
        %883 = vrot.lane.b32.xlu0 %v520, 40
        %v884 = vpop.permute.xlu0 %883
        %885 = vrot.lane.b32.xlu0 %v523, 40
        %v886 = vpop.permute.xlu0 %885
        %887 = vrot.lane.b32.xlu0 %v526, 40
        %v888 = vpop.permute.xlu0 %887
        %889 = vrot.lane.b32.xlu0 %v529, 40
        %v890 = vpop.permute.xlu0 %889
        %891 = vrot.lane.b32.xlu0 %v532, 40
        %v892 = vpop.permute.xlu0 %891
        %901 = vrot.lane.b32.xlu0 %v535, 44
        %v902 = vpop.permute.xlu0 %901
        %903 = vrot.lane.b32.xlu0 %v538, 44
        %v904 = vpop.permute.xlu0 %903
        %905 = vrot.lane.b32.xlu0 %v541, 44
        %v906 = vpop.permute.xlu0 %905
        %907 = vrot.lane.b32.xlu0 %v544, 44
        %v908 = vpop.permute.xlu0 %907
        %909 = vrot.lane.b32.xlu0 %v547, 44
        %v910 = vpop.permute.xlu0 %909
        %911 = vrot.lane.b32.xlu0 %v550, 44
        %v912 = vpop.permute.xlu0 %911
        %913 = vrot.lane.b32.xlu0 %v553, 44
        %v914 = vpop.permute.xlu0 %913
        %915 = vrot.lane.b32.xlu0 %v556, 44
        %v916 = vpop.permute.xlu0 %915
        %925 = vrot.lane.b32.xlu0 %v370, 48
        %v926 = vpop.permute.xlu0 %925
        %927 = vrot.lane.b32.xlu0 %v372, 48
        %v928 = vpop.permute.xlu0 %927
        %929 = vrot.lane.b32.xlu0 %v374, 48
        %v930 = vpop.permute.xlu0 %929
        %931 = vrot.lane.b32.xlu0 %v376, 48
        %v932 = vpop.permute.xlu0 %931
        %933 = vrot.lane.b32.xlu0 %v378, 48
        %v934 = vpop.permute.xlu0 %933
        %935 = vrot.lane.b32.xlu0 %v380, 48
        %v936 = vpop.permute.xlu0 %935
        %937 = vrot.lane.b32.xlu0 %v382, 48
        %v938 = vpop.permute.xlu0 %937
        %939 = vrot.lane.b32.xlu0 %v384, 48
        %v940 = vpop.permute.xlu0 %939
        %949 = vrot.lane.b32.xlu0 %v514, 52
        %v950 = vpop.permute.xlu0 %949
        %951 = vrot.lane.b32.xlu0 %v517, 52
        %v952 = vpop.permute.xlu0 %951
        %953 = vrot.lane.b32.xlu0 %v520, 52
        %v954 = vpop.permute.xlu0 %953
        %955 = vrot.lane.b32.xlu0 %v523, 52
        %v956 = vpop.permute.xlu0 %955
        %957 = vrot.lane.b32.xlu0 %v526, 52
        %v958 = vpop.permute.xlu0 %957
        %959 = vrot.lane.b32.xlu0 %v529, 52
        %v960 = vpop.permute.xlu0 %959
        %961 = vrot.lane.b32.xlu0 %v532, 52
        %v962 = vpop.permute.xlu0 %961
        %963 = vrot.lane.b32.xlu0 %v561, 52
        %v964 = vpop.permute.xlu0 %963
        %973 = vrot.lane.b32.xlu0 %v538, 56
        %v974 = vpop.permute.xlu0 %973
        %975 = vrot.lane.b32.xlu0 %v541, 56
        %v976 = vpop.permute.xlu0 %975
        %977 = vrot.lane.b32.xlu0 %v544, 56
        %v978 = vpop.permute.xlu0 %977
        %979 = vrot.lane.b32.xlu0 %v547, 56
        %v980 = vpop.permute.xlu0 %979
        %981 = vrot.lane.b32.xlu0 %v550, 56
        %v982 = vpop.permute.xlu0 %981
        %983 = vrot.lane.b32.xlu0 %v553, 56
        %v984 = vpop.permute.xlu0 %983
        %985 = vrot.lane.b32.xlu0 %v556, 56
        %v986 = vpop.permute.xlu0 %985
        %987 = vrot.lane.b32.xlu0 %v564, 56
        %v988 = vpop.permute.xlu0 %987
        %997 = vrot.lane.b32.xlu0 %v372, 60
        %v998 = vpop.permute.xlu0 %997
        %999 = vrot.lane.b32.xlu0 %v374, 60
        %v1000 = vpop.permute.xlu0 %999
        %1001 = vrot.lane.b32.xlu0 %v376, 60
        %v1002 = vpop.permute.xlu0 %1001
        %1003 = vrot.lane.b32.xlu0 %v378, 60
        %v1004 = vpop.permute.xlu0 %1003
        %1005 = vrot.lane.b32.xlu0 %v380, 60
        %v1006 = vpop.permute.xlu0 %1005
        %1007 = vrot.lane.b32.xlu0 %v382, 60
        %v1008 = vpop.permute.xlu0 %1007
        %1009 = vrot.lane.b32.xlu0 %v384, 60
        %v1010 = vpop.permute.xlu0 %1009
        %1011 = vrot.lane.b32.xlu0 %v386, 60
        %v1012 = vpop.permute.xlu0 %1011
        %vm1021 = vcmask 31744
        %v1022 = vsel %vm1021, %v345, %v662
        %v1023 = vsel %vm1021, %v347, %v664
        %v1024 = vsel %vm1021, %v349, %v666
        %v1025 = vsel %vm1021, %v351, %v668
        %v1026 = vsel %vm1021, %v353, %v670
        %v1027 = vsel %vm1021, %v355, %v672
        %v1028 = vsel %vm1021, %v357, %v674
        %v1029 = vsel %vm1021, %v359, %v676
        %vm1030 = vcmask 64512
        %v1031 = vsel %vm1030, %v1022, %v686
        %v1032 = vsel %vm1030, %v1023, %v688
        %v1033 = vsel %vm1030, %v1024, %v690
        %v1034 = vsel %vm1030, %v1025, %v692
        %v1035 = vsel %vm1030, %v1026, %v694
        %v1036 = vsel %vm1030, %v1027, %v696
        %v1037 = vsel %vm1030, %v1028, %v698
        %v1038 = vsel %vm1030, %v1029, %v700
        %vm1039 = vcmask 97280
        %v1040 = vsel %vm1039, %v1031, %v710
        %v1041 = vsel %vm1039, %v1032, %v712
        %v1042 = vsel %vm1039, %v1033, %v714
        %v1043 = vsel %vm1039, %v1034, %v716
        %v1044 = vsel %vm1039, %v1035, %v718
        %v1045 = vsel %vm1039, %v1036, %v720
        %v1046 = vsel %vm1039, %v1037, %v722
        %v1047 = vsel %vm1039, %v1038, %v724
        %vm1048 = vcmask 130048
        %v1049 = vsel %vm1048, %v1040, %v734
        %v1050 = vsel %vm1048, %v1041, %v736
        %v1051 = vsel %vm1048, %v1042, %v738
        %v1052 = vsel %vm1048, %v1043, %v740
        %v1053 = vsel %vm1048, %v1044, %v742
        %v1054 = vsel %vm1048, %v1045, %v744
        %v1055 = vsel %vm1048, %v1046, %v746
        %v1056 = vsel %vm1048, %v1047, %v748
        %vm1057 = vcmask 162816
        %v1058 = vsel %vm1057, %v1049, %v758
        %v1059 = vsel %vm1057, %v1050, %v760
        %v1060 = vsel %vm1057, %v1051, %v762
        %v1061 = vsel %vm1057, %v1052, %v764
        %v1062 = vsel %vm1057, %v1053, %v766
        %v1063 = vsel %vm1057, %v1054, %v768
        %v1064 = vsel %vm1057, %v1055, %v770
        %v1065 = vsel %vm1057, %v1056, %v772
        %vm1066 = vcmask 195584
        %v1067 = vsel %vm1066, %v1058, %v782
        %v1068 = vsel %vm1066, %v1059, %v784
        %v1069 = vsel %vm1066, %v1060, %v786
        %v1070 = vsel %vm1066, %v1061, %v788
        %v1071 = vsel %vm1066, %v1062, %v790
        %v1072 = vsel %vm1066, %v1063, %v792
        %v1073 = vsel %vm1066, %v1064, %v794
        %v1074 = vsel %vm1066, %v1065, %v796
        %vm1075 = vcmask 228352
        %v1076 = vsel %vm1075, %v1067, %v806
        %v1077 = vsel %vm1075, %v1068, %v808
        %v1078 = vsel %vm1075, %v1069, %v810
        %v1079 = vsel %vm1075, %v1070, %v812
        %v1080 = vsel %vm1075, %v1071, %v814
        %v1081 = vsel %vm1075, %v1072, %v816
        %v1082 = vsel %vm1075, %v1073, %v818
        %v1083 = vsel %vm1075, %v1074, %v820
        %vm1084 = vcmask 261120
        %v1085 = vsel %vm1084, %v1076, %v830
        %v1086 = vsel %vm1084, %v1077, %v832
        %v1087 = vsel %vm1084, %v1078, %v834
        %v1088 = vsel %vm1084, %v1079, %v836
        %v1089 = vsel %vm1084, %v1080, %v838
        %v1090 = vsel %vm1084, %v1081, %v840
        %v1091 = vsel %vm1084, %v1082, %v842
        %v1092 = vsel %vm1084, %v1083, %v844
        %vm1093 = vcmask 293888
        %v1094 = vsel %vm1093, %v1085, %v854
        %v1095 = vsel %vm1093, %v1086, %v856
        %v1096 = vsel %vm1093, %v1087, %v858
        %v1097 = vsel %vm1093, %v1088, %v860
        %v1098 = vsel %vm1093, %v1089, %v862
        %v1099 = vsel %vm1093, %v1090, %v864
        %v1100 = vsel %vm1093, %v1091, %v866
        %v1101 = vsel %vm1093, %v1092, %v868
        %vm1102 = vcmask 326656
        %v1103 = vsel %vm1102, %v1094, %v878
        %v1104 = vsel %vm1102, %v1095, %v880
        %v1105 = vsel %vm1102, %v1096, %v882
        %v1106 = vsel %vm1102, %v1097, %v884
        %v1107 = vsel %vm1102, %v1098, %v886
        %v1108 = vsel %vm1102, %v1099, %v888
        %v1109 = vsel %vm1102, %v1100, %v890
        %v1110 = vsel %vm1102, %v1101, %v892
        %vm1111 = vcmask 359424
        %v1112 = vsel %vm1111, %v1103, %v902
        %v1113 = vsel %vm1111, %v1104, %v904
        %v1114 = vsel %vm1111, %v1105, %v906
        %v1115 = vsel %vm1111, %v1106, %v908
        %v1116 = vsel %vm1111, %v1107, %v910
        %v1117 = vsel %vm1111, %v1108, %v912
        %v1118 = vsel %vm1111, %v1109, %v914
        %v1119 = vsel %vm1111, %v1110, %v916
        %vm1120 = vcmask 392192
        %v1121 = vsel %vm1120, %v1112, %v926
        %v1122 = vsel %vm1120, %v1113, %v928
        %v1123 = vsel %vm1120, %v1114, %v930
        %v1124 = vsel %vm1120, %v1115, %v932
        %v1125 = vsel %vm1120, %v1116, %v934
        %v1126 = vsel %vm1120, %v1117, %v936
        %v1127 = vsel %vm1120, %v1118, %v938
        %v1128 = vsel %vm1120, %v1119, %v940
        %vm1129 = vcmask 424960
        %v1130 = vsel %vm1129, %v1121, %v950
        %v1131 = vsel %vm1129, %v1122, %v952
        %v1132 = vsel %vm1129, %v1123, %v954
        %v1133 = vsel %vm1129, %v1124, %v956
        %v1134 = vsel %vm1129, %v1125, %v958
        %v1135 = vsel %vm1129, %v1126, %v960
        %v1136 = vsel %vm1129, %v1127, %v962
        %v1137 = vsel %vm1129, %v1128, %v964
        %vm1138 = vcmask 457728
        %v1139 = vsel %vm1138, %v1130, %v974
        %v1140 = vsel %vm1138, %v1131, %v976
        %v1141 = vsel %vm1138, %v1132, %v978
        %v1142 = vsel %vm1138, %v1133, %v980
        %v1143 = vsel %vm1138, %v1134, %v982
        %v1144 = vsel %vm1138, %v1135, %v984
        %v1145 = vsel %vm1138, %v1136, %v986
        %v1146 = vsel %vm1138, %v1137, %v988
        %vm1147 = vcmask 490496
        %v1148 = vsel %vm1147, %v1139, %v998
        %v1149 = vsel %vm1147, %v1140, %v1000
        %v1150 = vsel %vm1147, %v1141, %v1002
        %v1151 = vsel %vm1147, %v1142, %v1004
        %v1152 = vsel %vm1147, %v1143, %v1006
        %v1153 = vsel %vm1147, %v1144, %v1008
        %v1154 = vsel %vm1147, %v1145, %v1010
        %v1155 = vsel %vm1147, %v1146, %v1012
        %1156 = vrot.lane.b32.xlu0 %v541, 4
        %v1157 = vpop.permute.xlu0 %1156
        %1158 = vrot.lane.b32.xlu0 %v544, 4
        %v1159 = vpop.permute.xlu0 %1158
        %1160 = vrot.lane.b32.xlu0 %v547, 4
        %v1161 = vpop.permute.xlu0 %1160
        %1162 = vrot.lane.b32.xlu0 %v550, 4
        %v1163 = vpop.permute.xlu0 %1162
        %1164 = vrot.lane.b32.xlu0 %v553, 4
        %v1165 = vpop.permute.xlu0 %1164
        %1166 = vrot.lane.b32.xlu0 %v556, 4
        %v1167 = vpop.permute.xlu0 %1166
        %1168 = vrot.lane.b32.xlu0 %v564, 4
        %v1169 = vpop.permute.xlu0 %1168
        %1170 = vrot.lane.b32.xlu0 %v580, 4
        %v1171 = vpop.permute.xlu0 %1170
        %1180 = vrot.lane.b32.xlu0 %v391, 8
        %v1181 = vpop.permute.xlu0 %1180
        %1182 = vrot.lane.b32.xlu0 %v393, 8
        %v1183 = vpop.permute.xlu0 %1182
        %1184 = vrot.lane.b32.xlu0 %v395, 8
        %v1185 = vpop.permute.xlu0 %1184
        %1186 = vrot.lane.b32.xlu0 %v397, 8
        %v1187 = vpop.permute.xlu0 %1186
        %1188 = vrot.lane.b32.xlu0 %v399, 8
        %v1189 = vpop.permute.xlu0 %1188
        %1190 = vrot.lane.b32.xlu0 %v401, 8
        %v1191 = vpop.permute.xlu0 %1190
        %1192 = vrot.lane.b32.xlu0 %v403, 8
        %v1193 = vpop.permute.xlu0 %1192
        %1194 = vrot.lane.b32.xlu0 %v405, 8
        %v1195 = vpop.permute.xlu0 %1194
        %1204 = vrot.lane.b32.xlu0 %v599, 12
        %v1205 = vpop.permute.xlu0 %1204
        %1206 = vrot.lane.b32.xlu0 %v602, 12
        %v1207 = vpop.permute.xlu0 %1206
        %1208 = vrot.lane.b32.xlu0 %v605, 12
        %v1209 = vpop.permute.xlu0 %1208
        %1210 = vrot.lane.b32.xlu0 %v608, 12
        %v1211 = vpop.permute.xlu0 %1210
        %1212 = vrot.lane.b32.xlu0 %v611, 12
        %v1213 = vpop.permute.xlu0 %1212
        %1214 = vrot.lane.b32.xlu0 %v614, 12
        %v1215 = vpop.permute.xlu0 %1214
        %1216 = vrot.lane.b32.xlu0 %v617, 12
        %v1217 = vpop.permute.xlu0 %1216
        %1218 = vrot.lane.b32.xlu0 %v620, 12
        %v1219 = vpop.permute.xlu0 %1218
        %1228 = vrot.lane.b32.xlu0 %v623, 16
        %v1229 = vpop.permute.xlu0 %1228
        %1230 = vrot.lane.b32.xlu0 %v626, 16
        %v1231 = vpop.permute.xlu0 %1230
        %1232 = vrot.lane.b32.xlu0 %v629, 16
        %v1233 = vpop.permute.xlu0 %1232
        %1234 = vrot.lane.b32.xlu0 %v632, 16
        %v1235 = vpop.permute.xlu0 %1234
        %1236 = vrot.lane.b32.xlu0 %v635, 16
        %v1237 = vpop.permute.xlu0 %1236
        %1238 = vrot.lane.b32.xlu0 %v638, 16
        %v1239 = vpop.permute.xlu0 %1238
        %1240 = vrot.lane.b32.xlu0 %v641, 16
        %v1241 = vpop.permute.xlu0 %1240
        %1242 = vrot.lane.b32.xlu0 %v644, 16
        %v1243 = vpop.permute.xlu0 %1242
        %1252 = vrot.lane.b32.xlu0 %v393, 20
        %v1253 = vpop.permute.xlu0 %1252
        %1254 = vrot.lane.b32.xlu0 %v395, 20
        %v1255 = vpop.permute.xlu0 %1254
        %1256 = vrot.lane.b32.xlu0 %v397, 20
        %v1257 = vpop.permute.xlu0 %1256
        %1258 = vrot.lane.b32.xlu0 %v399, 20
        %v1259 = vpop.permute.xlu0 %1258
        %1260 = vrot.lane.b32.xlu0 %v401, 20
        %v1261 = vpop.permute.xlu0 %1260
        %1262 = vrot.lane.b32.xlu0 %v403, 20
        %v1263 = vpop.permute.xlu0 %1262
        %1264 = vrot.lane.b32.xlu0 %v405, 20
        %v1265 = vpop.permute.xlu0 %1264
        %1266 = vrot.lane.b32.xlu0 %v407, 20
        %v1267 = vpop.permute.xlu0 %1266
        %1276 = vrot.lane.b32.xlu0 %v602, 24
        %v1277 = vpop.permute.xlu0 %1276
        %1278 = vrot.lane.b32.xlu0 %v605, 24
        %v1279 = vpop.permute.xlu0 %1278
        %1280 = vrot.lane.b32.xlu0 %v608, 24
        %v1281 = vpop.permute.xlu0 %1280
        %1282 = vrot.lane.b32.xlu0 %v611, 24
        %v1283 = vpop.permute.xlu0 %1282
        %1284 = vrot.lane.b32.xlu0 %v614, 24
        %v1285 = vpop.permute.xlu0 %1284
        %1286 = vrot.lane.b32.xlu0 %v617, 24
        %v1287 = vpop.permute.xlu0 %1286
        %1288 = vrot.lane.b32.xlu0 %v620, 24
        %v1289 = vpop.permute.xlu0 %1288
        %1290 = vrot.lane.b32.xlu0 %v649, 24
        %v1291 = vpop.permute.xlu0 %1290
        %1300 = vrot.lane.b32.xlu0 %v626, 28
        %v1301 = vpop.permute.xlu0 %1300
        %1302 = vrot.lane.b32.xlu0 %v629, 28
        %v1303 = vpop.permute.xlu0 %1302
        %1304 = vrot.lane.b32.xlu0 %v632, 28
        %v1305 = vpop.permute.xlu0 %1304
        %1306 = vrot.lane.b32.xlu0 %v635, 28
        %v1307 = vpop.permute.xlu0 %1306
        %1308 = vrot.lane.b32.xlu0 %v638, 28
        %v1309 = vpop.permute.xlu0 %1308
        %1310 = vrot.lane.b32.xlu0 %v641, 28
        %v1311 = vpop.permute.xlu0 %1310
        %1312 = vrot.lane.b32.xlu0 %v644, 28
        %v1313 = vpop.permute.xlu0 %1312
        %1314 = vrot.lane.b32.xlu0 %v652, 28
        %v1315 = vpop.permute.xlu0 %1314
        %1324 = vrot.lane.b32.xlu0 %v395, 32
        %v1325 = vpop.permute.xlu0 %1324
        %1326 = vrot.lane.b32.xlu0 %v397, 32
        %v1327 = vpop.permute.xlu0 %1326
        %1328 = vrot.lane.b32.xlu0 %v399, 32
        %v1329 = vpop.permute.xlu0 %1328
        %1330 = vrot.lane.b32.xlu0 %v401, 32
        %v1331 = vpop.permute.xlu0 %1330
        %1332 = vrot.lane.b32.xlu0 %v403, 32
        %v1333 = vpop.permute.xlu0 %1332
        %1334 = vrot.lane.b32.xlu0 %v405, 32
        %v1335 = vpop.permute.xlu0 %1334
        %1336 = vrot.lane.b32.xlu0 %v407, 32
        %v1337 = vpop.permute.xlu0 %1336
        %1338 = vrot.lane.b32.xlu0 %v409, 32
        %v1339 = vpop.permute.xlu0 %1338
        %1348 = vrot.lane.b32.xlu0 %v605, 36
        %v1349 = vpop.permute.xlu0 %1348
        %1350 = vrot.lane.b32.xlu0 %v608, 36
        %v1351 = vpop.permute.xlu0 %1350
        %1352 = vrot.lane.b32.xlu0 %v611, 36
        %v1353 = vpop.permute.xlu0 %1352
        %1354 = vrot.lane.b32.xlu0 %v614, 36
        %v1355 = vpop.permute.xlu0 %1354
        %1356 = vrot.lane.b32.xlu0 %v617, 36
        %v1357 = vpop.permute.xlu0 %1356
        %1358 = vrot.lane.b32.xlu0 %v620, 36
        %v1359 = vpop.permute.xlu0 %1358
        %1360 = vrot.lane.b32.xlu0 %v649, 36
        %v1361 = vpop.permute.xlu0 %1360
        %1362 = vrot.lane.b32.xlu0 %v657, 36
        %v1363 = vpop.permute.xlu0 %1362
        %1372 = vrot.lane.b32.xlu0 %v629, 40
        %v1373 = vpop.permute.xlu0 %1372
        %1374 = vrot.lane.b32.xlu0 %v632, 40
        %v1375 = vpop.permute.xlu0 %1374
        %1376 = vrot.lane.b32.xlu0 %v635, 40
        %v1377 = vpop.permute.xlu0 %1376
        %1378 = vrot.lane.b32.xlu0 %v638, 40
        %v1379 = vpop.permute.xlu0 %1378
        %1380 = vrot.lane.b32.xlu0 %v641, 40
        %v1381 = vpop.permute.xlu0 %1380
        %1382 = vrot.lane.b32.xlu0 %v644, 40
        %v1383 = vpop.permute.xlu0 %1382
        %1384 = vrot.lane.b32.xlu0 %v652, 40
        %v1385 = vpop.permute.xlu0 %1384
        %1386 = vrot.lane.b32.xlu0 %v660, 40
        %v1387 = vpop.permute.xlu0 %1386
        %v1396 = vsel %vm1021, %v517, %v1157
        %v1397 = vsel %vm1021, %v520, %v1159
        %v1398 = vsel %vm1021, %v523, %v1161
        %v1399 = vsel %vm1021, %v526, %v1163
        %v1400 = vsel %vm1021, %v529, %v1165
        %v1401 = vsel %vm1021, %v532, %v1167
        %v1402 = vsel %vm1021, %v561, %v1169
        %v1403 = vsel %vm1021, %v569, %v1171
        %v1404 = vsel %vm1030, %v1396, %v1181
        %v1405 = vsel %vm1030, %v1397, %v1183
        %v1406 = vsel %vm1030, %v1398, %v1185
        %v1407 = vsel %vm1030, %v1399, %v1187
        %v1408 = vsel %vm1030, %v1400, %v1189
        %v1409 = vsel %vm1030, %v1401, %v1191
        %v1410 = vsel %vm1030, %v1402, %v1193
        %v1411 = vsel %vm1030, %v1403, %v1195
        %v1412 = vsel %vm1039, %v1404, %v1205
        %v1413 = vsel %vm1039, %v1405, %v1207
        %v1414 = vsel %vm1039, %v1406, %v1209
        %v1415 = vsel %vm1039, %v1407, %v1211
        %v1416 = vsel %vm1039, %v1408, %v1213
        %v1417 = vsel %vm1039, %v1409, %v1215
        %v1418 = vsel %vm1039, %v1410, %v1217
        %v1419 = vsel %vm1039, %v1411, %v1219
        %v1420 = vsel %vm1048, %v1412, %v1229
        %v1421 = vsel %vm1048, %v1413, %v1231
        %v1422 = vsel %vm1048, %v1414, %v1233
        %v1423 = vsel %vm1048, %v1415, %v1235
        %v1424 = vsel %vm1048, %v1416, %v1237
        %v1425 = vsel %vm1048, %v1417, %v1239
        %v1426 = vsel %vm1048, %v1418, %v1241
        %v1427 = vsel %vm1048, %v1419, %v1243
        %v1428 = vsel %vm1057, %v1420, %v1253
        %v1429 = vsel %vm1057, %v1421, %v1255
        %v1430 = vsel %vm1057, %v1422, %v1257
        %v1431 = vsel %vm1057, %v1423, %v1259
        %v1432 = vsel %vm1057, %v1424, %v1261
        %v1433 = vsel %vm1057, %v1425, %v1263
        %v1434 = vsel %vm1057, %v1426, %v1265
        %v1435 = vsel %vm1057, %v1427, %v1267
        %v1436 = vsel %vm1066, %v1428, %v1277
        %v1437 = vsel %vm1066, %v1429, %v1279
        %v1438 = vsel %vm1066, %v1430, %v1281
        %v1439 = vsel %vm1066, %v1431, %v1283
        %v1440 = vsel %vm1066, %v1432, %v1285
        %v1441 = vsel %vm1066, %v1433, %v1287
        %v1442 = vsel %vm1066, %v1434, %v1289
        %v1443 = vsel %vm1066, %v1435, %v1291
        %v1444 = vsel %vm1075, %v1436, %v1301
        %v1445 = vsel %vm1075, %v1437, %v1303
        %v1446 = vsel %vm1075, %v1438, %v1305
        %v1447 = vsel %vm1075, %v1439, %v1307
        %v1448 = vsel %vm1075, %v1440, %v1309
        %v1449 = vsel %vm1075, %v1441, %v1311
        %v1450 = vsel %vm1075, %v1442, %v1313
        %v1451 = vsel %vm1075, %v1443, %v1315
        %v1452 = vsel %vm1084, %v1444, %v1325
        %v1453 = vsel %vm1084, %v1445, %v1327
        %v1454 = vsel %vm1084, %v1446, %v1329
        %v1455 = vsel %vm1084, %v1447, %v1331
        %v1456 = vsel %vm1084, %v1448, %v1333
        %v1457 = vsel %vm1084, %v1449, %v1335
        %v1458 = vsel %vm1084, %v1450, %v1337
        %v1459 = vsel %vm1084, %v1451, %v1339
        %v1460 = vsel %vm1093, %v1452, %v1349
        %v1461 = vsel %vm1093, %v1453, %v1351
        %v1462 = vsel %vm1093, %v1454, %v1353
        %v1463 = vsel %vm1093, %v1455, %v1355
        %v1464 = vsel %vm1093, %v1456, %v1357
        %v1465 = vsel %vm1093, %v1457, %v1359
        %v1466 = vsel %vm1093, %v1458, %v1361
        %v1467 = vsel %vm1093, %v1459, %v1363
        %v1468 = vsel %vm1102, %v1460, %v1373
        %v1469 = vsel %vm1102, %v1461, %v1375
        %v1470 = vsel %vm1102, %v1462, %v1377
        %v1471 = vsel %vm1102, %v1463, %v1379
        %v1472 = vsel %vm1102, %v1464, %v1381
        %v1473 = vsel %vm1102, %v1465, %v1383
        %v1474 = vsel %vm1102, %v1466, %v1385
        %v1475 = vsel %vm1102, %v1467, %v1387
        %1484 = vrot.lane.b32.xlu0 %v1468, 64
        %v1485 = vpop.permute.xlu0 %1484
        %1486 = vrot.lane.b32.xlu0 %v1469, 64
        %v1487 = vpop.permute.xlu0 %1486
        %1488 = vrot.lane.b32.xlu0 %v1470, 64
        %v1489 = vpop.permute.xlu0 %1488
        %1490 = vrot.lane.b32.xlu0 %v1471, 64
        %v1491 = vpop.permute.xlu0 %1490
        %1492 = vrot.lane.b32.xlu0 %v1472, 64
        %v1493 = vpop.permute.xlu0 %1492
        %1494 = vrot.lane.b32.xlu0 %v1473, 64
        %v1495 = vpop.permute.xlu0 %1494
        %1496 = vrot.lane.b32.xlu0 %v1474, 64
        %v1497 = vpop.permute.xlu0 %1496
        %1498 = vrot.lane.b32.xlu0 %v1475, 64
        %v1499 = vpop.permute.xlu0 %1498
        %vm1508 = vcmask 523264
        %v1509 = vsel %vm1508, %v1148, %v1485
        %v1510 = vsel %vm1508, %v1149, %v1487
        %v1511 = vsel %vm1508, %v1150, %v1489
        %v1512 = vsel %vm1508, %v1151, %v1491
        %v1513 = vsel %vm1508, %v1152, %v1493
        %v1514 = vsel %vm1508, %v1153, %v1495
        %v1515 = vsel %vm1508, %v1154, %v1497
        %v1516 = vsel %vm1508, %v1155, %v1499
        %vm1517 = vcmask 883712
        %v1519 = vsel %vm1517, %v1509, 0
        %v1522 = vsel %vm1517, %v1510, 0
        %v1525 = vsel %vm1517, %v1511, 0
        %v1528 = vsel %vm1517, %v1512, 0
        %v1531 = vsel %vm1517, %v1513, 0
        %v1534 = vsel %vm1517, %v1514, 0
        %v1537 = vsel %vm1517, %v1515, 0
        %v1540 = vsel %vm1517, %v1516, 0
        %vm1542 = vcmask 1043456
        %v1544 = vsel %vm1542, %v305, 0
        %1546 = vmatprep.subr.mxu0 0.0
        %1547 = vmatpush1.msra.mxu0 %v292
        %1548 = vmatprep.subr.mxu0 0.0
        %1549 = vmatpush1.msra.mxu0 %v293
        %1550 = vmatprep.subr.mxu0 0.0
        %1551 = vmatpush1.msra.mxu0 %v294
        %1552 = vmatprep.subr.mxu0 0.0
        %1553 = vmatpush1.msra.mxu0 %v295
        %1554 = vmatprep.subr.mxu0 0.0
        %1555 = vmatpush1.msra.mxu0 %v296
        %1556 = vmatprep.subr.mxu0 0.0
        %1557 = vmatpush1.msra.mxu0 %v297
        %1558 = vmatprep.subr.mxu0 0.0
        %1559 = vmatpush1.msra.mxu0 %v298
        %1560 = vmatprep.subr.mxu0 0.0
        %1561 = vmatpush1.msra.mxu0 %v299
        %1562 = vmatprep.subr.mxu0 0.0
        %1563 = vmatpush1.msra.mxu0 %v300
        %1564 = vmatprep.subr.mxu0 0.0
        %1565 = vmatpush1.msra.mxu0 %v301
        %1566 = vmatprep.subr.mxu0 0.0
        %1567 = vmatpush1.msra.mxu0 %v302
        %1568 = vmatprep.subr.mxu0 0.0
        %1569 = vmatpush1.msra.mxu0 %v303
        %1570 = vmatprep.subr.mxu0 0.0
        %1571 = vmatpush1.msra.mxu0 %v304
        %1572 = vmatprep.subr.mxu0 0.0
        %1573 = vmatpush1.msra.mxu0 %v1544
        %1574 = vmatprep.subr.mxu0 0.0
        %1575 = vmatpush1.msra.mxu0 0.0
        %1576 = vmatprep.subr.mxu0 0.0
        %1577 = vmatpush1.msra.mxu0 0.0
        %1578 = vmatprep.subr.mxu0 0.0
        %1579 = vmatpush1.msra.mxu0 0.0
        %1580 = vmatprep.subr.mxu0 0.0
        %1581 = vmatpush1.msra.mxu0 0.0
        %1582 = vmatprep.subr.mxu0 0.0
        %1583 = vmatpush1.msra.mxu0 0.0
        %1584 = vmatprep.subr.mxu0 0.0
        %1585 = vmatpush1.msra.mxu0 0.0
        %1586 = vmatprep.subr.mxu0 0.0
        %1587 = vmatpush1.msra.mxu0 0.0
        %1588 = vmatprep.subr.mxu0 0.0
        %1589 = vmatpush1.msra.mxu0 0.0
        %1590 = vmatprep.subr.mxu0 0.0
        %1591 = vmatpush1.msra.mxu0 0.0
        %1592 = vmatprep.subr.mxu0 0.0
        %1593 = vmatpush1.msra.mxu0 0.0
        %1594 = vmatprep.subr.mxu0 0.0
        %1595 = vmatpush1.msra.mxu0 0.0
        %1596 = vmatprep.subr.mxu0 0.0
        %1597 = vmatpush1.msra.mxu0 0.0
        %1598 = vmatprep.subr.mxu0 0.0
        %1599 = vmatpush1.msra.mxu0 0.0
        %1600 = vmatprep.subr.mxu0 0.0
        %1601 = vmatpush1.msra.mxu0 0.0
        %1602 = vmatprep.subr.mxu0 0.0
        %1603 = vmatpush1.msra.mxu0 0.0
        %1604 = vmatprep.subr.mxu0 0.0
        %1605 = vmatpush1.msra.mxu0 0.0
        %1606 = vmatprep.subr.mxu0 0.0
        %1607 = vmatpush1.msra.mxu0 0.0
        %1608 = vmatprep.subr.mxu0 0.0
        %1609 = vmatpush1.msra.mxu0 0.0
        %1610 = vmatprep.mubr.f32.mxu0 0.0
        %1611 = vmatmul.mubr.f32.gmra.mrb[0].mxu0 %v1519
        %v1612 = vpop.f32.mrb[0].mxu0
        %v1613 = vadd.f32 0.0, %v1612
        %v1614 = vpop.f32.mrb[0].mxu0
        %1615 = vmatprep.mubr.f32.mxu0 0.0
        %1616 = vmatmul.mubr.f32.gmra.mrb[0].mxu0 %v1522
        %v1617 = vpop.f32.mrb[0].mxu0
        %v1618 = vadd.f32 0.0, %v1617
        %v1619 = vpop.f32.mrb[0].mxu0
        %1620 = vmatprep.mubr.f32.mxu0 0.0
        %1621 = vmatmul.mubr.f32.gmra.mrb[0].mxu0 %v1525
        %v1622 = vpop.f32.mrb[0].mxu0
        %v1623 = vadd.f32 0.0, %v1622
        %v1624 = vpop.f32.mrb[0].mxu0
        %1625 = vmatprep.mubr.f32.mxu0 0.0
        %1626 = vmatmul.mubr.f32.gmra.mrb[0].mxu0 %v1528
        %v1627 = vpop.f32.mrb[0].mxu0
        %v1628 = vadd.f32 0.0, %v1627
        %v1629 = vpop.f32.mrb[0].mxu0
        %1630 = vmatprep.mubr.f32.mxu0 0.0
        %1631 = vmatmul.mubr.f32.gmra.mrb[0].mxu0 %v1531
        %v1632 = vpop.f32.mrb[0].mxu0
        %v1633 = vadd.f32 0.0, %v1632
        %v1634 = vpop.f32.mrb[0].mxu0
        %1635 = vmatprep.mubr.f32.mxu0 0.0
        %1636 = vmatmul.mubr.f32.gmra.mrb[0].mxu0 %v1534
        %v1637 = vpop.f32.mrb[0].mxu0
        %v1638 = vadd.f32 0.0, %v1637
        %v1639 = vpop.f32.mrb[0].mxu0
        %1640 = vmatprep.mubr.f32.mxu0 0.0
        %1641 = vmatmul.mubr.f32.gmra.mrb[0].mxu0 %v1537
        %v1642 = vpop.f32.mrb[0].mxu0
        %v1643 = vadd.f32 0.0, %v1642
        %v1644 = vpop.f32.mrb[0].mxu0
        %1645 = vmatprep.mubr.f32.mxu0 0.0
        %1646 = vmatmul.mubr.f32.gmra.mrb[0].mxu0 %v1540
        %v1647 = vpop.f32.mrb[0].mxu0
        %v1648 = vadd.f32 0.0, %v1647
        %v1649 = vpop.f32.mrb[0].mxu0
        %1650 = vdwg.mxu0
        %v1652 = vlaneseq
        %v1653 = vshrl.u32 %v1652, 7
        %v1654 = vsub.s32 0, %v1653
        %v1655 = vrot.slane %v306, %v1654
        %v1657 = vmul.f32 %v1613, %v1655
        %v1658 = vmul.f32 %v1618, %v1655
        %v1659 = vmul.f32 %v1623, %v1655
        %v1660 = vmul.f32 %v1628, %v1655
        %v1661 = vmul.f32 %v1633, %v1655
        %v1662 = vmul.f32 %v1638, %v1655
        %v1663 = vmul.f32 %v1643, %v1655
        %v1664 = vmul.f32 %v1648, %v1655
        %v1666 = vlaneseq
        %v1667 = vshrl.u32 %v1666, 7
        %v1668 = vsub.s32 0, %v1667
        %v1669 = vrot.slane %v307, %v1668
        %v1671 = vadd.f32 %v1657, %v1669
        %v1672 = vadd.f32 %v1658, %v1669
        %v1673 = vadd.f32 %v1659, %v1669
        %v1674 = vadd.f32 %v1660, %v1669
        %v1675 = vadd.f32 %v1661, %v1669
        %v1676 = vadd.f32 %v1662, %v1669
        %v1677 = vadd.f32 %v1663, %v1669
        %v1678 = vadd.f32 %v1664, %v1669
        %v1679 = vmax.f32 %v1671, 0.0
        %v1680 = vmax.f32 %v1672, 0.0
        %v1681 = vmax.f32 %v1673, 0.0
        %v1682 = vmax.f32 %v1674, 0.0
        %v1683 = vmax.f32 %v1675, 0.0
        %v1684 = vmax.f32 %v1676, 0.0
        %v1685 = vmax.f32 %v1677, 0.0
        %v1686 = vmax.f32 %v1678, 0.0
        %s1687 = ssub.s32 %s291, 1
        %s1688 = sadd.s32 %s1687, %s338
        %p1689 = scmp.ge.s32.totalorder %s1688, 0
        %p1690 = scmp.lt.s32.totalorder %s1688, 4
        %p1691 = pnand %p1689, %p1690
        %p1692 = pneg %p1691
        %s1693 = scalar_select %p1692, 1, 0
        %v1694 = vstv %s1693
        %vm1695 = vcmp.eq.s32.totalorder %v1694, 1
        %v1696 = vsel %vm1695, %v1679, 0.0
        %v1697 = vsel %vm1695, %v1680, 0.0
        %v1698 = vsel %vm1695, %v1681, 0.0
        %v1699 = vsel %vm1695, %v1682, 0.0
        %v1700 = vsel %vm1695, %v1683, 0.0
        %v1701 = vsel %vm1695, %v1684, 0.0
        %v1702 = vsel %vm1695, %v1685, 0.0
        %v1703 = vsel %vm1695, %v1686, 0.0
        %v1712 = vrot.slane %v1696, 7
        %v1713 = vrot.slane %v1697, 7
        %v1714 = vrot.slane %v1698, 7
        %v1715 = vrot.slane %v1699, 7
        %v1716 = vrot.slane %v1700, 7
        %v1717 = vrot.slane %v1701, 7
        %v1718 = vrot.slane %v1702, 7
        %v1719 = vrot.slane %v1703, 7
        %vm1728 = vcmask 1040384
        %v1729 = vsel %vm1728, 0.0, %v1712
        %v1730 = vsel %vm1728, 0.0, %v1713
        %v1731 = vsel %vm1728, 0.0, %v1714
        %v1732 = vsel %vm1728, 0.0, %v1715
        %v1733 = vsel %vm1728, 0.0, %v1716
        %v1734 = vsel %vm1728, 0.0, %v1717
        %v1735 = vsel %vm1728, 0.0, %v1718
        %v1736 = vsel %vm1728, 0.0, %v1719
        %v1737 = vsel %vm1728, %v1712, 0.0
        %v1738 = vsel %vm1728, %v1713, 0.0
        %v1739 = vsel %vm1728, %v1714, 0.0
        %v1740 = vsel %vm1728, %v1715, 0.0
        %v1741 = vsel %vm1728, %v1716, 0.0
        %v1742 = vsel %vm1728, %v1717, 0.0
        %v1743 = vsel %vm1728, %v1718, 0.0
        %v1744 = vsel %vm1728, %v1719, 0.0
        %s1745 = scalar_lea.vmem [#allocation2], %s343
        %1746 = vst.msk [vmem:[%s1745] sm:$0xff] %vm1030, 0.0
        %vm1747 = vcmask 58368
        %1748 = vst.msk [vmem:[%s1745 + $0x8] sm:$0x3] %vm1747, 0.0
        %1749 = vst.msk [vmem:[%s1745 + $0x10] sm:$0xff] %vm1030, %v1729
        %1750 = vst.msk [vmem:[%s1745 + $0x18] sm:$0x3] %vm1747, %v1737
        %1751 = vst.msk [vmem:[%s1745 + $0x20] sm:$0xff] %vm1030, %v1730
        %1752 = vst.msk [vmem:[%s1745 + $0x28] sm:$0x3] %vm1747, %v1738
        %1753 = vst.msk [vmem:[%s1745 + $0x30] sm:$0xff] %vm1030, %v1731
        %1754 = vst.msk [vmem:[%s1745 + $0x38] sm:$0x3] %vm1747, %v1739
        %1755 = vst.msk [vmem:[%s1745 + $0x40] sm:$0xff] %vm1030, %v1732
        %1756 = vst.msk [vmem:[%s1745 + $0x48] sm:$0x3] %vm1747, %v1740
        %1757 = vst.msk [vmem:[%s1745 + $0x50] sm:$0xff] %vm1030, %v1733
        %1758 = vst.msk [vmem:[%s1745 + $0x58] sm:$0x3] %vm1747, %v1741
        %1759 = vst.msk [vmem:[%s1745 + $0x60] sm:$0xff] %vm1030, %v1734
        %1760 = vst.msk [vmem:[%s1745 + $0x68] sm:$0x3] %vm1747, %v1742
        %1761 = vst.msk [vmem:[%s1745 + $0x70] sm:$0xff] %vm1030, %v1735
        %1762 = vst.msk [vmem:[%s1745 + $0x78] sm:$0x3] %vm1747, %v1743
        %1763 = vst.msk [vmem:[%s1745 + $0x80] sm:$0xff] %vm1030, %v1736
        %1764 = vst.msk [vmem:[%s1745 + $0x88] sm:$0x3] %vm1747, %v1744
        %1765 = vst.msk [vmem:[%s1745 + $0x90] sm:$0xff] %vm1030, 0.0
        %1766 = vst.msk [vmem:[%s1745 + $0x98] sm:$0x3] %vm1747, 0.0
        %1775 = vrot.lane.b32.xlu0 %v1671, 120
        %v1776 = vpop.permute.xlu0 %1775
        %1777 = vrot.lane.b32.xlu0 %v1672, 120
        %v1778 = vpop.permute.xlu0 %1777
        %1779 = vrot.lane.b32.xlu0 %v1673, 120
        %v1780 = vpop.permute.xlu0 %1779
        %1781 = vrot.lane.b32.xlu0 %v1674, 120
        %v1782 = vpop.permute.xlu0 %1781
        %1783 = vrot.lane.b32.xlu0 %v1675, 120
        %v1784 = vpop.permute.xlu0 %1783
        %1785 = vrot.lane.b32.xlu0 %v1676, 120
        %v1786 = vpop.permute.xlu0 %1785
        %1787 = vrot.lane.b32.xlu0 %v1677, 120
        %v1788 = vpop.permute.xlu0 %1787
        %1789 = vrot.lane.b32.xlu0 %v1678, 120
        %v1790 = vpop.permute.xlu0 %1789
        %s1799 = smul.u32 %s338, 64
        %s1800 = scalar_lea.vmem [#allocation3], %s1799
        %1801 = vst.msk [vmem:[%s1800] sm:$0xff] %vm1021, %v1776
        %1802 = vst.msk [vmem:[%s1800 + $0x8] sm:$0xff] %vm1021, %v1778
        %1803 = vst.msk [vmem:[%s1800 + $0x10] sm:$0xff] %vm1021, %v1780
        %1804 = vst.msk [vmem:[%s1800 + $0x18] sm:$0xff] %vm1021, %v1782
        %1805 = vst.msk [vmem:[%s1800 + $0x20] sm:$0xff] %vm1021, %v1784
        %1806 = vst.msk [vmem:[%s1800 + $0x28] sm:$0xff] %vm1021, %v1786
        %1807 = vst.msk [vmem:[%s1800 + $0x30] sm:$0xff] %vm1021, %v1788
        %1808 = vst.msk [vmem:[%s1800 + $0x38] sm:$0xff] %vm1021, %v1790
      $region53: #{basic_layers_forward.1} parent=47 // loop_footer
        %s342 = sadd.s32 1, %s338
      $region54: #{basic_layers_forward.1} parent=47 // loop_footer_branch
        %337 = sbr.rel target = $region50
      $region55: #{basic_layers_forward.1} parent=47 // loop_exit
        _
      loop: start=0, step=1, limit=2
      $region56: #{basic_layers_forward.1} parent=47 // loop_pre_header
        _
      $region57: #{basic_layers_forward.1} parent=47 // loop_header
        %s1810 = sphi 0, %s1814
        %p1811 = scmp.ge.s32.totalorder %s1810, 2
      $region58: #{basic_layers_forward.1} parent=47 // loop_header_branch
        %1813 = sbr.rel (%p1811) target = $region62
      $region59: #{basic_layers_forward.1} parent=47 // loop_body
        %s1815 = smul.u32 %s1810, 160
        %s1816 = scalar_lea.vmem [#allocation2], %s1815
        %v1817 = vld [vmem:[%s1816] sm:$0xff]
        %v1818 = vld [vmem:[%s1816 + $0x8] sm:$0x3]
        %v1819 = vld [vmem:[%s1816 + $0x10] sm:$0xff]
        %v1820 = vld [vmem:[%s1816 + $0x18] sm:$0x3]
        %v1821 = vld [vmem:[%s1816 + $0x20] sm:$0xff]
        %v1822 = vld [vmem:[%s1816 + $0x28] sm:$0x3]
        %v1823 = vld [vmem:[%s1816 + $0x30] sm:$0xff]
        %v1824 = vld [vmem:[%s1816 + $0x38] sm:$0x3]
        %v1825 = vld [vmem:[%s1816 + $0x40] sm:$0xff]
        %v1826 = vld [vmem:[%s1816 + $0x48] sm:$0x3]
        %v1827 = vld [vmem:[%s1816 + $0x50] sm:$0xff]
        %v1828 = vld [vmem:[%s1816 + $0x58] sm:$0x3]
        %v1829 = vld [vmem:[%s1816 + $0x60] sm:$0xff]
        %v1830 = vld [vmem:[%s1816 + $0x68] sm:$0x3]
        %v1831 = vld [vmem:[%s1816 + $0x70] sm:$0xff]
        %v1832 = vld [vmem:[%s1816 + $0x78] sm:$0x3]
        %v1833 = vld [vmem:[%s1816 + $0x80] sm:$0xff]
        %v1834 = vld [vmem:[%s1816 + $0x88] sm:$0x3]
        %v1835 = vld [vmem:[%s1816 + $0x90] sm:$0xff]
        %v1836 = vld [vmem:[%s1816 + $0x98] sm:$0x3]
        %s1837 = sadd.s32 %s1810, 1
        %s1838 = smul.u32 %s1837, 160
        %s1839 = scalar_lea.vmem [#allocation2], %s1838
        %v1840 = vld [vmem:[%s1839] sm:$0xff]
        %v1841 = vld [vmem:[%s1839 + $0x8] sm:$0x3]
        %v1842 = vld [vmem:[%s1839 + $0x10] sm:$0xff]
        %v1843 = vld [vmem:[%s1839 + $0x18] sm:$0x3]
        %v1844 = vld [vmem:[%s1839 + $0x20] sm:$0xff]
        %v1845 = vld [vmem:[%s1839 + $0x28] sm:$0x3]
        %v1846 = vld [vmem:[%s1839 + $0x30] sm:$0xff]
        %v1847 = vld [vmem:[%s1839 + $0x38] sm:$0x3]
        %v1848 = vld [vmem:[%s1839 + $0x40] sm:$0xff]
        %v1849 = vld [vmem:[%s1839 + $0x48] sm:$0x3]
        %v1850 = vld [vmem:[%s1839 + $0x50] sm:$0xff]
        %v1851 = vld [vmem:[%s1839 + $0x58] sm:$0x3]
        %v1852 = vld [vmem:[%s1839 + $0x60] sm:$0xff]
        %v1853 = vld [vmem:[%s1839 + $0x68] sm:$0x3]
        %v1854 = vld [vmem:[%s1839 + $0x70] sm:$0xff]
        %v1855 = vld [vmem:[%s1839 + $0x78] sm:$0x3]
        %v1856 = vld [vmem:[%s1839 + $0x80] sm:$0xff]
        %v1857 = vld [vmem:[%s1839 + $0x88] sm:$0x3]
        %v1858 = vld [vmem:[%s1839 + $0x90] sm:$0xff]
        %v1859 = vld [vmem:[%s1839 + $0x98] sm:$0x3]
        %s1860 = sadd.s32 %s1810, 2
        %s1861 = smul.u32 %s1860, 160
        %s1862 = scalar_lea.vmem [#allocation2], %s1861
        %v1863 = vld [vmem:[%s1862] sm:$0xff]
        %v1864 = vld [vmem:[%s1862 + $0x8] sm:$0x3]
        %v1865 = vld [vmem:[%s1862 + $0x10] sm:$0xff]
        %v1866 = vld [vmem:[%s1862 + $0x18] sm:$0x3]
        %v1867 = vld [vmem:[%s1862 + $0x20] sm:$0xff]
        %v1868 = vld [vmem:[%s1862 + $0x28] sm:$0x3]
        %v1869 = vld [vmem:[%s1862 + $0x30] sm:$0xff]
        %v1870 = vld [vmem:[%s1862 + $0x38] sm:$0x3]
        %v1871 = vld [vmem:[%s1862 + $0x40] sm:$0xff]
        %v1872 = vld [vmem:[%s1862 + $0x48] sm:$0x3]
        %v1873 = vld [vmem:[%s1862 + $0x50] sm:$0xff]
        %v1874 = vld [vmem:[%s1862 + $0x58] sm:$0x3]
        %v1875 = vld [vmem:[%s1862 + $0x60] sm:$0xff]
        %v1876 = vld [vmem:[%s1862 + $0x68] sm:$0x3]
        %v1877 = vld [vmem:[%s1862 + $0x70] sm:$0xff]
        %v1878 = vld [vmem:[%s1862 + $0x78] sm:$0x3]
        %v1879 = vld [vmem:[%s1862 + $0x80] sm:$0xff]
        %v1880 = vld [vmem:[%s1862 + $0x88] sm:$0x3]
        %v1881 = vld [vmem:[%s1862 + $0x90] sm:$0xff]
        %v1882 = vld [vmem:[%s1862 + $0x98] sm:$0x3]
        %vm1899 = vcmask 1046528
        %v1900 = vrot.slane %v1817, 1
        %v1901 = vrot.slane %v1818, 1
        %v1902 = vsel %vm1899, %v1900, %v1901
        %v1903 = vrot.slane %v1819, 1
        %v1904 = vrot.slane %v1820, 1
        %v1905 = vsel %vm1899, %v1903, %v1904
        %v1906 = vrot.slane %v1821, 1
        %v1907 = vrot.slane %v1822, 1
        %v1908 = vsel %vm1899, %v1906, %v1907
        %v1909 = vrot.slane %v1823, 1
        %v1910 = vrot.slane %v1824, 1
        %v1911 = vsel %vm1899, %v1909, %v1910
        %v1912 = vrot.slane %v1825, 1
        %v1913 = vrot.slane %v1826, 1
        %v1914 = vsel %vm1899, %v1912, %v1913
        %v1915 = vrot.slane %v1827, 1
        %v1916 = vrot.slane %v1828, 1
        %v1917 = vsel %vm1899, %v1915, %v1916
        %v1918 = vrot.slane %v1829, 1
        %v1919 = vrot.slane %v1830, 1
        %v1920 = vsel %vm1899, %v1918, %v1919
        %v1921 = vrot.slane %v1831, 1
        %v1922 = vrot.slane %v1832, 1
        %v1923 = vsel %vm1899, %v1921, %v1922
        %vm1924 = vcmask 1045504
        %v1925 = vrot.slane %v1817, 2
        %v1926 = vrot.slane %v1818, 2
        %v1927 = vsel %vm1924, %v1925, %v1926
        %v1928 = vrot.slane %v1819, 2
        %v1929 = vrot.slane %v1820, 2
        %v1930 = vsel %vm1924, %v1928, %v1929
        %v1931 = vrot.slane %v1821, 2
        %v1932 = vrot.slane %v1822, 2
        %v1933 = vsel %vm1924, %v1931, %v1932
        %v1934 = vrot.slane %v1823, 2
        %v1935 = vrot.slane %v1824, 2
        %v1936 = vsel %vm1924, %v1934, %v1935
        %v1937 = vrot.slane %v1825, 2
        %v1938 = vrot.slane %v1826, 2
        %v1939 = vsel %vm1924, %v1937, %v1938
        %v1940 = vrot.slane %v1827, 2
        %v1941 = vrot.slane %v1828, 2
        %v1942 = vsel %vm1924, %v1940, %v1941
        %v1943 = vrot.slane %v1829, 2
        %v1944 = vrot.slane %v1830, 2
        %v1945 = vsel %vm1924, %v1943, %v1944
        %v1946 = vrot.slane %v1831, 2
        %v1947 = vrot.slane %v1832, 2
        %v1948 = vsel %vm1924, %v1946, %v1947
        %v1951 = vrot.slane %v1833, 1
        %v1952 = vrot.slane %v1834, 1
        %v1953 = vsel %vm1899, %v1951, %v1952
        %v1954 = vrot.slane %v1833, 2
        %v1955 = vrot.slane %v1834, 2
        %v1956 = vsel %vm1924, %v1954, %v1955
        %v1959 = vrot.slane %v1835, 1
        %v1960 = vrot.slane %v1836, 1
        %v1961 = vsel %vm1899, %v1959, %v1960
        %v1962 = vrot.slane %v1835, 2
        %v1963 = vrot.slane %v1836, 2
        %v1964 = vsel %vm1924, %v1962, %v1963
        %v1981 = vrot.slane %v1840, 1
        %v1982 = vrot.slane %v1841, 1
        %v1983 = vsel %vm1899, %v1981, %v1982
        %v1984 = vrot.slane %v1842, 1
        %v1985 = vrot.slane %v1843, 1
        %v1986 = vsel %vm1899, %v1984, %v1985
        %v1987 = vrot.slane %v1844, 1
        %v1988 = vrot.slane %v1845, 1
        %v1989 = vsel %vm1899, %v1987, %v1988
        %v1990 = vrot.slane %v1846, 1
        %v1991 = vrot.slane %v1847, 1
        %v1992 = vsel %vm1899, %v1990, %v1991
        %v1993 = vrot.slane %v1848, 1
        %v1994 = vrot.slane %v1849, 1
        %v1995 = vsel %vm1899, %v1993, %v1994
        %v1996 = vrot.slane %v1850, 1
        %v1997 = vrot.slane %v1851, 1
        %v1998 = vsel %vm1899, %v1996, %v1997
        %v1999 = vrot.slane %v1852, 1
        %v2000 = vrot.slane %v1853, 1
        %v2001 = vsel %vm1899, %v1999, %v2000
        %v2002 = vrot.slane %v1854, 1
        %v2003 = vrot.slane %v1855, 1
        %v2004 = vsel %vm1899, %v2002, %v2003
        %v2005 = vrot.slane %v1840, 2
        %v2006 = vrot.slane %v1841, 2
        %v2007 = vsel %vm1924, %v2005, %v2006
        %v2008 = vrot.slane %v1842, 2
        %v2009 = vrot.slane %v1843, 2
        %v2010 = vsel %vm1924, %v2008, %v2009
        %v2011 = vrot.slane %v1844, 2
        %v2012 = vrot.slane %v1845, 2
        %v2013 = vsel %vm1924, %v2011, %v2012
        %v2014 = vrot.slane %v1846, 2
        %v2015 = vrot.slane %v1847, 2
        %v2016 = vsel %vm1924, %v2014, %v2015
        %v2017 = vrot.slane %v1848, 2
        %v2018 = vrot.slane %v1849, 2
        %v2019 = vsel %vm1924, %v2017, %v2018
        %v2020 = vrot.slane %v1850, 2
        %v2021 = vrot.slane %v1851, 2
        %v2022 = vsel %vm1924, %v2020, %v2021
        %v2023 = vrot.slane %v1852, 2
        %v2024 = vrot.slane %v1853, 2
        %v2025 = vsel %vm1924, %v2023, %v2024
        %v2026 = vrot.slane %v1854, 2
        %v2027 = vrot.slane %v1855, 2
        %v2028 = vsel %vm1924, %v2026, %v2027
        %v2031 = vrot.slane %v1856, 1
        %v2032 = vrot.slane %v1857, 1
        %v2033 = vsel %vm1899, %v2031, %v2032
        %v2034 = vrot.slane %v1856, 2
        %v2035 = vrot.slane %v1857, 2
        %v2036 = vsel %vm1924, %v2034, %v2035
        %v2039 = vrot.slane %v1858, 1
        %v2040 = vrot.slane %v1859, 1
        %v2041 = vsel %vm1899, %v2039, %v2040
        %v2050 = vrot.slane %v1858, 2
        %v2051 = vrot.slane %v1859, 2
        %v2052 = vsel %vm1924, %v2050, %v2051
        %v2069 = vrot.slane %v1863, 1
        %v2070 = vrot.slane %v1864, 1
        %v2071 = vsel %vm1899, %v2069, %v2070
        %v2072 = vrot.slane %v1865, 1
        %v2073 = vrot.slane %v1866, 1
        %v2074 = vsel %vm1899, %v2072, %v2073
        %v2075 = vrot.slane %v1867, 1
        %v2076 = vrot.slane %v1868, 1
        %v2077 = vsel %vm1899, %v2075, %v2076
        %v2078 = vrot.slane %v1869, 1
        %v2079 = vrot.slane %v1870, 1
        %v2080 = vsel %vm1899, %v2078, %v2079
        %v2081 = vrot.slane %v1871, 1
        %v2082 = vrot.slane %v1872, 1
        %v2083 = vsel %vm1899, %v2081, %v2082
        %v2084 = vrot.slane %v1873, 1
        %v2085 = vrot.slane %v1874, 1
        %v2086 = vsel %vm1899, %v2084, %v2085
        %v2087 = vrot.slane %v1875, 1
        %v2088 = vrot.slane %v1876, 1
        %v2089 = vsel %vm1899, %v2087, %v2088
        %v2090 = vrot.slane %v1877, 1
        %v2091 = vrot.slane %v1878, 1
        %v2092 = vsel %vm1899, %v2090, %v2091
        %v2093 = vrot.slane %v1863, 2
        %v2094 = vrot.slane %v1864, 2
        %v2095 = vsel %vm1924, %v2093, %v2094
        %v2096 = vrot.slane %v1865, 2
        %v2097 = vrot.slane %v1866, 2
        %v2098 = vsel %vm1924, %v2096, %v2097
        %v2099 = vrot.slane %v1867, 2
        %v2100 = vrot.slane %v1868, 2
        %v2101 = vsel %vm1924, %v2099, %v2100
        %v2102 = vrot.slane %v1869, 2
        %v2103 = vrot.slane %v1870, 2
        %v2104 = vsel %vm1924, %v2102, %v2103
        %v2105 = vrot.slane %v1871, 2
        %v2106 = vrot.slane %v1872, 2
        %v2107 = vsel %vm1924, %v2105, %v2106
        %v2108 = vrot.slane %v1873, 2
        %v2109 = vrot.slane %v1874, 2
        %v2110 = vsel %vm1924, %v2108, %v2109
        %v2111 = vrot.slane %v1875, 2
        %v2112 = vrot.slane %v1876, 2
        %v2113 = vsel %vm1924, %v2111, %v2112
        %v2114 = vrot.slane %v1877, 2
        %v2115 = vrot.slane %v1878, 2
        %v2116 = vsel %vm1924, %v2114, %v2115
        %v2119 = vrot.slane %v1879, 1
        %v2120 = vrot.slane %v1880, 1
        %v2121 = vsel %vm1899, %v2119, %v2120
        %v2122 = vrot.slane %v1879, 2
        %v2123 = vrot.slane %v1880, 2
        %v2124 = vsel %vm1924, %v2122, %v2123
        %v2127 = vrot.slane %v1881, 1
        %v2128 = vrot.slane %v1882, 1
        %v2129 = vsel %vm1899, %v2127, %v2128
        %v2130 = vrot.slane %v1881, 2
        %v2131 = vrot.slane %v1882, 2
        %v2132 = vsel %vm1924, %v2130, %v2131
        %2133 = vrot.lane.b32.xlu0 %v1902, 8
        %v2134 = vpop.permute.xlu0 %2133
        %2135 = vrot.lane.b32.xlu0 %v1905, 8
        %v2136 = vpop.permute.xlu0 %2135
        %2137 = vrot.lane.b32.xlu0 %v1908, 8
        %v2138 = vpop.permute.xlu0 %2137
        %2139 = vrot.lane.b32.xlu0 %v1911, 8
        %v2140 = vpop.permute.xlu0 %2139
        %2141 = vrot.lane.b32.xlu0 %v1914, 8
        %v2142 = vpop.permute.xlu0 %2141
        %2143 = vrot.lane.b32.xlu0 %v1917, 8
        %v2144 = vpop.permute.xlu0 %2143
        %2145 = vrot.lane.b32.xlu0 %v1920, 8
        %v2146 = vpop.permute.xlu0 %2145
        %2147 = vrot.lane.b32.xlu0 %v1923, 8
        %v2148 = vpop.permute.xlu0 %2147
        %2157 = vrot.lane.b32.xlu0 %v1927, 16
        %v2158 = vpop.permute.xlu0 %2157
        %2159 = vrot.lane.b32.xlu0 %v1930, 16
        %v2160 = vpop.permute.xlu0 %2159
        %2161 = vrot.lane.b32.xlu0 %v1933, 16
        %v2162 = vpop.permute.xlu0 %2161
        %2163 = vrot.lane.b32.xlu0 %v1936, 16
        %v2164 = vpop.permute.xlu0 %2163
        %2165 = vrot.lane.b32.xlu0 %v1939, 16
        %v2166 = vpop.permute.xlu0 %2165
        %2167 = vrot.lane.b32.xlu0 %v1942, 16
        %v2168 = vpop.permute.xlu0 %2167
        %2169 = vrot.lane.b32.xlu0 %v1945, 16
        %v2170 = vpop.permute.xlu0 %2169
        %2171 = vrot.lane.b32.xlu0 %v1948, 16
        %v2172 = vpop.permute.xlu0 %2171
        %2181 = vrot.lane.b32.xlu0 %v1819, 24
        %v2182 = vpop.permute.xlu0 %2181
        %2183 = vrot.lane.b32.xlu0 %v1821, 24
        %v2184 = vpop.permute.xlu0 %2183
        %2185 = vrot.lane.b32.xlu0 %v1823, 24
        %v2186 = vpop.permute.xlu0 %2185
        %2187 = vrot.lane.b32.xlu0 %v1825, 24
        %v2188 = vpop.permute.xlu0 %2187
        %2189 = vrot.lane.b32.xlu0 %v1827, 24
        %v2190 = vpop.permute.xlu0 %2189
        %2191 = vrot.lane.b32.xlu0 %v1829, 24
        %v2192 = vpop.permute.xlu0 %2191
        %2193 = vrot.lane.b32.xlu0 %v1831, 24
        %v2194 = vpop.permute.xlu0 %2193
        %2195 = vrot.lane.b32.xlu0 %v1833, 24
        %v2196 = vpop.permute.xlu0 %2195
        %2205 = vrot.lane.b32.xlu0 %v1905, 32
        %v2206 = vpop.permute.xlu0 %2205
        %2207 = vrot.lane.b32.xlu0 %v1908, 32
        %v2208 = vpop.permute.xlu0 %2207
        %2209 = vrot.lane.b32.xlu0 %v1911, 32
        %v2210 = vpop.permute.xlu0 %2209
        %2211 = vrot.lane.b32.xlu0 %v1914, 32
        %v2212 = vpop.permute.xlu0 %2211
        %2213 = vrot.lane.b32.xlu0 %v1917, 32
        %v2214 = vpop.permute.xlu0 %2213
        %2215 = vrot.lane.b32.xlu0 %v1920, 32
        %v2216 = vpop.permute.xlu0 %2215
        %2217 = vrot.lane.b32.xlu0 %v1923, 32
        %v2218 = vpop.permute.xlu0 %2217
        %2219 = vrot.lane.b32.xlu0 %v1953, 32
        %v2220 = vpop.permute.xlu0 %2219
        %2229 = vrot.lane.b32.xlu0 %v1930, 40
        %v2230 = vpop.permute.xlu0 %2229
        %2231 = vrot.lane.b32.xlu0 %v1933, 40
        %v2232 = vpop.permute.xlu0 %2231
        %2233 = vrot.lane.b32.xlu0 %v1936, 40
        %v2234 = vpop.permute.xlu0 %2233
        %2235 = vrot.lane.b32.xlu0 %v1939, 40
        %v2236 = vpop.permute.xlu0 %2235
        %2237 = vrot.lane.b32.xlu0 %v1942, 40
        %v2238 = vpop.permute.xlu0 %2237
        %2239 = vrot.lane.b32.xlu0 %v1945, 40
        %v2240 = vpop.permute.xlu0 %2239
        %2241 = vrot.lane.b32.xlu0 %v1948, 40
        %v2242 = vpop.permute.xlu0 %2241
        %2243 = vrot.lane.b32.xlu0 %v1956, 40
        %v2244 = vpop.permute.xlu0 %2243
        %2253 = vrot.lane.b32.xlu0 %v1821, 48
        %v2254 = vpop.permute.xlu0 %2253
        %2255 = vrot.lane.b32.xlu0 %v1823, 48
        %v2256 = vpop.permute.xlu0 %2255
        %2257 = vrot.lane.b32.xlu0 %v1825, 48
        %v2258 = vpop.permute.xlu0 %2257
        %2259 = vrot.lane.b32.xlu0 %v1827, 48
        %v2260 = vpop.permute.xlu0 %2259
        %2261 = vrot.lane.b32.xlu0 %v1829, 48
        %v2262 = vpop.permute.xlu0 %2261
        %2263 = vrot.lane.b32.xlu0 %v1831, 48
        %v2264 = vpop.permute.xlu0 %2263
        %2265 = vrot.lane.b32.xlu0 %v1833, 48
        %v2266 = vpop.permute.xlu0 %2265
        %2267 = vrot.lane.b32.xlu0 %v1835, 48
        %v2268 = vpop.permute.xlu0 %2267
        %2277 = vrot.lane.b32.xlu0 %v1908, 56
        %v2278 = vpop.permute.xlu0 %2277
        %2279 = vrot.lane.b32.xlu0 %v1911, 56
        %v2280 = vpop.permute.xlu0 %2279
        %2281 = vrot.lane.b32.xlu0 %v1914, 56
        %v2282 = vpop.permute.xlu0 %2281
        %2283 = vrot.lane.b32.xlu0 %v1917, 56
        %v2284 = vpop.permute.xlu0 %2283
        %2285 = vrot.lane.b32.xlu0 %v1920, 56
        %v2286 = vpop.permute.xlu0 %2285
        %2287 = vrot.lane.b32.xlu0 %v1923, 56
        %v2288 = vpop.permute.xlu0 %2287
        %2289 = vrot.lane.b32.xlu0 %v1953, 56
        %v2290 = vpop.permute.xlu0 %2289
        %2291 = vrot.lane.b32.xlu0 %v1961, 56
        %v2292 = vpop.permute.xlu0 %2291
        %2301 = vrot.lane.b32.xlu0 %v1933, 64
        %v2302 = vpop.permute.xlu0 %2301
        %2303 = vrot.lane.b32.xlu0 %v1936, 64
        %v2304 = vpop.permute.xlu0 %2303
        %2305 = vrot.lane.b32.xlu0 %v1939, 64
        %v2306 = vpop.permute.xlu0 %2305
        %2307 = vrot.lane.b32.xlu0 %v1942, 64
        %v2308 = vpop.permute.xlu0 %2307
        %2309 = vrot.lane.b32.xlu0 %v1945, 64
        %v2310 = vpop.permute.xlu0 %2309
        %2311 = vrot.lane.b32.xlu0 %v1948, 64
        %v2312 = vpop.permute.xlu0 %2311
        %2313 = vrot.lane.b32.xlu0 %v1956, 64
        %v2314 = vpop.permute.xlu0 %2313
        %2315 = vrot.lane.b32.xlu0 %v1964, 64
        %v2316 = vpop.permute.xlu0 %2315
        %2325 = vrot.lane.b32.xlu0 %v1840, 72
        %v2326 = vpop.permute.xlu0 %2325
        %2327 = vrot.lane.b32.xlu0 %v1842, 72
        %v2328 = vpop.permute.xlu0 %2327
        %2329 = vrot.lane.b32.xlu0 %v1844, 72
        %v2330 = vpop.permute.xlu0 %2329
        %2331 = vrot.lane.b32.xlu0 %v1846, 72
        %v2332 = vpop.permute.xlu0 %2331
        %2333 = vrot.lane.b32.xlu0 %v1848, 72
        %v2334 = vpop.permute.xlu0 %2333
        %2335 = vrot.lane.b32.xlu0 %v1850, 72
        %v2336 = vpop.permute.xlu0 %2335
        %2337 = vrot.lane.b32.xlu0 %v1852, 72
        %v2338 = vpop.permute.xlu0 %2337
        %2339 = vrot.lane.b32.xlu0 %v1854, 72
        %v2340 = vpop.permute.xlu0 %2339
        %2349 = vrot.lane.b32.xlu0 %v1983, 80
        %v2350 = vpop.permute.xlu0 %2349
        %2351 = vrot.lane.b32.xlu0 %v1986, 80
        %v2352 = vpop.permute.xlu0 %2351
        %2353 = vrot.lane.b32.xlu0 %v1989, 80
        %v2354 = vpop.permute.xlu0 %2353
        %2355 = vrot.lane.b32.xlu0 %v1992, 80
        %v2356 = vpop.permute.xlu0 %2355
        %2357 = vrot.lane.b32.xlu0 %v1995, 80
        %v2358 = vpop.permute.xlu0 %2357
        %2359 = vrot.lane.b32.xlu0 %v1998, 80
        %v2360 = vpop.permute.xlu0 %2359
        %2361 = vrot.lane.b32.xlu0 %v2001, 80
        %v2362 = vpop.permute.xlu0 %2361
        %2363 = vrot.lane.b32.xlu0 %v2004, 80
        %v2364 = vpop.permute.xlu0 %2363
        %2373 = vrot.lane.b32.xlu0 %v2007, 88
        %v2374 = vpop.permute.xlu0 %2373
        %2375 = vrot.lane.b32.xlu0 %v2010, 88
        %v2376 = vpop.permute.xlu0 %2375
        %2377 = vrot.lane.b32.xlu0 %v2013, 88
        %v2378 = vpop.permute.xlu0 %2377
        %2379 = vrot.lane.b32.xlu0 %v2016, 88
        %v2380 = vpop.permute.xlu0 %2379
        %2381 = vrot.lane.b32.xlu0 %v2019, 88
        %v2382 = vpop.permute.xlu0 %2381
        %2383 = vrot.lane.b32.xlu0 %v2022, 88
        %v2384 = vpop.permute.xlu0 %2383
        %2385 = vrot.lane.b32.xlu0 %v2025, 88
        %v2386 = vpop.permute.xlu0 %2385
        %2387 = vrot.lane.b32.xlu0 %v2028, 88
        %v2388 = vpop.permute.xlu0 %2387
        %2397 = vrot.lane.b32.xlu0 %v1842, 96
        %v2398 = vpop.permute.xlu0 %2397
        %2399 = vrot.lane.b32.xlu0 %v1844, 96
        %v2400 = vpop.permute.xlu0 %2399
        %2401 = vrot.lane.b32.xlu0 %v1846, 96
        %v2402 = vpop.permute.xlu0 %2401
        %2403 = vrot.lane.b32.xlu0 %v1848, 96
        %v2404 = vpop.permute.xlu0 %2403
        %2405 = vrot.lane.b32.xlu0 %v1850, 96
        %v2406 = vpop.permute.xlu0 %2405
        %2407 = vrot.lane.b32.xlu0 %v1852, 96
        %v2408 = vpop.permute.xlu0 %2407
        %2409 = vrot.lane.b32.xlu0 %v1854, 96
        %v2410 = vpop.permute.xlu0 %2409
        %2411 = vrot.lane.b32.xlu0 %v1856, 96
        %v2412 = vpop.permute.xlu0 %2411
        %2421 = vrot.lane.b32.xlu0 %v1986, 104
        %v2422 = vpop.permute.xlu0 %2421
        %2423 = vrot.lane.b32.xlu0 %v1989, 104
        %v2424 = vpop.permute.xlu0 %2423
        %2425 = vrot.lane.b32.xlu0 %v1992, 104
        %v2426 = vpop.permute.xlu0 %2425
        %2427 = vrot.lane.b32.xlu0 %v1995, 104
        %v2428 = vpop.permute.xlu0 %2427
        %2429 = vrot.lane.b32.xlu0 %v1998, 104
        %v2430 = vpop.permute.xlu0 %2429
        %2431 = vrot.lane.b32.xlu0 %v2001, 104
        %v2432 = vpop.permute.xlu0 %2431
        %2433 = vrot.lane.b32.xlu0 %v2004, 104
        %v2434 = vpop.permute.xlu0 %2433
        %2435 = vrot.lane.b32.xlu0 %v2033, 104
        %v2436 = vpop.permute.xlu0 %2435
        %2445 = vrot.lane.b32.xlu0 %v2010, 112
        %v2446 = vpop.permute.xlu0 %2445
        %2447 = vrot.lane.b32.xlu0 %v2013, 112
        %v2448 = vpop.permute.xlu0 %2447
        %2449 = vrot.lane.b32.xlu0 %v2016, 112
        %v2450 = vpop.permute.xlu0 %2449
        %2451 = vrot.lane.b32.xlu0 %v2019, 112
        %v2452 = vpop.permute.xlu0 %2451
        %2453 = vrot.lane.b32.xlu0 %v2022, 112
        %v2454 = vpop.permute.xlu0 %2453
        %2455 = vrot.lane.b32.xlu0 %v2025, 112
        %v2456 = vpop.permute.xlu0 %2455
        %2457 = vrot.lane.b32.xlu0 %v2028, 112
        %v2458 = vpop.permute.xlu0 %2457
        %2459 = vrot.lane.b32.xlu0 %v2036, 112
        %v2460 = vpop.permute.xlu0 %2459
        %2469 = vrot.lane.b32.xlu0 %v1844, 120
        %v2470 = vpop.permute.xlu0 %2469
        %2471 = vrot.lane.b32.xlu0 %v1846, 120
        %v2472 = vpop.permute.xlu0 %2471
        %2473 = vrot.lane.b32.xlu0 %v1848, 120
        %v2474 = vpop.permute.xlu0 %2473
        %2475 = vrot.lane.b32.xlu0 %v1850, 120
        %v2476 = vpop.permute.xlu0 %2475
        %2477 = vrot.lane.b32.xlu0 %v1852, 120
        %v2478 = vpop.permute.xlu0 %2477
        %2479 = vrot.lane.b32.xlu0 %v1854, 120
        %v2480 = vpop.permute.xlu0 %2479
        %2481 = vrot.lane.b32.xlu0 %v1856, 120
        %v2482 = vpop.permute.xlu0 %2481
        %2483 = vrot.lane.b32.xlu0 %v1858, 120
        %v2484 = vpop.permute.xlu0 %2483
        %vm2493 = vcmask 64512
        %v2494 = vsel %vm2493, %v1817, %v2134
        %v2495 = vsel %vm2493, %v1819, %v2136
        %v2496 = vsel %vm2493, %v1821, %v2138
        %v2497 = vsel %vm2493, %v1823, %v2140
        %v2498 = vsel %vm2493, %v1825, %v2142
        %v2499 = vsel %vm2493, %v1827, %v2144
        %v2500 = vsel %vm2493, %v1829, %v2146
        %v2501 = vsel %vm2493, %v1831, %v2148
        %vm2502 = vcmask 130048
        %v2503 = vsel %vm2502, %v2494, %v2158
        %v2504 = vsel %vm2502, %v2495, %v2160
        %v2505 = vsel %vm2502, %v2496, %v2162
        %v2506 = vsel %vm2502, %v2497, %v2164
        %v2507 = vsel %vm2502, %v2498, %v2166
        %v2508 = vsel %vm2502, %v2499, %v2168
        %v2509 = vsel %vm2502, %v2500, %v2170
        %v2510 = vsel %vm2502, %v2501, %v2172
        %vm2511 = vcmask 195584
        %v2512 = vsel %vm2511, %v2503, %v2182
        %v2513 = vsel %vm2511, %v2504, %v2184
        %v2514 = vsel %vm2511, %v2505, %v2186
        %v2515 = vsel %vm2511, %v2506, %v2188
        %v2516 = vsel %vm2511, %v2507, %v2190
        %v2517 = vsel %vm2511, %v2508, %v2192
        %v2518 = vsel %vm2511, %v2509, %v2194
        %v2519 = vsel %vm2511, %v2510, %v2196
        %vm2520 = vcmask 261120
        %v2521 = vsel %vm2520, %v2512, %v2206
        %v2522 = vsel %vm2520, %v2513, %v2208
        %v2523 = vsel %vm2520, %v2514, %v2210
        %v2524 = vsel %vm2520, %v2515, %v2212
        %v2525 = vsel %vm2520, %v2516, %v2214
        %v2526 = vsel %vm2520, %v2517, %v2216
        %v2527 = vsel %vm2520, %v2518, %v2218
        %v2528 = vsel %vm2520, %v2519, %v2220
        %vm2529 = vcmask 326656
        %v2530 = vsel %vm2529, %v2521, %v2230
        %v2531 = vsel %vm2529, %v2522, %v2232
        %v2532 = vsel %vm2529, %v2523, %v2234
        %v2533 = vsel %vm2529, %v2524, %v2236
        %v2534 = vsel %vm2529, %v2525, %v2238
        %v2535 = vsel %vm2529, %v2526, %v2240
        %v2536 = vsel %vm2529, %v2527, %v2242
        %v2537 = vsel %vm2529, %v2528, %v2244
        %vm2538 = vcmask 392192
        %v2539 = vsel %vm2538, %v2530, %v2254
        %v2540 = vsel %vm2538, %v2531, %v2256
        %v2541 = vsel %vm2538, %v2532, %v2258
        %v2542 = vsel %vm2538, %v2533, %v2260
        %v2543 = vsel %vm2538, %v2534, %v2262
        %v2544 = vsel %vm2538, %v2535, %v2264
        %v2545 = vsel %vm2538, %v2536, %v2266
        %v2546 = vsel %vm2538, %v2537, %v2268
        %vm2547 = vcmask 457728
        %v2548 = vsel %vm2547, %v2539, %v2278
        %v2549 = vsel %vm2547, %v2540, %v2280
        %v2550 = vsel %vm2547, %v2541, %v2282
        %v2551 = vsel %vm2547, %v2542, %v2284
        %v2552 = vsel %vm2547, %v2543, %v2286
        %v2553 = vsel %vm2547, %v2544, %v2288
        %v2554 = vsel %vm2547, %v2545, %v2290
        %v2555 = vsel %vm2547, %v2546, %v2292
        %vm2556 = vcmask 523264
        %v2557 = vsel %vm2556, %v2548, %v2302
        %v2558 = vsel %vm2556, %v2549, %v2304
        %v2559 = vsel %vm2556, %v2550, %v2306
        %v2560 = vsel %vm2556, %v2551, %v2308
        %v2561 = vsel %vm2556, %v2552, %v2310
        %v2562 = vsel %vm2556, %v2553, %v2312
        %v2563 = vsel %vm2556, %v2554, %v2314
        %v2564 = vsel %vm2556, %v2555, %v2316
        %vm2565 = vcmask 588800
        %v2566 = vsel %vm2565, %v2557, %v2326
        %v2567 = vsel %vm2565, %v2558, %v2328
        %v2568 = vsel %vm2565, %v2559, %v2330
        %v2569 = vsel %vm2565, %v2560, %v2332
        %v2570 = vsel %vm2565, %v2561, %v2334
        %v2571 = vsel %vm2565, %v2562, %v2336
        %v2572 = vsel %vm2565, %v2563, %v2338
        %v2573 = vsel %vm2565, %v2564, %v2340
        %vm2574 = vcmask 654336
        %v2575 = vsel %vm2574, %v2566, %v2350
        %v2576 = vsel %vm2574, %v2567, %v2352
        %v2577 = vsel %vm2574, %v2568, %v2354
        %v2578 = vsel %vm2574, %v2569, %v2356
        %v2579 = vsel %vm2574, %v2570, %v2358
        %v2580 = vsel %vm2574, %v2571, %v2360
        %v2581 = vsel %vm2574, %v2572, %v2362
        %v2582 = vsel %vm2574, %v2573, %v2364
        %vm2583 = vcmask 719872
        %v2584 = vsel %vm2583, %v2575, %v2374
        %v2585 = vsel %vm2583, %v2576, %v2376
        %v2586 = vsel %vm2583, %v2577, %v2378
        %v2587 = vsel %vm2583, %v2578, %v2380
        %v2588 = vsel %vm2583, %v2579, %v2382
        %v2589 = vsel %vm2583, %v2580, %v2384
        %v2590 = vsel %vm2583, %v2581, %v2386
        %v2591 = vsel %vm2583, %v2582, %v2388
        %vm2592 = vcmask 785408
        %v2593 = vsel %vm2592, %v2584, %v2398
        %v2594 = vsel %vm2592, %v2585, %v2400
        %v2595 = vsel %vm2592, %v2586, %v2402
        %v2596 = vsel %vm2592, %v2587, %v2404
        %v2597 = vsel %vm2592, %v2588, %v2406
        %v2598 = vsel %vm2592, %v2589, %v2408
        %v2599 = vsel %vm2592, %v2590, %v2410
        %v2600 = vsel %vm2592, %v2591, %v2412
        %vm2601 = vcmask 850944
        %v2602 = vsel %vm2601, %v2593, %v2422
        %v2603 = vsel %vm2601, %v2594, %v2424
        %v2604 = vsel %vm2601, %v2595, %v2426
        %v2605 = vsel %vm2601, %v2596, %v2428
        %v2606 = vsel %vm2601, %v2597, %v2430
        %v2607 = vsel %vm2601, %v2598, %v2432
        %v2608 = vsel %vm2601, %v2599, %v2434
        %v2609 = vsel %vm2601, %v2600, %v2436
        %vm2610 = vcmask 916480
        %v2611 = vsel %vm2610, %v2602, %v2446
        %v2612 = vsel %vm2610, %v2603, %v2448
        %v2613 = vsel %vm2610, %v2604, %v2450
        %v2614 = vsel %vm2610, %v2605, %v2452
        %v2615 = vsel %vm2610, %v2606, %v2454
        %v2616 = vsel %vm2610, %v2607, %v2456
        %v2617 = vsel %vm2610, %v2608, %v2458
        %v2618 = vsel %vm2610, %v2609, %v2460
        %vm2619 = vcmask 982016
        %v2620 = vsel %vm2619, %v2611, %v2470
        %v2621 = vsel %vm2619, %v2612, %v2472
        %v2622 = vsel %vm2619, %v2613, %v2474
        %v2623 = vsel %vm2619, %v2614, %v2476
        %v2624 = vsel %vm2619, %v2615, %v2478
        %v2625 = vsel %vm2619, %v2616, %v2480
        %v2626 = vsel %vm2619, %v2617, %v2482
        %v2627 = vsel %vm2619, %v2618, %v2484
        %2628 = vrot.lane.b32.xlu0 %v2013, 8
        %v2629 = vpop.permute.xlu0 %2628
        %2630 = vrot.lane.b32.xlu0 %v2016, 8
        %v2631 = vpop.permute.xlu0 %2630
        %2632 = vrot.lane.b32.xlu0 %v2019, 8
        %v2633 = vpop.permute.xlu0 %2632
        %2634 = vrot.lane.b32.xlu0 %v2022, 8
        %v2635 = vpop.permute.xlu0 %2634
        %2636 = vrot.lane.b32.xlu0 %v2025, 8
        %v2637 = vpop.permute.xlu0 %2636
        %2638 = vrot.lane.b32.xlu0 %v2028, 8
        %v2639 = vpop.permute.xlu0 %2638
        %2640 = vrot.lane.b32.xlu0 %v2036, 8
        %v2641 = vpop.permute.xlu0 %2640
        %2642 = vrot.lane.b32.xlu0 %v2052, 8
        %v2643 = vpop.permute.xlu0 %2642
        %2652 = vrot.lane.b32.xlu0 %v1863, 16
        %v2653 = vpop.permute.xlu0 %2652
        %2654 = vrot.lane.b32.xlu0 %v1865, 16
        %v2655 = vpop.permute.xlu0 %2654
        %2656 = vrot.lane.b32.xlu0 %v1867, 16
        %v2657 = vpop.permute.xlu0 %2656
        %2658 = vrot.lane.b32.xlu0 %v1869, 16
        %v2659 = vpop.permute.xlu0 %2658
        %2660 = vrot.lane.b32.xlu0 %v1871, 16
        %v2661 = vpop.permute.xlu0 %2660
        %2662 = vrot.lane.b32.xlu0 %v1873, 16
        %v2663 = vpop.permute.xlu0 %2662
        %2664 = vrot.lane.b32.xlu0 %v1875, 16
        %v2665 = vpop.permute.xlu0 %2664
        %2666 = vrot.lane.b32.xlu0 %v1877, 16
        %v2667 = vpop.permute.xlu0 %2666
        %2676 = vrot.lane.b32.xlu0 %v2071, 24
        %v2677 = vpop.permute.xlu0 %2676
        %2678 = vrot.lane.b32.xlu0 %v2074, 24
        %v2679 = vpop.permute.xlu0 %2678
        %2680 = vrot.lane.b32.xlu0 %v2077, 24
        %v2681 = vpop.permute.xlu0 %2680
        %2682 = vrot.lane.b32.xlu0 %v2080, 24
        %v2683 = vpop.permute.xlu0 %2682
        %2684 = vrot.lane.b32.xlu0 %v2083, 24
        %v2685 = vpop.permute.xlu0 %2684
        %2686 = vrot.lane.b32.xlu0 %v2086, 24
        %v2687 = vpop.permute.xlu0 %2686
        %2688 = vrot.lane.b32.xlu0 %v2089, 24
        %v2689 = vpop.permute.xlu0 %2688
        %2690 = vrot.lane.b32.xlu0 %v2092, 24
        %v2691 = vpop.permute.xlu0 %2690
        %2700 = vrot.lane.b32.xlu0 %v2095, 32
        %v2701 = vpop.permute.xlu0 %2700
        %2702 = vrot.lane.b32.xlu0 %v2098, 32
        %v2703 = vpop.permute.xlu0 %2702
        %2704 = vrot.lane.b32.xlu0 %v2101, 32
        %v2705 = vpop.permute.xlu0 %2704
        %2706 = vrot.lane.b32.xlu0 %v2104, 32
        %v2707 = vpop.permute.xlu0 %2706
        %2708 = vrot.lane.b32.xlu0 %v2107, 32
        %v2709 = vpop.permute.xlu0 %2708
        %2710 = vrot.lane.b32.xlu0 %v2110, 32
        %v2711 = vpop.permute.xlu0 %2710
        %2712 = vrot.lane.b32.xlu0 %v2113, 32
        %v2713 = vpop.permute.xlu0 %2712
        %2714 = vrot.lane.b32.xlu0 %v2116, 32
        %v2715 = vpop.permute.xlu0 %2714
        %2724 = vrot.lane.b32.xlu0 %v1865, 40
        %v2725 = vpop.permute.xlu0 %2724
        %2726 = vrot.lane.b32.xlu0 %v1867, 40
        %v2727 = vpop.permute.xlu0 %2726
        %2728 = vrot.lane.b32.xlu0 %v1869, 40
        %v2729 = vpop.permute.xlu0 %2728
        %2730 = vrot.lane.b32.xlu0 %v1871, 40
        %v2731 = vpop.permute.xlu0 %2730
        %2732 = vrot.lane.b32.xlu0 %v1873, 40
        %v2733 = vpop.permute.xlu0 %2732
        %2734 = vrot.lane.b32.xlu0 %v1875, 40
        %v2735 = vpop.permute.xlu0 %2734
        %2736 = vrot.lane.b32.xlu0 %v1877, 40
        %v2737 = vpop.permute.xlu0 %2736
        %2738 = vrot.lane.b32.xlu0 %v1879, 40
        %v2739 = vpop.permute.xlu0 %2738
        %2748 = vrot.lane.b32.xlu0 %v2074, 48
        %v2749 = vpop.permute.xlu0 %2748
        %2750 = vrot.lane.b32.xlu0 %v2077, 48
        %v2751 = vpop.permute.xlu0 %2750
        %2752 = vrot.lane.b32.xlu0 %v2080, 48
        %v2753 = vpop.permute.xlu0 %2752
        %2754 = vrot.lane.b32.xlu0 %v2083, 48
        %v2755 = vpop.permute.xlu0 %2754
        %2756 = vrot.lane.b32.xlu0 %v2086, 48
        %v2757 = vpop.permute.xlu0 %2756
        %2758 = vrot.lane.b32.xlu0 %v2089, 48
        %v2759 = vpop.permute.xlu0 %2758
        %2760 = vrot.lane.b32.xlu0 %v2092, 48
        %v2761 = vpop.permute.xlu0 %2760
        %2762 = vrot.lane.b32.xlu0 %v2121, 48
        %v2763 = vpop.permute.xlu0 %2762
        %2772 = vrot.lane.b32.xlu0 %v2098, 56
        %v2773 = vpop.permute.xlu0 %2772
        %2774 = vrot.lane.b32.xlu0 %v2101, 56
        %v2775 = vpop.permute.xlu0 %2774
        %2776 = vrot.lane.b32.xlu0 %v2104, 56
        %v2777 = vpop.permute.xlu0 %2776
        %2778 = vrot.lane.b32.xlu0 %v2107, 56
        %v2779 = vpop.permute.xlu0 %2778
        %2780 = vrot.lane.b32.xlu0 %v2110, 56
        %v2781 = vpop.permute.xlu0 %2780
        %2782 = vrot.lane.b32.xlu0 %v2113, 56
        %v2783 = vpop.permute.xlu0 %2782
        %2784 = vrot.lane.b32.xlu0 %v2116, 56
        %v2785 = vpop.permute.xlu0 %2784
        %2786 = vrot.lane.b32.xlu0 %v2124, 56
        %v2787 = vpop.permute.xlu0 %2786
        %2796 = vrot.lane.b32.xlu0 %v1867, 64
        %v2797 = vpop.permute.xlu0 %2796
        %2798 = vrot.lane.b32.xlu0 %v1869, 64
        %v2799 = vpop.permute.xlu0 %2798
        %2800 = vrot.lane.b32.xlu0 %v1871, 64
        %v2801 = vpop.permute.xlu0 %2800
        %2802 = vrot.lane.b32.xlu0 %v1873, 64
        %v2803 = vpop.permute.xlu0 %2802
        %2804 = vrot.lane.b32.xlu0 %v1875, 64
        %v2805 = vpop.permute.xlu0 %2804
        %2806 = vrot.lane.b32.xlu0 %v1877, 64
        %v2807 = vpop.permute.xlu0 %2806
        %2808 = vrot.lane.b32.xlu0 %v1879, 64
        %v2809 = vpop.permute.xlu0 %2808
        %2810 = vrot.lane.b32.xlu0 %v1881, 64
        %v2811 = vpop.permute.xlu0 %2810
        %2820 = vrot.lane.b32.xlu0 %v2077, 72
        %v2821 = vpop.permute.xlu0 %2820
        %2822 = vrot.lane.b32.xlu0 %v2080, 72
        %v2823 = vpop.permute.xlu0 %2822
        %2824 = vrot.lane.b32.xlu0 %v2083, 72
        %v2825 = vpop.permute.xlu0 %2824
        %2826 = vrot.lane.b32.xlu0 %v2086, 72
        %v2827 = vpop.permute.xlu0 %2826
        %2828 = vrot.lane.b32.xlu0 %v2089, 72
        %v2829 = vpop.permute.xlu0 %2828
        %2830 = vrot.lane.b32.xlu0 %v2092, 72
        %v2831 = vpop.permute.xlu0 %2830
        %2832 = vrot.lane.b32.xlu0 %v2121, 72
        %v2833 = vpop.permute.xlu0 %2832
        %2834 = vrot.lane.b32.xlu0 %v2129, 72
        %v2835 = vpop.permute.xlu0 %2834
        %2844 = vrot.lane.b32.xlu0 %v2101, 80
        %v2845 = vpop.permute.xlu0 %2844
        %2846 = vrot.lane.b32.xlu0 %v2104, 80
        %v2847 = vpop.permute.xlu0 %2846
        %2848 = vrot.lane.b32.xlu0 %v2107, 80
        %v2849 = vpop.permute.xlu0 %2848
        %2850 = vrot.lane.b32.xlu0 %v2110, 80
        %v2851 = vpop.permute.xlu0 %2850
        %2852 = vrot.lane.b32.xlu0 %v2113, 80
        %v2853 = vpop.permute.xlu0 %2852
        %2854 = vrot.lane.b32.xlu0 %v2116, 80
        %v2855 = vpop.permute.xlu0 %2854
        %2856 = vrot.lane.b32.xlu0 %v2124, 80
        %v2857 = vpop.permute.xlu0 %2856
        %2858 = vrot.lane.b32.xlu0 %v2132, 80
        %v2859 = vpop.permute.xlu0 %2858
        %v2868 = vsel %vm2493, %v1989, %v2629
        %v2869 = vsel %vm2493, %v1992, %v2631
        %v2870 = vsel %vm2493, %v1995, %v2633
        %v2871 = vsel %vm2493, %v1998, %v2635
        %v2872 = vsel %vm2493, %v2001, %v2637
        %v2873 = vsel %vm2493, %v2004, %v2639
        %v2874 = vsel %vm2493, %v2033, %v2641
        %v2875 = vsel %vm2493, %v2041, %v2643
        %v2876 = vsel %vm2502, %v2868, %v2653
        %v2877 = vsel %vm2502, %v2869, %v2655
        %v2878 = vsel %vm2502, %v2870, %v2657
        %v2879 = vsel %vm2502, %v2871, %v2659
        %v2880 = vsel %vm2502, %v2872, %v2661
        %v2881 = vsel %vm2502, %v2873, %v2663
        %v2882 = vsel %vm2502, %v2874, %v2665
        %v2883 = vsel %vm2502, %v2875, %v2667
        %v2884 = vsel %vm2511, %v2876, %v2677
        %v2885 = vsel %vm2511, %v2877, %v2679
        %v2886 = vsel %vm2511, %v2878, %v2681
        %v2887 = vsel %vm2511, %v2879, %v2683
        %v2888 = vsel %vm2511, %v2880, %v2685
        %v2889 = vsel %vm2511, %v2881, %v2687
        %v2890 = vsel %vm2511, %v2882, %v2689
        %v2891 = vsel %vm2511, %v2883, %v2691
        %v2892 = vsel %vm2520, %v2884, %v2701
        %v2893 = vsel %vm2520, %v2885, %v2703
        %v2894 = vsel %vm2520, %v2886, %v2705
        %v2895 = vsel %vm2520, %v2887, %v2707
        %v2896 = vsel %vm2520, %v2888, %v2709
        %v2897 = vsel %vm2520, %v2889, %v2711
        %v2898 = vsel %vm2520, %v2890, %v2713
        %v2899 = vsel %vm2520, %v2891, %v2715
        %v2900 = vsel %vm2529, %v2892, %v2725
        %v2901 = vsel %vm2529, %v2893, %v2727
        %v2902 = vsel %vm2529, %v2894, %v2729
        %v2903 = vsel %vm2529, %v2895, %v2731
        %v2904 = vsel %vm2529, %v2896, %v2733
        %v2905 = vsel %vm2529, %v2897, %v2735
        %v2906 = vsel %vm2529, %v2898, %v2737
        %v2907 = vsel %vm2529, %v2899, %v2739
        %v2908 = vsel %vm2538, %v2900, %v2749
        %v2909 = vsel %vm2538, %v2901, %v2751
        %v2910 = vsel %vm2538, %v2902, %v2753
        %v2911 = vsel %vm2538, %v2903, %v2755
        %v2912 = vsel %vm2538, %v2904, %v2757
        %v2913 = vsel %vm2538, %v2905, %v2759
        %v2914 = vsel %vm2538, %v2906, %v2761
        %v2915 = vsel %vm2538, %v2907, %v2763
        %v2916 = vsel %vm2547, %v2908, %v2773
        %v2917 = vsel %vm2547, %v2909, %v2775
        %v2918 = vsel %vm2547, %v2910, %v2777
        %v2919 = vsel %vm2547, %v2911, %v2779
        %v2920 = vsel %vm2547, %v2912, %v2781
        %v2921 = vsel %vm2547, %v2913, %v2783
        %v2922 = vsel %vm2547, %v2914, %v2785
        %v2923 = vsel %vm2547, %v2915, %v2787
        %v2924 = vsel %vm2556, %v2916, %v2797
        %v2925 = vsel %vm2556, %v2917, %v2799
        %v2926 = vsel %vm2556, %v2918, %v2801
        %v2927 = vsel %vm2556, %v2919, %v2803
        %v2928 = vsel %vm2556, %v2920, %v2805
        %v2929 = vsel %vm2556, %v2921, %v2807
        %v2930 = vsel %vm2556, %v2922, %v2809
        %v2931 = vsel %vm2556, %v2923, %v2811
        %v2932 = vsel %vm2565, %v2924, %v2821
        %v2933 = vsel %vm2565, %v2925, %v2823
        %v2934 = vsel %vm2565, %v2926, %v2825
        %v2935 = vsel %vm2565, %v2927, %v2827
        %v2936 = vsel %vm2565, %v2928, %v2829
        %v2937 = vsel %vm2565, %v2929, %v2831
        %v2938 = vsel %vm2565, %v2930, %v2833
        %v2939 = vsel %vm2565, %v2931, %v2835
        %v2940 = vsel %vm2574, %v2932, %v2845
        %v2941 = vsel %vm2574, %v2933, %v2847
        %v2942 = vsel %vm2574, %v2934, %v2849
        %v2943 = vsel %vm2574, %v2935, %v2851
        %v2944 = vsel %vm2574, %v2936, %v2853
        %v2945 = vsel %vm2574, %v2937, %v2855
        %v2946 = vsel %vm2574, %v2938, %v2857
        %v2947 = vsel %vm2574, %v2939, %v2859
        %v2949 = vsel %vm2583, %v2940, 0
        %v2952 = vsel %vm2583, %v2941, 0
        %v2955 = vsel %vm2583, %v2942, 0
        %v2958 = vsel %vm2583, %v2943, 0
        %v2961 = vsel %vm2583, %v2944, 0
        %v2964 = vsel %vm2583, %v2945, 0
        %v2967 = vsel %vm2583, %v2946, 0
        %v2970 = vsel %vm2583, %v2947, 0
        %2972 = vmatprep.subr.mxu0 0.0
        %2973 = vmatpush1.msra.mxu0 %v308
        %2974 = vmatprep.subr.mxu0 0.0
        %2975 = vmatpush1.msra.mxu0 %v309
        %2976 = vmatprep.subr.mxu0 0.0
        %2977 = vmatpush1.msra.mxu0 %v310
        %2978 = vmatprep.subr.mxu0 0.0
        %2979 = vmatpush1.msra.mxu0 %v311
        %2980 = vmatprep.subr.mxu0 0.0
        %2981 = vmatpush1.msra.mxu0 %v312
        %2982 = vmatprep.subr.mxu0 0.0
        %2983 = vmatpush1.msra.mxu0 %v313
        %2984 = vmatprep.subr.mxu0 0.0
        %2985 = vmatpush1.msra.mxu0 %v314
        %2986 = vmatprep.subr.mxu0 0.0
        %2987 = vmatpush1.msra.mxu0 %v315
        %2988 = vmatprep.subr.mxu0 0.0
        %2989 = vmatpush1.msra.mxu0 %v316
        %2990 = vmatprep.subr.mxu0 0.0
        %2991 = vmatpush1.msra.mxu0 %v317
        %2992 = vmatprep.subr.mxu0 0.0
        %2993 = vmatpush1.msra.mxu0 %v318
        %2994 = vmatprep.subr.mxu0 0.0
        %2995 = vmatpush1.msra.mxu0 %v319
        %2996 = vmatprep.subr.mxu0 0.0
        %2997 = vmatpush1.msra.mxu0 %v320
        %2998 = vmatprep.subr.mxu0 0.0
        %2999 = vmatpush1.msra.mxu0 %v321
        %3000 = vmatprep.subr.mxu0 0.0
        %3001 = vmatpush1.msra.mxu0 %v322
        %3002 = vmatprep.subr.mxu0 0.0
        %3003 = vmatpush1.msra.mxu0 %v323
        %3004 = vmatprep.subr.mxu0 0.0
        %3005 = vmatpush1.msra.mxu0 %v324
        %3006 = vmatprep.subr.mxu0 0.0
        %3007 = vmatpush1.msra.mxu0 %v325
        %3008 = vmatprep.subr.mxu0 0.0
        %3009 = vmatpush1.msra.mxu0 %v326
        %3010 = vmatprep.subr.mxu0 0.0
        %3011 = vmatpush1.msra.mxu0 %v327
        %3012 = vmatprep.subr.mxu0 0.0
        %3013 = vmatpush1.msra.mxu0 %v328
        %3014 = vmatprep.subr.mxu0 0.0
        %3015 = vmatpush1.msra.mxu0 %v329
        %3016 = vmatprep.subr.mxu0 0.0
        %3017 = vmatpush1.msra.mxu0 %v330
        %3018 = vmatprep.subr.mxu0 0.0
        %3019 = vmatpush1.msra.mxu0 %v331
        %3020 = vmatprep.subr.mxu0 0.0
        %3021 = vmatpush1.msra.mxu0 %v332
        %3022 = vmatprep.subr.mxu0 0.0
        %3023 = vmatpush1.msra.mxu0 %v333
        %3024 = vmatprep.subr.mxu0 0.0
        %3025 = vmatpush1.msra.mxu0 %v334
        %3026 = vmatprep.subr.mxu0 0.0
        %3027 = vmatpush1.msra.mxu0 0.0
        %3028 = vmatprep.subr.mxu0 0.0
        %3029 = vmatpush1.msra.mxu0 0.0
        %3030 = vmatprep.subr.mxu0 0.0
        %3031 = vmatpush1.msra.mxu0 0.0
        %3032 = vmatprep.subr.mxu0 0.0
        %3033 = vmatpush1.msra.mxu0 0.0
        %3034 = vmatprep.subr.mxu0 0.0
        %3035 = vmatpush1.msra.mxu0 0.0
        %3036 = vmatprep.mubr.f32.mxu0 %v2949
        %3037 = vmatmul.mubr.f32.gmra.mrb[0].mxu0 %v2620
        %v3038 = vpop.f32.mrb[0].mxu0
        %v3039 = vadd.f32 0.0, %v3038
        %v3040 = vpop.f32.mrb[0].mxu0
        %3041 = vmatprep.mubr.f32.mxu0 %v2952
        %3042 = vmatmul.mubr.f32.gmra.mrb[0].mxu0 %v2621
        %v3043 = vpop.f32.mrb[0].mxu0
        %v3044 = vadd.f32 0.0, %v3043
        %v3045 = vpop.f32.mrb[0].mxu0
        %3046 = vmatprep.mubr.f32.mxu0 %v2955
        %3047 = vmatmul.mubr.f32.gmra.mrb[0].mxu0 %v2622
        %v3048 = vpop.f32.mrb[0].mxu0
        %v3049 = vadd.f32 0.0, %v3048
        %v3050 = vpop.f32.mrb[0].mxu0
        %3051 = vmatprep.mubr.f32.mxu0 %v2958
        %3052 = vmatmul.mubr.f32.gmra.mrb[0].mxu0 %v2623
        %v3053 = vpop.f32.mrb[0].mxu0
        %v3054 = vadd.f32 0.0, %v3053
        %v3055 = vpop.f32.mrb[0].mxu0
        %3056 = vmatprep.mubr.f32.mxu0 %v2961
        %3057 = vmatmul.mubr.f32.gmra.mrb[0].mxu0 %v2624
        %v3058 = vpop.f32.mrb[0].mxu0
        %v3059 = vadd.f32 0.0, %v3058
        %v3060 = vpop.f32.mrb[0].mxu0
        %3061 = vmatprep.mubr.f32.mxu0 %v2964
        %3062 = vmatmul.mubr.f32.gmra.mrb[0].mxu0 %v2625
        %v3063 = vpop.f32.mrb[0].mxu0
        %v3064 = vadd.f32 0.0, %v3063
        %v3065 = vpop.f32.mrb[0].mxu0
        %3066 = vmatprep.mubr.f32.mxu0 %v2967
        %3067 = vmatmul.mubr.f32.gmra.mrb[0].mxu0 %v2626
        %v3068 = vpop.f32.mrb[0].mxu0
        %v3069 = vadd.f32 0.0, %v3068
        %v3070 = vpop.f32.mrb[0].mxu0
        %3071 = vmatprep.mubr.f32.mxu0 %v2970
        %3072 = vmatmul.mubr.f32.gmra.mrb[0].mxu0 %v2627
        %v3073 = vpop.f32.mrb[0].mxu0
        %v3074 = vadd.f32 0.0, %v3073
        %v3075 = vpop.f32.mrb[0].mxu0
        %3076 = vdwg.mxu0
        %v3078 = vlaneseq
        %v3079 = vshrl.u32 %v3078, 7
        %v3080 = vsub.s32 0, %v3079
        %v3081 = vrot.slane %v335, %v3080
        %v3083 = vmul.f32 %v3039, %v3081
        %v3084 = vmul.f32 %v3044, %v3081
        %v3085 = vmul.f32 %v3049, %v3081
        %v3086 = vmul.f32 %v3054, %v3081
        %v3087 = vmul.f32 %v3059, %v3081
        %v3088 = vmul.f32 %v3064, %v3081
        %v3089 = vmul.f32 %v3069, %v3081
        %v3090 = vmul.f32 %v3074, %v3081
        %v3092 = vlaneseq
        %v3093 = vshrl.u32 %v3092, 7
        %v3094 = vsub.s32 0, %v3093
        %v3095 = vrot.slane %v336, %v3094
        %v3097 = vadd.f32 %v3083, %v3095
        %v3098 = vadd.f32 %v3084, %v3095
        %v3099 = vadd.f32 %v3085, %v3095
        %v3100 = vadd.f32 %v3086, %v3095
        %v3101 = vadd.f32 %v3087, %v3095
        %v3102 = vadd.f32 %v3088, %v3095
        %v3103 = vadd.f32 %v3089, %v3095
        %v3104 = vadd.f32 %v3090, %v3095
        %v3105 = vmax.f32 %v3097, 0.0
        %v3106 = vmax.f32 %v3098, 0.0
        %v3107 = vmax.f32 %v3099, 0.0
        %v3108 = vmax.f32 %v3100, 0.0
        %v3109 = vmax.f32 %v3101, 0.0
        %v3110 = vmax.f32 %v3102, 0.0
        %v3111 = vmax.f32 %v3103, 0.0
        %v3112 = vmax.f32 %v3104, 0.0
        %s3113 = smul.u32 %s1837, 64
        %s3114 = scalar_lea.vmem [#allocation3], %s3113
        %v3115 = vld [vmem:[%s3114] sm:$0xff]
        %v3116 = vld [vmem:[%s3114 + $0x8] sm:$0xff]
        %v3117 = vld [vmem:[%s3114 + $0x10] sm:$0xff]
        %v3118 = vld [vmem:[%s3114 + $0x18] sm:$0xff]
        %v3119 = vld [vmem:[%s3114 + $0x20] sm:$0xff]
        %v3120 = vld [vmem:[%s3114 + $0x28] sm:$0xff]
        %v3121 = vld [vmem:[%s3114 + $0x30] sm:$0xff]
        %v3122 = vld [vmem:[%s3114 + $0x38] sm:$0xff]
        %v3123 = vadd.f32 %v3105, %v3115
        %v3124 = vadd.f32 %v3106, %v3116
        %v3125 = vadd.f32 %v3107, %v3117
        %v3126 = vadd.f32 %v3108, %v3118
        %v3127 = vadd.f32 %v3109, %v3119
        %v3128 = vadd.f32 %v3110, %v3120
        %v3129 = vadd.f32 %v3111, %v3121
        %v3130 = vadd.f32 %v3112, %v3122
        %s3131 = smul.u32 %s1810, 64
        %s3132 = scalar_lea.vmem %s278, %s3131
        %vm3133 = vcmask 31744
        %3134 = vst.msk [vmem:[%s3132] sm:$0xff] %vm3133, %v3123
        %3135 = vst.msk [vmem:[%s3132 + $0x8] sm:$0xff] %vm3133, %v3124
        %3136 = vst.msk [vmem:[%s3132 + $0x10] sm:$0xff] %vm3133, %v3125
        %3137 = vst.msk [vmem:[%s3132 + $0x18] sm:$0xff] %vm3133, %v3126
        %3138 = vst.msk [vmem:[%s3132 + $0x20] sm:$0xff] %vm3133, %v3127
        %3139 = vst.msk [vmem:[%s3132 + $0x28] sm:$0xff] %vm3133, %v3128
        %3140 = vst.msk [vmem:[%s3132 + $0x30] sm:$0xff] %vm3133, %v3129
        %3141 = vst.msk [vmem:[%s3132 + $0x38] sm:$0xff] %vm3133, %v3130
      $region60: #{basic_layers_forward.1} parent=47 // loop_footer
        %s1814 = sadd.s32 1, %s1810
      $region61: #{basic_layers_forward.1} parent=47 // loop_footer_branch
        %1809 = sbr.rel target = $region57
      $region62: #{basic_layers_forward.1} parent=47 // loop_exit
        _
      %p3142 = scmp.lt.s32.totalorder %s18, 3
      %s3143 = scalar_select %p3142, %s18, 3
      %s3144 = smul.addr %s3143, 16
      %s3145 = smul.addr %s3144, 8
      %s3146 = scalar_lea.vmem %s7, %s3145
      // Predicated region
      $region63: #{basic_layers_forward.1} parent=47 // pred_check
        %p3147 = pneg %p188
      $region64: #{basic_layers_forward.1} parent=47 // pred_check_branch
        %3149 = sbr.rel (%p3147) target = $region66
      $region65: #{basic_layers_forward.1} parent=47 // pred_region
        _
      $region66: #{basic_layers_forward.1} parent=47 // pred_fallthru
        _
    $region48: #{basic_layers_forward.1} parent=5 // pred_fallthru
      _
    %p3150 = scmp.le.s32.totalorder 2, %s13
    // Predicated region
    $region67: #{basic_layers_forward.1} parent=5 // pred_check
      %p3151 = pneg %p3150
    $region68: #{basic_layers_forward.1} parent=5 // pred_check_branch
      %3153 = sbr.rel (%p3151) target = $region70
    $region69: #{basic_layers_forward.1} parent=5 // pred_region
      %s3154 = ssub.s32 %s13, 2
      // Predicated region
      $region71: #{basic_layers_forward.1} parent=69 // pred_check
        %p3155 = pneg %p194
      $region72: #{basic_layers_forward.1} parent=69 // pred_check_branch
        %3157 = sbr.rel (%p3155) target = $region74
      $region73: #{basic_layers_forward.1} parent=69 // pred_region
        %p3158 = scmp.lt.s32.totalorder %s19, 3
        %s3159 = scalar_select %p3158, %s19, 3
        %s3160 = smul.addr %s3159, 16
        %s3161 = smul.addr %s3160, 8
        %s3162 = scalar_lea.vmem %s7, %s3161
      $region74: #{basic_layers_forward.1} parent=69 // pred_fallthru
        _
    $region70: #{basic_layers_forward.1} parent=5 // pred_fallthru
      _
  $region6: #{basic_layers_forward.1} parent=0 // loop_footer
    %s17 = sadd.s32 1, %s13
  $region7: #{basic_layers_forward.1} parent=0 // loop_footer_branch
    %12 = sbr.rel target = $region3
  $region8: #{basic_layers_forward.1} parent=0 // loop_exit
    _

</llo_original>
